<compile_context>
chip_gen: v6e
topology: v6e:2x2x1
jax: 0.10.0
libtpu: 0.0.40
codegen_flags: <defaults>
</compile_context>

<pallas_src>
import functools

import jax
import jax.numpy as jnp
from jax.experimental import pallas as pl
from jax.experimental.pallas import tpu as pltpu

EXPANSION = 4
EPS = 1e-5
LANE = 128
VMEM_LIMIT = 64 * 1024 * 1024


# ----------------------------------------------------------------------------
# small helpers
# ----------------------------------------------------------------------------
def _round_up(x, m):
    return ((x + m - 1) // m) * m


def _tile_rows(m):
    for tm in (1024, 512, 256, 128):
        if m >= tm and m % tm == 0:
            return tm, m
    tm = 512 if m >= 512 else _round_up(m, 16)
    return tm, _round_up(m, tm)


def _pad_rows(a, m_pad):
    pad = m_pad - a.shape[0]
    if pad == 0:
        return a
    return jnp.pad(a, ((0, pad), (0, 0)))


def _pad_last(a, c):
    pad = c - a.shape[-1]
    if pad == 0:
        return a
    cfg = [(0, 0)] * (a.ndim - 1) + [(0, pad)]
    return jnp.pad(a, cfg)


def _pad2(a, r, c):
    return jnp.pad(a, ((0, r - a.shape[0]), (0, c - a.shape[1])))


def _pad_vec(v, c):
    return jnp.pad(v, (0, c - v.shape[0])).reshape(1, c).astype(jnp.float32)


def _affine_from_stats(stats, gamma, beta, count):
    """Fold batch statistics into a per-channel (scale, bias). Tiny XLA op."""
    inv = 1.0 / float(count)
    mean = stats[0:1, :] * inv
    var = jnp.maximum(stats[1:2, :] * inv - mean * mean, 0.0)
    scale = gamma * jax.lax.rsqrt(var + EPS)
    bias = beta - mean * scale
    return scale, bias


# ----------------------------------------------------------------------------
# Pallas kernels
# ----------------------------------------------------------------------------
def _matmul_stats_kernel(*refs, pre_bn_relu, mask_rows, tm):
    """1x1 conv tile: y = [relu(x*scale+bias)] @ w ; accumulate BN stats of y.

    Stats are accumulated straight into the grid-resident (2, C) output block.
    `mask_rows` (static int or None) masks zero-padded trailing rows out of the
    statistics (required when the BN prologue makes padded rows non-zero).
    """
    if pre_bn_relu:
        x_ref, w_ref, scale_ref, bias_ref, y_ref, stats_ref = refs
    else:
        x_ref, w_ref, y_ref, stats_ref = refs

    i = pl.program_id(0)

    @pl.when(i == 0)
    def _init():
        stats_ref[...] = jnp.zeros_like(stats_ref)

    x = x_ref[...]
    if pre_bn_relu:
        x = jnp.maximum(x.astype(jnp.float32) * scale_ref[...] + bias_ref[...], 0.0)
        x = x.astype(jnp.bfloat16)

    y = jnp.dot(x, w_ref[...], preferred_element_type=jnp.float32)
    y_ref[...] = y.astype(y_ref.dtype)

    if mask_rows is not None:
        rows = jax.lax.broadcasted_iota(jnp.int32, (tm, 1), 0) + i * tm
        y = jnp.where(rows < mask_rows, y, 0.0)
    stats_ref[0:1, :] += jnp.sum(y, axis=0, keepdims=True)
    stats_ref[1:2, :] += jnp.sum(y * y, axis=0, keepdims=True)


def _conv_taps_stats_kernel(x_ref, w_ref, y_ref, stats_ref, *, groups, qo,
                            pitch, wo):
    """3x3 conv for one image: merged-tap matmuls over shifted row windows of
    the flattened (padded) image held in VMEM; accumulates BN stats."""
    b = pl.program_id(0)

    @pl.when(b == 0)
    def _init():
        stats_ref[...] = jnp.zeros_like(stats_ref)

    acc = None
    for (d, c_lo, span, row_off) in groups:
        lhs = x_ref[0, d:d + qo, c_lo:c_lo + span]            # (qo, span) bf16
        rhs = w_ref[row_off:row_off + span, :]                 # (span, cout) bf16
        contrib = jnp.dot(lhs, rhs, preferred_element_type=jnp.float32)
        acc = contrib if acc is None else acc + contrib
    y_ref[0] = acc.astype(y_ref.dtype)

    # mask wrap-around ("garbage") flattened positions out of the statistics
    valid = (jax.lax.broadcasted_iota(jnp.int32, (qo, 1), 0) % pitch) < wo
    ym = jnp.where(valid, acc, 0.0)
    stats_ref[0:1, :] += jnp.sum(ym, axis=0, keepdims=True)
    stats_ref[1:2, :] += jnp.sum(ym * ym, axis=0, keepdims=True)


def _bn_act_kernel(y_ref, scale_ref, bias_ref, o_ref, *, relu):
    out = y_ref[...].astype(jnp.float32) * scale_ref[...] + bias_ref[...]
    if relu:
        out = jnp.maximum(out, 0.0)
    o_ref[...] = out.astype(o_ref.dtype)


def _bn_add_relu_kernel(*refs, conv_shortcut):
    """Fused epilogue: BN(conv3) + [BN(shortcut conv) or identity] + ReLU."""
    if conv_shortcut:
        y_ref, s3_ref, b3_ref, ys_ref, ss_ref, bs_ref, o_ref = refs
        r = y_ref[...].astype(jnp.float32) * s3_ref[...] + b3_ref[...]
        s = ys_ref[...].astype(jnp.float32) * ss_ref[...] + bs_ref[...]
    else:
        y_ref, s3_ref, b3_ref, sc_ref, o_ref = refs
        r = y_ref[...].astype(jnp.float32) * s3_ref[...] + b3_ref[...]
        s = sc_ref[...].astype(jnp.float32)
    o_ref[...] = jnp.maximum(r + s, 0.0).astype(o_ref.dtype)


# ----------------------------------------------------------------------------
# pallas_call wrappers
# ----------------------------------------------------------------------------
def _matmul_stats(xm, wm, tm, *, m_valid, pre_scale=None, pre_bias=None):
    m_pad, k = xm.shape
    c = wm.shape[1]
    pre = pre_scale is not None
    kernel = functools.partial(
        _matmul_stats_kernel, pre_bn_relu=pre,
        mask_rows=(m_valid if m_pad != m_valid else None), tm=tm)

    in_specs = [pl.BlockSpec((tm, k), lambda i: (i, 0)),
                pl.BlockSpec((k, c), lambda i: (0, 0))]
    args = [xm, wm]
    if pre:
        in_specs += [pl.BlockSpec((1, k), lambda i: (0, 0)),
                     pl.BlockSpec((1, k), lambda i: (0, 0))]
        args += [pre_scale, pre_bias]

    flops = 2 * m_pad * k * c
    bytes_accessed = int(xm.size * 2 + wm.size * 2 + m_pad * c * 2 + 2 * c * 4
                         + (2 * k * 4 if pre else 0))
    return pl.pallas_call(
        kernel,
        grid=(m_pad // tm,),
        in_specs=in_specs,
        out_specs=[pl.BlockSpec((tm, c), lambda i: (i, 0)),
                   pl.BlockSpec((2, c), lambda i: (0, 0))],
        out_shape=[jax.ShapeDtypeStruct((m_pad, c), jnp.bfloat16),
                   jax.ShapeDtypeStruct((2, c), jnp.float32)],
        compiler_params=pltpu.CompilerParams(
            dimension_semantics=("arbitrary",),
            vmem_limit_bytes=VMEM_LIMIT),
        cost_estimate=pl.CostEstimate(flops=flops, transcendentals=0,
                                      bytes_accessed=bytes_accessed),
    )(*args)


def _conv_taps_stats(xf, w_packed, *, groups, qo, pitch, wo):
    n, lf, cs = xf.shape
    kt, cout = w_packed.shape
    kernel = functools.partial(_conv_taps_stats_kernel, groups=groups, qo=qo,
                               pitch=pitch, wo=wo)
    flops = 2 * n * qo * kt * cout
    bytes_accessed = int(xf.size * 2 + w_packed.size * 2 + n * qo * cout * 2
                         + 2 * cout * 4)
    return pl.pallas_call(
        kernel,
        grid=(n,),
        in_specs=[pl.BlockSpec((1, lf, cs), lambda b: (b, 0, 0)),
                  pl.BlockSpec((kt, cout), lambda b: (0, 0))],
        out_specs=[pl.BlockSpec((1, qo, cout), lambda b: (b, 0, 0)),
                   pl.BlockSpec((2, cout), lambda b: (0, 0))],
        out_shape=[jax.ShapeDtypeStruct((n, qo, cout), jnp.bfloat16),
                   jax.ShapeDtypeStruct((2, cout), jnp.float32)],
        compiler_params=pltpu.CompilerParams(
            dimension_semantics=("arbitrary",),
            vmem_limit_bytes=VMEM_LIMIT),
        cost_estimate=pl.CostEstimate(flops=flops, transcendentals=0,
                                      bytes_accessed=bytes_accessed),
    )(xf, w_packed)


def _bn_act(y, scale, bias, *, tm, relu, out_dtype=jnp.bfloat16):
    m_pad, c = y.shape
    kernel = functools.partial(_bn_act_kernel, relu=relu)
    return pl.pallas_call(
        kernel,
        grid=(m_pad // tm,),
        in_specs=[pl.BlockSpec((tm, c), lambda i: (i, 0)),
                  pl.BlockSpec((1, c), lambda i: (0, 0)),
                  pl.BlockSpec((1, c), lambda i: (0, 0))],
        out_specs=pl.BlockSpec((tm, c), lambda i: (i, 0)),
        out_shape=jax.ShapeDtypeStruct((m_pad, c), out_dtype),
        compiler_params=pltpu.CompilerParams(
            dimension_semantics=("parallel",),
            vmem_limit_bytes=VMEM_LIMIT),
    )(y, scale, bias)


def _bn_add_relu(y, scale3, bias3, shortcut, *, tm, conv_shortcut,
                 sc_scale=None, sc_bias=None):
    m_pad, c = y.shape
    row = pl.BlockSpec((tm, c), lambda i: (i, 0))
    vec = pl.BlockSpec((1, c), lambda i: (0, 0))
    kernel = functools.partial(_bn_add_relu_kernel, conv_shortcut=conv_shortcut)
    if conv_shortcut:
        in_specs = [row, vec, vec, row, vec, vec]
        args = (y, scale3, bias3, shortcut, sc_scale, sc_bias)
    else:
        in_specs = [row, vec, vec, row]
        args = (y, scale3, bias3, shortcut)
    return pl.pallas_call(
        kernel,
        grid=(m_pad // tm,),
        in_specs=in_specs,
        out_specs=row,
        out_shape=jax.ShapeDtypeStruct((m_pad, c), jnp.bfloat16),
        compiler_params=pltpu.CompilerParams(
            dimension_semantics=("parallel",),
            vmem_limit_bytes=VMEM_LIMIT),
    )(*args)


# ----------------------------------------------------------------------------
# layer-level wrappers
# ----------------------------------------------------------------------------
def _pack_tap_weights(w9, taps, cin):
    """Merge taps that share a row offset d into one weight block stacked along
    K (zero rows where a channel sub-block is not read by any tap in the
    group).  Returns the packed (K_total, cout) weight and static group meta
    (d, c_lo, span, row_off)."""
    cout = w9.shape[2]
    by_d = {}
    for t, (d, c0) in enumerate(taps):
        by_d.setdefault(d, []).append((c0, t))
    blocks, meta = [], []
    row_off = 0
    for d in sorted(by_d):
        items = sorted(by_d[d])
        c_lo = items[0][0]
        span = items[-1][0] + cin - c_lo
        blk = jnp.zeros((span, cout), w9.dtype)
        for c0, t in items:
            blk = blk.at[c0 - c_lo:c0 - c_lo + cin, :].set(w9[t])
        blocks.append(blk)
        meta.append((d, c_lo, span, row_off))
        row_off += span
    return jnp.concatenate(blocks, axis=0), tuple(meta)


def conv3x3_raw(x_nhwc, w9, *, stride):
    """3x3 conv, padding=1.  Returns the compact raw (pre-BN) bf16 output of
    shape (n*ho*wo, cout), the BN stats (2, cout), and (ho, wo)."""
    n, h, w, c = x_nhwc.shape
    cout = w9.shape[2]
    xp = jnp.pad(x_nhwc, ((0, 0), (1, 1), (1, 1), (0, 0)))
    if stride == 1:
        ho, wo = h, w
        pitch = w + 2
        base = xp
        taps = tuple((kh * pitch + kw, 0) for kh in range(3) for kw in range(3))
    elif stride == 2:
        hp, wp = h + 2, w + 2
        if hp % 2:
            xp = jnp.pad(xp, ((0, 0), (0, 1), (0, 0), (0, 0)))
            hp += 1
        if wp % 2:
            xp = jnp.pad(xp, ((0, 0), (0, 0), (0, 1), (0, 0)))
            wp += 1
        ho = (h - 1) // 2 + 1
        wo = (w - 1) // 2 + 1
        pitch = wp // 2
        base = jnp.transpose(xp.reshape(n, hp // 2, 2, wp // 2, 2, c),
                             (0, 1, 3, 2, 4, 5)).reshape(n, hp // 2, wp // 2, 4 * c)
        taps = tuple(((kh // 2) * pitch + (kw // 2), (2 * (kh % 2) + (kw % 2)) * c)
                     for kh in range(3) for kw in range(3))
    else:
        raise NotImplementedError("stride must be 1 or 2")

    w_packed, groups = _pack_tap_weights(w9, taps, c)

    cs = base.shape[-1]
    qo = ho * pitch
    xf = base.reshape(n, -1, cs)
    needed = qo + max(d for d, _ in taps)
    lf = _round_up(max(needed, xf.shape[1]), 16)
    xf = jnp.pad(xf, ((0, 0), (0, lf - xf.shape[1]), (0, 0)))

    y2, st = _conv_taps_stats(xf, w_packed, groups=groups, qo=qo, pitch=pitch,
                              wo=wo)
    # compact: drop wrap-around columns (XLA slice)
    # TODO(synk): fold this compaction into the kernel's store path.
    y2c = y2.reshape(n, ho, pitch, cout)[:, :, :wo, :].reshape(n * ho * wo, cout)
    return y2c, st, ho, wo


# ----------------------------------------------------------------------------
# BottleNeck module
# ----------------------------------------------------------------------------
def init_bottleneck_params(key, in_channels, out_channels):
    c_exp = out_channels * EXPANSION
    ks = jax.random.split(key, 12)

    def conv_w(k, cout, cin, kh, kw):
        fan_in = cin * kh * kw
        return jax.random.normal(k, (cout, cin, kh, kw), jnp.float32) * (
            (2.0 / fan_in) ** 0.5)

    def bn_g(k, c):
        return 1.0 + 0.1 * jax.random.normal(k, (c,), jnp.float32)

    def bn_b(k, c):
        return 0.1 * jax.random.normal(k, (c,), jnp.float32)

    return {
        "w1": conv_w(ks[0], out_channels, in_channels, 1, 1),
        "g1": bn_g(ks[1], out_channels), "b1": bn_b(ks[2], out_channels),
        "w2": conv_w(ks[3], out_channels, out_channels, 3, 3),
        "g2": bn_g(ks[4], out_channels), "b2": bn_b(ks[5], out_channels),
        "w3": conv_w(ks[6], c_exp, out_channels, 1, 1),
        "g3": bn_g(ks[7], c_exp), "b3": bn_b(ks[8], c_exp),
        "ws": conv_w(ks[9], c_exp, in_channels, 1, 1),
        "gs": bn_g(ks[10], c_exp), "bs": bn_b(ks[11], c_exp),
    }


def bottleneck_forward(params, x_nchw, in_channels, out_channels, stride=1):
    c1 = out_channels
    c_exp = out_channels * EXPANSION
    cin_p = _round_up(in_channels, LANE)
    c1_p = _round_up(c1, LANE)
    cexp_p = _round_up(c_exp, LANE)

    n, _, h, w = x_nchw.shape
    x = jnp.transpose(x_nchw, (0, 2, 3, 1))                   # NCHW -> NHWC
    x = _pad_last(x, cin_p).astype(jnp.bfloat16)

    # pack weights (lane-padded, bf16) and BN params (f32)
    w1 = _pad2(params["w1"].reshape(c1, in_channels).T, cin_p, c1_p).astype(jnp.bfloat16)
    w3 = _pad2(params["w3"].reshape(c_exp, c1).T, c1_p, cexp_p).astype(jnp.bfloat16)
    w2 = jnp.transpose(params["w2"], (2, 3, 1, 0)).reshape(9, c1, c1)
    w2 = jnp.pad(w2, ((0, 0), (0, c1_p - c1), (0, c1_p - c1))).astype(jnp.bfloat16)
    g1, b1 = _pad_vec(params["g1"], c1_p), _pad_vec(params["b1"], c1_p)
    g2, b2 = _pad_vec(params["g2"], c1_p), _pad_vec(params["b2"], c1_p)
    g3, b3 = _pad_vec(params["g3"], cexp_p), _pad_vec(params["b3"], cexp_p)

    # ---- conv1 (1x1) -> BN1 -> ReLU ----
    m1 = n * h * w
    tm1, m1_pad = _tile_rows(m1)
    y1, st1 = _matmul_stats(_pad_rows(x.reshape(m1, cin_p), m1_pad), w1, tm1,
                            m_valid=m1)
    s1, bi1 = _affine_from_stats(st1, g1, b1, m1)
    r1 = _bn_act(y1, s1, bi1, tm=tm1, relu=True)[:m1].reshape(n, h, w, c1_p)

    # ---- conv2 (3x3, stride); BN2+ReLU deferred into the conv3 prologue ----
    y2c, st2, ho, wo = conv3x3_raw(r1, w2, stride=stride)
    m2 = n * ho * wo
    s2, bi2 = _affine_from_stats(st2, g2, b2, m2)

    # ---- conv3 (1x1, with fused BN2+ReLU prologue) ----
    tm2, m2_pad = _tile_rows(m2)
    y3, st3 = _matmul_stats(_pad_rows(y2c, m2_pad), w3, tm2, m_valid=m2,
                            pre_scale=s2, pre_bias=bi2)
    s3, bi3 = _affine_from_stats(st3, g3, b3, m2)

    # ---- shortcut + fused BN3 / BN_s / add / ReLU epilogue ----
    conv_shortcut = (stride != 1) or (in_channels != c_exp)
    if conv_shortcut:
        ws = _pad2(params["ws"].reshape(c_exp, in_channels).T,
                   cin_p, cexp_p).astype(jnp.bfloat16)
        gs, bs = _pad_vec(params["gs"], cexp_p), _pad_vec(params["bs"], cexp_p)
        # TODO(synk): strided shortcut subsampling is a wrapper-side XLA slice.
        xs = x[:, ::stride, ::stride, :].reshape(m2, cin_p)
        ys, sts = _matmul_stats(_pad_rows(xs, m2_pad), ws, tm2, m_valid=m2)
        ss, bss = _affine_from_stats(sts, gs, bs, m2)
        out = _bn_add_relu(y3, s3, bi3, ys, tm=tm2, conv_shortcut=True,
                           sc_scale=ss, sc_bias=bss)
    else:
        sc = _pad_rows(x.reshape(m2, cin_p), m2_pad)   # identity: cin_p == cexp_p
        out = _bn_add_relu(y3, s3, bi3, sc, tm=tm2, conv_shortcut=False)

    out = out[:m2].reshape(n, ho, wo, cexp_p)[:, :, :, :c_exp]
    return jnp.transpose(out, (0, 3, 1, 2)).astype(jnp.float32)   # NHWC -> NCHW


if __name__ == "__main__":
    key = jax.random.PRNGKey(0)
    k_x, k_p = jax.random.split(key)

    N, C_IN, H, W = 2, 16, 8, 8
    OUT_CHANNELS = 8
    STRIDE = 2

    x = jax.random.normal(k_x, (N, C_IN, H, W), jnp.float32)
    params = init_bottleneck_params(k_p, C_IN, OUT_CHANNELS)

    fwd = jax.jit(
        functools.partial(
            bottleneck_forward,
            in_channels=C_IN,
            out_channels=OUT_CHANNELS,
            stride=STRIDE,
        )
    )
    out = fwd(params, x)
    jax.block_until_ready(out)

    expected_shape = (N, OUT_CHANNELS * EXPANSION, H // STRIDE, W // STRIDE)
    assert out.shape == expected_shape, (out.shape, expected_shape)
    assert bool(jnp.all(jnp.isfinite(out)))
    print("KERNEL_OK")
</pallas_src>

<mosaic_0001>
module attributes {stable_mosaic.version = 11 : i64} {
  func.func @_matmul_stats_kernel(%arg0: i32, %arg1: memref<128x128xbf16, #tpu.memory_space<vmem>>, %arg2: memref<128x128xbf16, #tpu.memory_space<vmem>>, %arg3: memref<128x128xbf16, #tpu.memory_space<vmem>>, %arg4: memref<2x128xf32, #tpu.memory_space<vmem>>) attributes {dimension_semantics = [#tpu.dimension_semantics<arbitrary>], iteration_bounds = array<i64: 1>, scalar_prefetch = 0 : i64, scratch_operands = 0 : i64, tpu.core_type = #tpu.core_type<tc>, window_params = [{transform_indices = @transform_0, window_bounds = array<i64: 128, 128>}, {pipeline_mode = #tpu.pipeline_mode<synchronous>, transform_indices = @transform_1, window_bounds = array<i64: 128, 128>}, {transform_indices = @transform_2, window_bounds = array<i64: 128, 128>}, {pipeline_mode = #tpu.pipeline_mode<synchronous>, transform_indices = @transform_3, window_bounds = array<i64: 2, 128>}]} {
    %c0_i32 = arith.constant 0 : i32
    %0 = arith.cmpi eq, %arg0, %c0_i32 : i32
    %1 = arith.extui %0 : i1 to i32
    %c0_i32_0 = arith.constant 0 : i32
    %2 = arith.cmpi ne, %1, %c0_i32_0 : i32
    scf.if %2 {
      %cst_15 = arith.constant 0.000000e+00 : f32
      %19 = vector.broadcast %cst_15 : f32 to vector<2x128xf32>
      %c0_16 = arith.constant 0 : index
      %c0_17 = arith.constant 0 : index
      %20 = vector.load %arg4[%c0_16, %c0_17] : memref<2x128xf32, #tpu.memory_space<vmem>>, vector<2x128xf32>
      tpu.vector_store %arg4[%c0_16, %c0_17], %19 {strides = array<i32>} : memref<2x128xf32, #tpu.memory_space<vmem>>, vector<2x128xf32>,
    } else {
    }
    %c0 = arith.constant 0 : index
    %c0_1 = arith.constant 0 : index
    %3 = vector.load %arg1[%c0, %c0_1] : memref<128x128xbf16, #tpu.memory_space<vmem>>, vector<128x128xbf16>
    %c0_2 = arith.constant 0 : index
    %c0_3 = arith.constant 0 : index
    %4 = vector.load %arg2[%c0_2, %c0_3] : memref<128x128xbf16, #tpu.memory_space<vmem>>, vector<128x128xbf16>
    %cst = arith.constant dense<0.000000e+00> : vector<128x128xf32>
    %5 = tpu.matmul %3, %4, %cst {dimension_numbers = #tpu.dot_dimension_numbers<[1], [0], [0], [1], [0, 0, 1, 1], [], []>} : vector<128x128xbf16>, vector<128x128xbf16>, vector<128x128xf32> -> vector<128x128xf32>
    %6 = arith.truncf %5 : vector<128x128xf32> to vector<128x128xbf16>
    %c0_4 = arith.constant 0 : index
    %c0_5 = arith.constant 0 : index
    %7 = vector.load %arg3[%c0_4, %c0_5] : memref<128x128xbf16, #tpu.memory_space<vmem>>, vector<128x128xbf16>
    tpu.vector_store %arg3[%c0_4, %c0_5], %6 {strides = array<i32>} : memref<128x128xbf16, #tpu.memory_space<vmem>>, vector<128x128xbf16>,
    %c0_6 = arith.constant 0 : index
    %c0_7 = arith.constant 0 : index
    %8 = vector.load %arg4[%c0_6, %c0_7] : memref<2x128xf32, #tpu.memory_space<vmem>>, vector<1x128xf32>
    %cst_8 = arith.constant dense<0.000000e+00> : vector<128xf32>
    %9 = vector.multi_reduction <add>, %5, %cst_8 [0] : vector<128x128xf32> to vector<128xf32>
    %10 = vector.shape_cast %9 : vector<128xf32> to vector<1x128xf32>
    %11 = arith.addf %8, %10 : vector<1x128xf32>
    %c0_9 = arith.constant 0 : index
    %c0_10 = arith.constant 0 : index
    %12 = vector.load %arg4[%c0_9, %c0_10] : memref<2x128xf32, #tpu.memory_space<vmem>>, vector<1x128xf32>
    tpu.vector_store %arg4[%c0_9, %c0_10], %11 {strides = array<i32>} : memref<2x128xf32, #tpu.memory_space<vmem>>, vector<1x128xf32>,
    %c1 = arith.constant 1 : index
    %c0_11 = arith.constant 0 : index
    %13 = vector.load %arg4[%c1, %c0_11] : memref<2x128xf32, #tpu.memory_space<vmem>>, vector<1x128xf32>
    %14 = arith.mulf %5, %5 : vector<128x128xf32>
    %cst_12 = arith.constant dense<0.000000e+00> : vector<128xf32>
    %15 = vector.multi_reduction <add>, %14, %cst_12 [0] : vector<128x128xf32> to vector<128xf32>
    %16 = vector.shape_cast %15 : vector<128xf32> to vector<1x128xf32>
    %17 = arith.addf %13, %16 : vector<1x128xf32>
    %c1_13 = arith.constant 1 : index
    %c0_14 = arith.constant 0 : index
    %18 = vector.load %arg4[%c1_13, %c0_14] : memref<2x128xf32, #tpu.memory_space<vmem>>, vector<1x128xf32>
    tpu.vector_store %arg4[%c1_13, %c0_14], %17 {strides = array<i32>} : memref<2x128xf32, #tpu.memory_space<vmem>>, vector<1x128xf32>,
    return
  }
  func.func @transform_0(%arg0: i32) -> (i32, i32) {
    %c0_i32 = arith.constant 0 : i32
    %c0_i32_0 = arith.constant 0 : i32
    return %arg0, %c0_i32 : i32, i32
  }
  func.func @transform_1(%arg0: i32) -> (i32, i32) {
    %c0_i32 = arith.constant 0 : i32
    %c0_i32_0 = arith.constant 0 : i32
    %c0_i32_1 = arith.constant 0 : i32
    return %c0_i32, %c0_i32_0 : i32, i32
  }
  func.func @transform_2(%arg0: i32) -> (i32, i32) {
    %c0_i32 = arith.constant 0 : i32
    %c0_i32_0 = arith.constant 0 : i32
    return %arg0, %c0_i32 : i32, i32
  }
  func.func @transform_3(%arg0: i32) -> (i32, i32) {
    %c0_i32 = arith.constant 0 : i32
    %c0_i32_0 = arith.constant 0 : i32
    %c0_i32_1 = arith.constant 0 : i32
    return %c0_i32, %c0_i32_0 : i32, i32
  }
}

module attributes {stable_mosaic.version = 11 : i64} {
  func.func @_bn_act_kernel(%arg0: i32, %arg1: memref<128x128xbf16, #tpu.memory_space<vmem>>, %arg2: memref<1x128xf32, #tpu.memory_space<vmem>>, %arg3: memref<1x128xf32, #tpu.memory_space<vmem>>, %arg4: memref<128x128xbf16, #tpu.memory_space<vmem>>) attributes {dimension_semantics = [#tpu.dimension_semantics<parallel>], iteration_bounds = array<i64: 1>, scalar_prefetch = 0 : i64, scratch_operands = 0 : i64, tpu.core_type = #tpu.core_type<tc>, window_params = [{transform_indices = @transform_0, window_bounds = array<i64: 128, 128>}, {pipeline_mode = #tpu.pipeline_mode<synchronous>, transform_indices = @transform_1, window_bounds = array<i64: 1, 128>}, {pipeline_mode = #tpu.pipeline_mode<synchronous>, transform_indices = @transform_2, window_bounds = array<i64: 1, 128>}, {transform_indices = @transform_3, window_bounds = array<i64: 128, 128>}]} {
    %c0 = arith.constant 0 : index
    %c0_0 = arith.constant 0 : index
    %0 = vector.load %arg1[%c0, %c0_0] : memref<128x128xbf16, #tpu.memory_space<vmem>>, vector<128x128xbf16>
    %1 = arith.extf %0 : vector<128x128xbf16> to vector<128x128xf32>
    %c0_1 = arith.constant 0 : index
    %c0_2 = arith.constant 0 : index
    %2 = vector.load %arg2[%c0_1, %c0_2] : memref<1x128xf32, #tpu.memory_space<vmem>>, vector<1x128xf32>
    %3 = vector.broadcast %2 : vector<1x128xf32> to vector<128x128xf32>
    %4 = arith.mulf %1, %3 : vector<128x128xf32>
    %c0_3 = arith.constant 0 : index
    %c0_4 = arith.constant 0 : index
    %5 = vector.load %arg3[%c0_3, %c0_4] : memref<1x128xf32, #tpu.memory_space<vmem>>, vector<1x128xf32>
    %6 = vector.broadcast %5 : vector<1x128xf32> to vector<128x128xf32>
    %7 = arith.addf %4, %6 : vector<128x128xf32>
    %cst = arith.constant 0.000000e+00 : f32
    %8 = vector.broadcast %cst : f32 to vector<128x128xf32>
    %9 = arith.maximumf %7, %8 : vector<128x128xf32>
    %10 = arith.truncf %9 : vector<128x128xf32> to vector<128x128xbf16>
    %c0_5 = arith.constant 0 : index
    %c0_6 = arith.constant 0 : index
    %11 = vector.load %arg4[%c0_5, %c0_6] : memref<128x128xbf16, #tpu.memory_space<vmem>>, vector<128x128xbf16>
    tpu.vector_store %arg4[%c0_5, %c0_6], %10 {strides = array<i32>} : memref<128x128xbf16, #tpu.memory_space<vmem>>, vector<128x128xbf16>,
    return
  }
  func.func @transform_0(%arg0: i32) -> (i32, i32) {
    %c0_i32 = arith.constant 0 : i32
    %c0_i32_0 = arith.constant 0 : i32
    return %arg0, %c0_i32 : i32, i32
  }
  func.func @transform_1(%arg0: i32) -> (i32, i32) {
    %c0_i32 = arith.constant 0 : i32
    %c0_i32_0 = arith.constant 0 : i32
    %c0_i32_1 = arith.constant 0 : i32
    return %c0_i32, %c0_i32_0 : i32, i32
  }
  func.func @transform_2(%arg0: i32) -> (i32, i32) {
    %c0_i32 = arith.constant 0 : i32
    %c0_i32_0 = arith.constant 0 : i32
    %c0_i32_1 = arith.constant 0 : i32
    return %c0_i32, %c0_i32_0 : i32, i32
  }
  func.func @transform_3(%arg0: i32) -> (i32, i32) {
    %c0_i32 = arith.constant 0 : i32
    %c0_i32_0 = arith.constant 0 : i32
    return %arg0, %c0_i32 : i32, i32
  }
}

module attributes {stable_mosaic.version = 11 : i64} {
  func.func @_conv_taps_stats_kernel(%arg0: i32, %arg1: memref<1x32x512xbf16, #tpu.memory_space<vmem>>, %arg2: memref<1280x128xbf16, #tpu.memory_space<vmem>>, %arg3: memref<1x20x128xbf16, #tpu.memory_space<vmem>>, %arg4: memref<2x128xf32, #tpu.memory_space<vmem>>) attributes {dimension_semantics = [#tpu.dimension_semantics<arbitrary>], iteration_bounds = array<i64: 2>, scalar_prefetch = 0 : i64, scratch_operands = 0 : i64, tpu.core_type = #tpu.core_type<tc>, window_params = [{transform_indices = @transform_0, window_bounds = array<i64: 1, 32, 512>}, {pipeline_mode = #tpu.pipeline_mode<synchronous>, transform_indices = @transform_1, window_bounds = array<i64: 1280, 128>}, {transform_indices = @transform_2, window_bounds = array<i64: 1, 20, 128>}, {pipeline_mode = #tpu.pipeline_mode<synchronous>, transform_indices = @transform_3, window_bounds = array<i64: 2, 128>}]} {
    %c0_i32 = arith.constant 0 : i32
    %0 = arith.cmpi eq, %arg0, %c0_i32 : i32
    %1 = arith.extui %0 : i1 to i32
    %c0_i32_0 = arith.constant 0 : i32
    %2 = arith.cmpi ne, %1, %c0_i32_0 : i32
    scf.if %2 {
      %cst_35 = arith.constant 0.000000e+00 : f32
      %60 = vector.broadcast %cst_35 : f32 to vector<2x128xf32>
      %c0_36 = arith.constant 0 : index
      %c0_37 = arith.constant 0 : index
      %61 = vector.load %arg4[%c0_36, %c0_37] : memref<2x128xf32, #tpu.memory_space<vmem>>, vector<2x128xf32>
      tpu.vector_store %arg4[%c0_36, %c0_37], %60 {strides = array<i32>} : memref<2x128xf32, #tpu.memory_space<vmem>>, vector<2x128xf32>,
    } else {
    }
    %c0 = arith.constant 0 : index
    %c0_1 = arith.constant 0 : index
    %c0_2 = arith.constant 0 : index
    %3 = vector.load %arg1[%c0, %c0_1, %c0_2] : memref<1x32x512xbf16, #tpu.memory_space<vmem>>, vector<1x20x512xbf16>
    %4 = vector.shape_cast %3 : vector<1x20x512xbf16> to vector<20x512xbf16>
    %c0_3 = arith.constant 0 : index
    %c0_4 = arith.constant 0 : index
    %5 = vector.load %arg2[%c0_3, %c0_4] : memref<1280x128xbf16, #tpu.memory_space<vmem>>, vector<512x128xbf16>
    %cst = arith.constant dense<0.000000e+00> : vector<20x128xf32>
    %6 = tpu.matmul %4, %5, %cst {dimension_numbers = #tpu.dot_dimension_numbers<[1], [0], [0], [1], [0, 0, 1, 1], [], []>} : vector<20x512xbf16>, vector<512x128xbf16>, vector<20x128xf32> -> vector<20x128xf32>
    %c0_5 = arith.constant 0 : index
    %c1 = arith.constant 1 : index
    %c0_6 = arith.constant 0 : index
    %7 = vector.load %arg1[%c0_5, %c1, %c0_6] : memref<1x32x512xbf16, #tpu.memory_space<vmem>>, vector<1x20x384xbf16>
    %8 = vector.shape_cast %7 : vector<1x20x384xbf16> to vector<20x384xbf16>
    %c512 = arith.constant 512 : index
    %c0_7 = arith.constant 0 : index
    %9 = vector.load %arg2[%c512, %c0_7] : memref<1280x128xbf16, #tpu.memory_space<vmem>>, vector<384x128xbf16>
    %cst_8 = arith.constant dense<0.000000e+00> : vector<20x128xf32>
    %10 = tpu.matmul %8, %9, %cst_8 {dimension_numbers = #tpu.dot_dimension_numbers<[1], [0], [0], [1], [0, 0, 1, 1], [], []>} : vector<20x384xbf16>, vector<384x128xbf16>, vector<20x128xf32> -> vector<20x128xf32>
    %11 = arith.addf %6, %10 : vector<20x128xf32>
    %c0_9 = arith.constant 0 : index
    %c5 = arith.constant 5 : index
    %c0_10 = arith.constant 0 : index
    %12 = vector.load %arg1[%c0_9, %c5, %c0_10] : memref<1x32x512xbf16, #tpu.memory_space<vmem>>, vector<1x20x256xbf16>
    %13 = vector.shape_cast %12 : vector<1x20x256xbf16> to vector<20x256xbf16>
    %c896 = arith.constant 896 : index
    %c0_11 = arith.constant 0 : index
    %14 = vector.load %arg2[%c896, %c0_11] : memref<1280x128xbf16, #tpu.memory_space<vmem>>, vector<256x128xbf16>
    %cst_12 = arith.constant dense<0.000000e+00> : vector<20x128xf32>
    %15 = tpu.matmul %13, %14, %cst_12 {dimension_numbers = #tpu.dot_dimension_numbers<[1], [0], [0], [1], [0, 0, 1, 1], [], []>} : vector<20x256xbf16>, vector<256x128xbf16>, vector<20x128xf32> -> vector<20x128xf32>
    %16 = arith.addf %11, %15 : vector<20x128xf32>
    %c0_13 = arith.constant 0 : index
    %c6 = arith.constant 6 : index
    %c0_14 = arith.constant 0 : index
    %17 = vector.load %arg1[%c0_13, %c6, %c0_14] : memref<1x32x512xbf16, #tpu.memory_space<vmem>>, vector<1x20x128xbf16>
    %18 = vector.shape_cast %17 : vector<1x20x128xbf16> to vector<20x128xbf16>
    %c1152 = arith.constant 1152 : index
    %c0_15 = arith.constant 0 : index
    %19 = vector.load %arg2[%c1152, %c0_15] : memref<1280x128xbf16, #tpu.memory_space<vmem>>, vector<128x128xbf16>
    %cst_16 = arith.constant dense<0.000000e+00> : vector<20x128xf32>
    %20 = tpu.matmul %18, %19, %cst_16 {dimension_numbers = #tpu.dot_dimension_numbers<[1], [0], [0], [1], [0, 0, 1, 1], [], []>} : vector<20x128xbf16>, vector<128x128xbf16>, vector<20x128xf32> -> vector<20x128xf32>
    %21 = arith.addf %16, %20 : vector<20x128xf32>
    %22 = arith.truncf %21 : vector<20x128xf32> to vector<20x128xbf16>
    %c0_17 = arith.constant 0 : index
    %c0_18 = arith.constant 0 : index
    %c0_19 = arith.constant 0 : index
    %23 = vector.load %arg3[%c0_17, %c0_18, %c0_19] : memref<1x20x128xbf16, #tpu.memory_space<vmem>>, vector<1x20x128xbf16>
    %24 = vector.shape_cast %23 : vector<1x20x128xbf16> to vector<20x128xbf16>
    %25 = vector.shape_cast %22 : vector<20x128xbf16> to vector<1x20x128xbf16>
    tpu.vector_store %arg3[%c0_17, %c0_18, %c0_19], %25 {strides = array<i32>} : memref<1x20x128xbf16, #tpu.memory_space<vmem>>, vector<1x20x128xbf16>,
    %26 = tpu.iota {dimensions = array<i32: 0>} : vector<20x1xi32>
    %c5_i32 = arith.constant 5 : i32
    %c0_i32_20 = arith.constant 0 : i32
    %27 = arith.cmpi eq, %c5_i32, %c0_i32_20 : i32
    %c1_i32 = arith.constant 1 : i32
    %28 = arith.select %27, %c1_i32, %c5_i32 : i32
    %29 = vector.broadcast %28 : i32 to vector<20x1xi32>
    %30 = arith.remsi %26, %29 : vector<20x1xi32>
    %c0_i32_21 = arith.constant 0 : i32
    %31 = vector.broadcast %c0_i32_21 : i32 to vector<20x1xi32>
    %32 = arith.cmpi ne, %30, %31 : vector<20x1xi32>
    %c0_i32_22 = arith.constant 0 : i32
    %33 = vector.broadcast %c0_i32_22 : i32 to vector<20x1xi32>
    %34 = arith.cmpi slt, %30, %33 : vector<20x1xi32>
    %c0_i32_23 = arith.constant 0 : i32
    %35 = arith.cmpi slt, %28, %c0_i32_23 : i32
    %36 = vector.broadcast %35 : i1 to vector<20x1xi1>
    %37 = vector.broadcast %36 : vector<20x1xi1> to vector<20x1xi1>
    %38 = arith.xori %34, %37 : vector<20x1xi1>
    %39 = arith.andi %38, %32 : vector<20x1xi1>
    %40 = vector.broadcast %28 : i32 to vector<20x1xi32>
    %41 = arith.addi %30, %40 : vector<20x1xi32>
    %42 = arith.select %39, %41, %30 : vector<20x1xi1>, vector<20x1xi32>
    %c4_i32 = arith.constant 4 : i32
    %43 = vector.broadcast %c4_i32 : i32 to vector<20x1xi32>
    %44 = arith.cmpi slt, %42, %43 : vector<20x1xi32>
    %cst_24 = arith.constant 0.000000e+00 : f32
    %45 = vector.shape_cast %44 : vector<20x1xi1> to vector<20x1xi1>
    %46 = vector.broadcast %45 : vector<20x1xi1> to vector<20x128xi1>
    %47 = vector.broadcast %cst_24 : f32 to vector<20x128xf32>
    %48 = arith.select %46, %21, %47 : vector<20x128xi1>, vector<20x128xf32>
    %c0_25 = arith.constant 0 : index
    %c0_26 = arith.constant 0 : index
    %49 = vector.load %arg4[%c0_25, %c0_26] : memref<2x128xf32, #tpu.memory_space<vmem>>, vector<1x128xf32>
    %cst_27 = arith.constant dense<0.000000e+00> : vector<128xf32>
    %50 = vector.multi_reduction <add>, %48, %cst_27 [0] : vector<20x128xf32> to vector<128xf32>
    %51 = vector.shape_cast %50 : vector<128xf32> to vector<1x128xf32>
    %52 = arith.addf %49, %51 : vector<1x128xf32>
    %c0_28 = arith.constant 0 : index
    %c0_29 = arith.constant 0 : index
    %53 = vector.load %arg4[%c0_28, %c0_29] : memref<2x128xf32, #tpu.memory_space<vmem>>, vector<1x128xf32>
    tpu.vector_store %arg4[%c0_28, %c0_29], %52 {strides = array<i32>} : memref<2x128xf32, #tpu.memory_space<vmem>>, vector<1x128xf32>,
    %c1_30 = arith.constant 1 : index
    %c0_31 = arith.constant 0 : index
    %54 = vector.load %arg4[%c1_30, %c0_31] : memref<2x128xf32, #tpu.memory_space<vmem>>, vector<1x128xf32>
    %55 = arith.mulf %48, %48 : vector<20x128xf32>
    %cst_32 = arith.constant dense<0.000000e+00> : vector<128xf32>
    %56 = vector.multi_reduction <add>, %55, %cst_32 [0] : vector<20x128xf32> to vector<128xf32>
    %57 = vector.shape_cast %56 : vector<128xf32> to vector<1x128xf32>
    %58 = arith.addf %54, %57 : vector<1x128xf32>
    %c1_33 = arith.constant 1 : index
    %c0_34 = arith.constant 0 : index
    %59 = vector.load %arg4[%c1_33, %c0_34] : memref<2x128xf32, #tpu.memory_space<vmem>>, vector<1x128xf32>
    tpu.vector_store %arg4[%c1_33, %c0_34], %58 {strides = array<i32>} : memref<2x128xf32, #tpu.memory_space<vmem>>, vector<1x128xf32>,
    return
  }
  func.func @transform_0(%arg0: i32) -> (i32, i32, i32) {
    %c0_i32 = arith.constant 0 : i32
    %c0_i32_0 = arith.constant 0 : i32
    %c0_i32_1 = arith.constant 0 : i32
    return %arg0, %c0_i32, %c0_i32_0 : i32, i32, i32
  }
  func.func @transform_1(%arg0: i32) -> (i32, i32) {
    %c0_i32 = arith.constant 0 : i32
    %c0_i32_0 = arith.constant 0 : i32
    %c0_i32_1 = arith.constant 0 : i32
    return %c0_i32, %c0_i32_0 : i32, i32
  }
  func.func @transform_2(%arg0: i32) -> (i32, i32, i32) {
    %c0_i32 = arith.constant 0 : i32
    %c0_i32_0 = arith.constant 0 : i32
    %c0_i32_1 = arith.constant 0 : i32
    return %arg0, %c0_i32, %c0_i32_0 : i32, i32, i32
  }
  func.func @transform_3(%arg0: i32) -> (i32, i32) {
    %c0_i32 = arith.constant 0 : i32
    %c0_i32_0 = arith.constant 0 : i32
    %c0_i32_1 = arith.constant 0 : i32
    return %c0_i32, %c0_i32_0 : i32, i32
  }
}

module attributes {stable_mosaic.version = 11 : i64} {
  func.func @_matmul_stats_kernel(%arg0: i32, %arg1: memref<32x128xbf16, #tpu.memory_space<vmem>>, %arg2: memref<128x128xbf16, #tpu.memory_space<vmem>>, %arg3: memref<32x128xbf16, #tpu.memory_space<vmem>>, %arg4: memref<2x128xf32, #tpu.memory_space<vmem>>) attributes {dimension_semantics = [#tpu.dimension_semantics<arbitrary>], iteration_bounds = array<i64: 1>, scalar_prefetch = 0 : i64, scratch_operands = 0 : i64, tpu.core_type = #tpu.core_type<tc>, window_params = [{transform_indices = @transform_0, window_bounds = array<i64: 32, 128>}, {pipeline_mode = #tpu.pipeline_mode<synchronous>, transform_indices = @transform_1, window_bounds = array<i64: 128, 128>}, {transform_indices = @transform_2, window_bounds = array<i64: 32, 128>}, {pipeline_mode = #tpu.pipeline_mode<synchronous>, transform_indices = @transform_3, window_bounds = array<i64: 2, 128>}]} {
    %c0_i32 = arith.constant 0 : i32
    %0 = arith.cmpi eq, %arg0, %c0_i32 : i32
    %1 = arith.extui %0 : i1 to i32
    %c0_i32_0 = arith.constant 0 : i32
    %2 = arith.cmpi ne, %1, %c0_i32_0 : i32
    scf.if %2 {
      %cst_15 = arith.constant 0.000000e+00 : f32
      %19 = vector.broadcast %cst_15 : f32 to vector<2x128xf32>
      %c0_16 = arith.constant 0 : index
      %c0_17 = arith.constant 0 : index
      %20 = vector.load %arg4[%c0_16, %c0_17] : memref<2x128xf32, #tpu.memory_space<vmem>>, vector<2x128xf32>
      tpu.vector_store %arg4[%c0_16, %c0_17], %19 {strides = array<i32>} : memref<2x128xf32, #tpu.memory_space<vmem>>, vector<2x128xf32>,
    } else {
    }
    %c0 = arith.constant 0 : index
    %c0_1 = arith.constant 0 : index
    %3 = vector.load %arg1[%c0, %c0_1] : memref<32x128xbf16, #tpu.memory_space<vmem>>, vector<32x128xbf16>
    %c0_2 = arith.constant 0 : index
    %c0_3 = arith.constant 0 : index
    %4 = vector.load %arg2[%c0_2, %c0_3] : memref<128x128xbf16, #tpu.memory_space<vmem>>, vector<128x128xbf16>
    %cst = arith.constant dense<0.000000e+00> : vector<32x128xf32>
    %5 = tpu.matmul %3, %4, %cst {dimension_numbers = #tpu.dot_dimension_numbers<[1], [0], [0], [1], [0, 0, 1, 1], [], []>} : vector<32x128xbf16>, vector<128x128xbf16>, vector<32x128xf32> -> vector<32x128xf32>
    %6 = arith.truncf %5 : vector<32x128xf32> to vector<32x128xbf16>
    %c0_4 = arith.constant 0 : index
    %c0_5 = arith.constant 0 : index
    %7 = vector.load %arg3[%c0_4, %c0_5] : memref<32x128xbf16, #tpu.memory_space<vmem>>, vector<32x128xbf16>
    tpu.vector_store %arg3[%c0_4, %c0_5], %6 {strides = array<i32>} : memref<32x128xbf16, #tpu.memory_space<vmem>>, vector<32x128xbf16>,
    %c0_6 = arith.constant 0 : index
    %c0_7 = arith.constant 0 : index
    %8 = vector.load %arg4[%c0_6, %c0_7] : memref<2x128xf32, #tpu.memory_space<vmem>>, vector<1x128xf32>
    %cst_8 = arith.constant dense<0.000000e+00> : vector<128xf32>
    %9 = vector.multi_reduction <add>, %5, %cst_8 [0] : vector<32x128xf32> to vector<128xf32>
    %10 = vector.shape_cast %9 : vector<128xf32> to vector<1x128xf32>
    %11 = arith.addf %8, %10 : vector<1x128xf32>
    %c0_9 = arith.constant 0 : index
    %c0_10 = arith.constant 0 : index
    %12 = vector.load %arg4[%c0_9, %c0_10] : memref<2x128xf32, #tpu.memory_space<vmem>>, vector<1x128xf32>
    tpu.vector_store %arg4[%c0_9, %c0_10], %11 {strides = array<i32>} : memref<2x128xf32, #tpu.memory_space<vmem>>, vector<1x128xf32>,
    %c1 = arith.constant 1 : index
    %c0_11 = arith.constant 0 : index
    %13 = vector.load %arg4[%c1, %c0_11] : memref<2x128xf32, #tpu.memory_space<vmem>>, vector<1x128xf32>
    %14 = arith.mulf %5, %5 : vector<32x128xf32>
    %cst_12 = arith.constant dense<0.000000e+00> : vector<128xf32>
    %15 = vector.multi_reduction <add>, %14, %cst_12 [0] : vector<32x128xf32> to vector<128xf32>
    %16 = vector.shape_cast %15 : vector<128xf32> to vector<1x128xf32>
    %17 = arith.addf %13, %16 : vector<1x128xf32>
    %c1_13 = arith.constant 1 : index
    %c0_14 = arith.constant 0 : index
    %18 = vector.load %arg4[%c1_13, %c0_14] : memref<2x128xf32, #tpu.memory_space<vmem>>, vector<1x128xf32>
    tpu.vector_store %arg4[%c1_13, %c0_14], %17 {strides = array<i32>} : memref<2x128xf32, #tpu.memory_space<vmem>>, vector<1x128xf32>,
    return
  }
  func.func @transform_0(%arg0: i32) -> (i32, i32) {
    %c0_i32 = arith.constant 0 : i32
    %c0_i32_0 = arith.constant 0 : i32
    return %arg0, %c0_i32 : i32, i32
  }
  func.func @transform_1(%arg0: i32) -> (i32, i32) {
    %c0_i32 = arith.constant 0 : i32
    %c0_i32_0 = arith.constant 0 : i32
    %c0_i32_1 = arith.constant 0 : i32
    return %c0_i32, %c0_i32_0 : i32, i32
  }
  func.func @transform_2(%arg0: i32) -> (i32, i32) {
    %c0_i32 = arith.constant 0 : i32
    %c0_i32_0 = arith.constant 0 : i32
    return %arg0, %c0_i32 : i32, i32
  }
  func.func @transform_3(%arg0: i32) -> (i32, i32) {
    %c0_i32 = arith.constant 0 : i32
    %c0_i32_0 = arith.constant 0 : i32
    %c0_i32_1 = arith.constant 0 : i32
    return %c0_i32, %c0_i32_0 : i32, i32
  }
}

module attributes {stable_mosaic.version = 11 : i64} {
  func.func @_matmul_stats_kernel(%arg0: i32, %arg1: memref<32x128xbf16, #tpu.memory_space<vmem>>, %arg2: memref<128x128xbf16, #tpu.memory_space<vmem>>, %arg3: memref<1x128xf32, #tpu.memory_space<vmem>>, %arg4: memref<1x128xf32, #tpu.memory_space<vmem>>, %arg5: memref<32x128xbf16, #tpu.memory_space<vmem>>, %arg6: memref<2x128xf32, #tpu.memory_space<vmem>>) attributes {dimension_semantics = [#tpu.dimension_semantics<arbitrary>], iteration_bounds = array<i64: 1>, scalar_prefetch = 0 : i64, scratch_operands = 0 : i64, tpu.core_type = #tpu.core_type<tc>, window_params = [{transform_indices = @transform_0, window_bounds = array<i64: 32, 128>}, {pipeline_mode = #tpu.pipeline_mode<synchronous>, transform_indices = @transform_1, window_bounds = array<i64: 128, 128>}, {pipeline_mode = #tpu.pipeline_mode<synchronous>, transform_indices = @transform_2, window_bounds = array<i64: 1, 128>}, {pipeline_mode = #tpu.pipeline_mode<synchronous>, transform_indices = @transform_3, window_bounds = array<i64: 1, 128>}, {transform_indices = @transform_4, window_bounds = array<i64: 32, 128>}, {pipeline_mode = #tpu.pipeline_mode<synchronous>, transform_indices = @transform_5, window_bounds = array<i64: 2, 128>}]} {
    %c0_i32 = arith.constant 0 : i32
    %0 = arith.cmpi eq, %arg0, %c0_i32 : i32
    %1 = arith.extui %0 : i1 to i32
    %c0_i32_0 = arith.constant 0 : i32
    %2 = arith.cmpi ne, %1, %c0_i32_0 : i32
    scf.if %2 {
      %cst_20 = arith.constant 0.000000e+00 : f32
      %29 = vector.broadcast %cst_20 : f32 to vector<2x128xf32>
      %c0_21 = arith.constant 0 : index
      %c0_22 = arith.constant 0 : index
      %30 = vector.load %arg6[%c0_21, %c0_22] : memref<2x128xf32, #tpu.memory_space<vmem>>, vector<2x128xf32>
      tpu.vector_store %arg6[%c0_21, %c0_22], %29 {strides = array<i32>} : memref<2x128xf32, #tpu.memory_space<vmem>>, vector<2x128xf32>,
    } else {
    }
    %c0 = arith.constant 0 : index
    %c0_1 = arith.constant 0 : index
    %3 = vector.load %arg1[%c0, %c0_1] : memref<32x128xbf16, #tpu.memory_space<vmem>>, vector<32x128xbf16>
    %4 = arith.extf %3 : vector<32x128xbf16> to vector<32x128xf32>
    %c0_2 = arith.constant 0 : index
    %c0_3 = arith.constant 0 : index
    %5 = vector.load %arg3[%c0_2, %c0_3] : memref<1x128xf32, #tpu.memory_space<vmem>>, vector<1x128xf32>
    %6 = vector.broadcast %5 : vector<1x128xf32> to vector<32x128xf32>
    %7 = arith.mulf %4, %6 : vector<32x128xf32>
    %c0_4 = arith.constant 0 : index
    %c0_5 = arith.constant 0 : index
    %8 = vector.load %arg4[%c0_4, %c0_5] : memref<1x128xf32, #tpu.memory_space<vmem>>, vector<1x128xf32>
    %9 = vector.broadcast %8 : vector<1x128xf32> to vector<32x128xf32>
    %10 = arith.addf %7, %9 : vector<32x128xf32>
    %cst = arith.constant 0.000000e+00 : f32
    %11 = vector.broadcast %cst : f32 to vector<32x128xf32>
    %12 = arith.maximumf %10, %11 : vector<32x128xf32>
    %13 = arith.truncf %12 : vector<32x128xf32> to vector<32x128xbf16>
    %c0_6 = arith.constant 0 : index
    %c0_7 = arith.constant 0 : index
    %14 = vector.load %arg2[%c0_6, %c0_7] : memref<128x128xbf16, #tpu.memory_space<vmem>>, vector<128x128xbf16>
    %cst_8 = arith.constant dense<0.000000e+00> : vector<32x128xf32>
    %15 = tpu.matmul %13, %14, %cst_8 {dimension_numbers = #tpu.dot_dimension_numbers<[1], [0], [0], [1], [0, 0, 1, 1], [], []>} : vector<32x128xbf16>, vector<128x128xbf16>, vector<32x128xf32> -> vector<32x128xf32>
    %16 = arith.truncf %15 : vector<32x128xf32> to vector<32x128xbf16>
    %c0_9 = arith.constant 0 : index
    %c0_10 = arith.constant 0 : index
    %17 = vector.load %arg5[%c0_9, %c0_10] : memref<32x128xbf16, #tpu.memory_space<vmem>>, vector<32x128xbf16>
    tpu.vector_store %arg5[%c0_9, %c0_10], %16 {strides = array<i32>} : memref<32x128xbf16, #tpu.memory_space<vmem>>, vector<32x128xbf16>,
    %c0_11 = arith.constant 0 : index
    %c0_12 = arith.constant 0 : index
    %18 = vector.load %arg6[%c0_11, %c0_12] : memref<2x128xf32, #tpu.memory_space<vmem>>, vector<1x128xf32>
    %cst_13 = arith.constant dense<0.000000e+00> : vector<128xf32>
    %19 = vector.multi_reduction <add>, %15, %cst_13 [0] : vector<32x128xf32> to vector<128xf32>
    %20 = vector.shape_cast %19 : vector<128xf32> to vector<1x128xf32>
    %21 = arith.addf %18, %20 : vector<1x128xf32>
    %c0_14 = arith.constant 0 : index
    %c0_15 = arith.constant 0 : index
    %22 = vector.load %arg6[%c0_14, %c0_15] : memref<2x128xf32, #tpu.memory_space<vmem>>, vector<1x128xf32>
    tpu.vector_store %arg6[%c0_14, %c0_15], %21 {strides = array<i32>} : memref<2x128xf32, #tpu.memory_space<vmem>>, vector<1x128xf32>,
    %c1 = arith.constant 1 : index
    %c0_16 = arith.constant 0 : index
    %23 = vector.load %arg6[%c1, %c0_16] : memref<2x128xf32, #tpu.memory_space<vmem>>, vector<1x128xf32>
    %24 = arith.mulf %15, %15 : vector<32x128xf32>
    %cst_17 = arith.constant dense<0.000000e+00> : vector<128xf32>
    %25 = vector.multi_reduction <add>, %24, %cst_17 [0] : vector<32x128xf32> to vector<128xf32>
    %26 = vector.shape_cast %25 : vector<128xf32> to vector<1x128xf32>
    %27 = arith.addf %23, %26 : vector<1x128xf32>
    %c1_18 = arith.constant 1 : index
    %c0_19 = arith.constant 0 : index
    %28 = vector.load %arg6[%c1_18, %c0_19] : memref<2x128xf32, #tpu.memory_space<vmem>>, vector<1x128xf32>
    tpu.vector_store %arg6[%c1_18, %c0_19], %27 {strides = array<i32>} : memref<2x128xf32, #tpu.memory_space<vmem>>, vector<1x128xf32>,
    return
  }
  func.func @transform_0(%arg0: i32) -> (i32, i32) {
    %c0_i32 = arith.constant 0 : i32
    %c0_i32_0 = arith.constant 0 : i32
    return %arg0, %c0_i32 : i32, i32
  }
  func.func @transform_1(%arg0: i32) -> (i32, i32) {
    %c0_i32 = arith.constant 0 : i32
    %c0_i32_0 = arith.constant 0 : i32
    %c0_i32_1 = arith.constant 0 : i32
    return %c0_i32, %c0_i32_0 : i32, i32
  }
  func.func @transform_2(%arg0: i32) -> (i32, i32) {
    %c0_i32 = arith.constant 0 : i32
    %c0_i32_0 = arith.constant 0 : i32
    %c0_i32_1 = arith.constant 0 : i32
    return %c0_i32, %c0_i32_0 : i32, i32
  }
  func.func @transform_3(%arg0: i32) -> (i32, i32) {
    %c0_i32 = arith.constant 0 : i32
    %c0_i32_0 = arith.constant 0 : i32
    %c0_i32_1 = arith.constant 0 : i32
    return %c0_i32, %c0_i32_0 : i32, i32
  }
  func.func @transform_4(%arg0: i32) -> (i32, i32) {
    %c0_i32 = arith.constant 0 : i32
    %c0_i32_0 = arith.constant 0 : i32
    return %arg0, %c0_i32 : i32, i32
  }
  func.func @transform_5(%arg0: i32) -> (i32, i32) {
    %c0_i32 = arith.constant 0 : i32
    %c0_i32_0 = arith.constant 0 : i32
    %c0_i32_1 = arith.constant 0 : i32
    return %c0_i32, %c0_i32_0 : i32, i32
  }
}

module attributes {stable_mosaic.version = 11 : i64} {
  func.func @_bn_add_relu_kernel(%arg0: i32, %arg1: memref<32x128xbf16, #tpu.memory_space<vmem>>, %arg2: memref<1x128xf32, #tpu.memory_space<vmem>>, %arg3: memref<1x128xf32, #tpu.memory_space<vmem>>, %arg4: memref<32x128xbf16, #tpu.memory_space<vmem>>, %arg5: memref<1x128xf32, #tpu.memory_space<vmem>>, %arg6: memref<1x128xf32, #tpu.memory_space<vmem>>, %arg7: memref<32x128xbf16, #tpu.memory_space<vmem>>) attributes {dimension_semantics = [#tpu.dimension_semantics<parallel>], iteration_bounds = array<i64: 1>, scalar_prefetch = 0 : i64, scratch_operands = 0 : i64, tpu.core_type = #tpu.core_type<tc>, window_params = [{transform_indices = @transform_0, window_bounds = array<i64: 32, 128>}, {pipeline_mode = #tpu.pipeline_mode<synchronous>, transform_indices = @transform_1, window_bounds = array<i64: 1, 128>}, {pipeline_mode = #tpu.pipeline_mode<synchronous>, transform_indices = @transform_2, window_bounds = array<i64: 1, 128>}, {transform_indices = @transform_3, window_bounds = array<i64: 32, 128>}, {pipeline_mode = #tpu.pipeline_mode<synchronous>, transform_indices = @transform_4, window_bounds = array<i64: 1, 128>}, {pipeline_mode = #tpu.pipeline_mode<synchronous>, transform_indices = @transform_5, window_bounds = array<i64: 1, 128>}, {transform_indices = @transform_6, window_bounds = array<i64: 32, 128>}]} {
    %c0 = arith.constant 0 : index
    %c0_0 = arith.constant 0 : index
    %0 = vector.load %arg1[%c0, %c0_0] : memref<32x128xbf16, #tpu.memory_space<vmem>>, vector<32x128xbf16>
    %1 = arith.extf %0 : vector<32x128xbf16> to vector<32x128xf32>
    %c0_1 = arith.constant 0 : index
    %c0_2 = arith.constant 0 : index
    %2 = vector.load %arg2[%c0_1, %c0_2] : memref<1x128xf32, #tpu.memory_space<vmem>>, vector<1x128xf32>
    %3 = vector.broadcast %2 : vector<1x128xf32> to vector<32x128xf32>
    %4 = arith.mulf %1, %3 : vector<32x128xf32>
    %c0_3 = arith.constant 0 : index
    %c0_4 = arith.constant 0 : index
    %5 = vector.load %arg3[%c0_3, %c0_4] : memref<1x128xf32, #tpu.memory_space<vmem>>, vector<1x128xf32>
    %6 = vector.broadcast %5 : vector<1x128xf32> to vector<32x128xf32>
    %7 = arith.addf %4, %6 : vector<32x128xf32>
    %c0_5 = arith.constant 0 : index
    %c0_6 = arith.constant 0 : index
    %8 = vector.load %arg4[%c0_5, %c0_6] : memref<32x128xbf16, #tpu.memory_space<vmem>>, vector<32x128xbf16>
    %9 = arith.extf %8 : vector<32x128xbf16> to vector<32x128xf32>
    %c0_7 = arith.constant 0 : index
    %c0_8 = arith.constant 0 : index
    %10 = vector.load %arg5[%c0_7, %c0_8] : memref<1x128xf32, #tpu.memory_space<vmem>>, vector<1x128xf32>
    %11 = vector.broadcast %10 : vector<1x128xf32> to vector<32x128xf32>
    %12 = arith.mulf %9, %11 : vector<32x128xf32>
    %c0_9 = arith.constant 0 : index
    %c0_10 = arith.constant 0 : index
    %13 = vector.load %arg6[%c0_9, %c0_10] : memref<1x128xf32, #tpu.memory_space<vmem>>, vector<1x128xf32>
    %14 = vector.broadcast %13 : vector<1x128xf32> to vector<32x128xf32>
    %15 = arith.addf %12, %14 : vector<32x128xf32>
    %16 = arith.addf %7, %15 : vector<32x128xf32>
    %cst = arith.constant 0.000000e+00 : f32
    %17 = vector.broadcast %cst : f32 to vector<32x128xf32>
    %18 = arith.maximumf %16, %17 : vector<32x128xf32>
    %19 = arith.truncf %18 : vector<32x128xf32> to vector<32x128xbf16>
    %c0_11 = arith.constant 0 : index
    %c0_12 = arith.constant 0 : index
    %20 = vector.load %arg7[%c0_11, %c0_12] : memref<32x128xbf16, #tpu.memory_space<vmem>>, vector<32x128xbf16>
    tpu.vector_store %arg7[%c0_11, %c0_12], %19 {strides = array<i32>} : memref<32x128xbf16, #tpu.memory_space<vmem>>, vector<32x128xbf16>,
    return
  }
  func.func @transform_0(%arg0: i32) -> (i32, i32) {
    %c0_i32 = arith.constant 0 : i32
    %c0_i32_0 = arith.constant 0 : i32
    return %arg0, %c0_i32 : i32, i32
  }
  func.func @transform_1(%arg0: i32) -> (i32, i32) {
    %c0_i32 = arith.constant 0 : i32
    %c0_i32_0 = arith.constant 0 : i32
    %c0_i32_1 = arith.constant 0 : i32
    return %c0_i32, %c0_i32_0 : i32, i32
  }
  func.func @transform_2(%arg0: i32) -> (i32, i32) {
    %c0_i32 = arith.constant 0 : i32
    %c0_i32_0 = arith.constant 0 : i32
    %c0_i32_1 = arith.constant 0 : i32
    return %c0_i32, %c0_i32_0 : i32, i32
  }
  func.func @transform_3(%arg0: i32) -> (i32, i32) {
    %c0_i32 = arith.constant 0 : i32
    %c0_i32_0 = arith.constant 0 : i32
    return %arg0, %c0_i32 : i32, i32
  }
  func.func @transform_4(%arg0: i32) -> (i32, i32) {
    %c0_i32 = arith.constant 0 : i32
    %c0_i32_0 = arith.constant 0 : i32
    %c0_i32_1 = arith.constant 0 : i32
    return %c0_i32, %c0_i32_0 : i32, i32
  }
  func.func @transform_5(%arg0: i32) -> (i32, i32) {
    %c0_i32 = arith.constant 0 : i32
    %c0_i32_0 = arith.constant 0 : i32
    %c0_i32_1 = arith.constant 0 : i32
    return %c0_i32, %c0_i32_0 : i32, i32
  }
  func.func @transform_6(%arg0: i32) -> (i32, i32) {
    %c0_i32 = arith.constant 0 : i32
    %c0_i32_0 = arith.constant 0 : i32
    return %arg0, %c0_i32 : i32, i32
  }
}

</mosaic_0001>

<llo_original>
// kernel: bottleneck_forward.7
$region0: #{bottleneck_forward.7}
  #allocation0 [shape = 'u32[]', space=smem, size = 0x4, offset = 0x4, fixed_abs, tag = 'smem constant byte address 0x4 - core index']
  #allocation1 [shape = 'u32[144,128]{1,0:T(1,128)}', space=vmem, size = 0x12000, scoped, tag = 'internal scratch']
  %s0 = inlined_call_operand.vmem [shape: bf16[128,128], index: 0, kind: input, shape index: {}]
  %s1 = inlined_call_operand.vmem [shape: f32[1,128], index: 1, kind: input, shape index: {}]
  %s2 = inlined_call_operand.vmem [shape: f32[1,128], index: 2, kind: input, shape index: {}]
  %s3 = inlined_call_operand.vmem [shape: bf16[128,128], index: 3, kind: output, shape index: {}]
  %s4 = sld [smem:[#allocation0]]
  $region22: #{bottleneck_forward.7} parent=0
    _
  %s6 = ssub.s32 1, %s4
  %s7 = scalar_select 0, %s6, %s4
  // Predicated region
  $region2: #{bottleneck_forward.7} parent=0 // pred_check
    _
  $region3: #{bottleneck_forward.7} parent=0 // pred_check_branch
    %9 = sbr.rel (0) target = $region5
  $region4: #{bottleneck_forward.7} parent=0 // pred_region
    _
  $region5: #{bottleneck_forward.7} parent=0 // pred_fallthru
    _
  // Predicated region
  $region6: #{bottleneck_forward.7} parent=0 // pred_check
    _
  $region7: #{bottleneck_forward.7} parent=0 // pred_check_branch
    %11 = sbr.rel (0) target = $region9
  $region8: #{bottleneck_forward.7} parent=0 // pred_region
    _
  $region9: #{bottleneck_forward.7} parent=0 // pred_fallthru
    _
  // Predicated region
  $region10: #{bottleneck_forward.7} parent=0 // pred_check
    _
  $region11: #{bottleneck_forward.7} parent=0 // pred_check_branch
    %13 = sbr.rel (0) target = $region13
  $region12: #{bottleneck_forward.7} parent=0 // pred_region
    _
  $region13: #{bottleneck_forward.7} parent=0 // pred_fallthru
    _
  %v14 = vld [vmem:[%s0] sm:$0xf]
  %v15 = vld [vmem:[%s0 + $0x4] sm:$0xf]
  %v16 = vld [vmem:[%s0 + $0x8] sm:$0xf]
  %v17 = vld [vmem:[%s0 + $0xc] sm:$0xf]
  %v18 = vld [vmem:[%s0 + $0x10] sm:$0xf]
  %v19 = vld [vmem:[%s0 + $0x14] sm:$0xf]
  %v20 = vld [vmem:[%s0 + $0x18] sm:$0xf]
  %v21 = vld [vmem:[%s0 + $0x1c] sm:$0xf]
  %v22 = vld [vmem:[%s0 + $0x20] sm:$0xf]
  %v23 = vld [vmem:[%s0 + $0x24] sm:$0xf]
  %v24 = vld [vmem:[%s0 + $0x28] sm:$0xf]
  %v25 = vld [vmem:[%s0 + $0x2c] sm:$0xf]
  %v26 = vld [vmem:[%s0 + $0x30] sm:$0xf]
  %v27 = vld [vmem:[%s0 + $0x34] sm:$0xf]
  %v28 = vld [vmem:[%s0 + $0x38] sm:$0xf]
  %v29 = vld [vmem:[%s0 + $0x3c] sm:$0xf]
  %v30 = vunpack.c.l.bf16 %v14
  %v31 = vunpack.c.l.bf16 %v15
  %v32 = vunpack.c.l.bf16 %v16
  %v33 = vunpack.c.l.bf16 %v17
  %v34 = vunpack.c.l.bf16 %v18
  %v35 = vunpack.c.l.bf16 %v19
  %v36 = vunpack.c.l.bf16 %v20
  %v37 = vunpack.c.l.bf16 %v21
  %v38 = vunpack.c.l.bf16 %v22
  %v39 = vunpack.c.l.bf16 %v23
  %v40 = vunpack.c.l.bf16 %v24
  %v41 = vunpack.c.l.bf16 %v25
  %v42 = vunpack.c.l.bf16 %v26
  %v43 = vunpack.c.l.bf16 %v27
  %v44 = vunpack.c.l.bf16 %v28
  %v45 = vunpack.c.l.bf16 %v29
  %v46 = vld [vmem:[%s1] sm:$0x1]
  %v48 = vlaneseq
  %v49 = vshrl.u32 %v48, 7
  %v50 = vsub.s32 0, %v49
  %v51 = vrot.slane %v46, %v50
  %v53 = vmul.f32 %v30, %v51
  %v54 = vmul.f32 %v31, %v51
  %v55 = vmul.f32 %v32, %v51
  %v56 = vmul.f32 %v33, %v51
  %v57 = vmul.f32 %v34, %v51
  %v58 = vmul.f32 %v35, %v51
  %v59 = vmul.f32 %v36, %v51
  %v60 = vmul.f32 %v37, %v51
  %v61 = vmul.f32 %v38, %v51
  %v62 = vmul.f32 %v39, %v51
  %v63 = vmul.f32 %v40, %v51
  %v64 = vmul.f32 %v41, %v51
  %v65 = vmul.f32 %v42, %v51
  %v66 = vmul.f32 %v43, %v51
  %v67 = vmul.f32 %v44, %v51
  %v68 = vmul.f32 %v45, %v51
  %v69 = vld [vmem:[%s2] sm:$0x1]
  %v71 = vlaneseq
  %v72 = vshrl.u32 %v71, 7
  %v73 = vsub.s32 0, %v72
  %v74 = vrot.slane %v69, %v73
  %v76 = vadd.f32 %v53, %v74
  %v77 = vadd.f32 %v54, %v74
  %v78 = vadd.f32 %v55, %v74
  %v79 = vadd.f32 %v56, %v74
  %v80 = vadd.f32 %v57, %v74
  %v81 = vadd.f32 %v58, %v74
  %v82 = vadd.f32 %v59, %v74
  %v83 = vadd.f32 %v60, %v74
  %v84 = vadd.f32 %v61, %v74
  %v85 = vadd.f32 %v62, %v74
  %v86 = vadd.f32 %v63, %v74
  %v87 = vadd.f32 %v64, %v74
  %v88 = vadd.f32 %v65, %v74
  %v89 = vadd.f32 %v66, %v74
  %v90 = vadd.f32 %v67, %v74
  %v91 = vadd.f32 %v68, %v74
  %v92 = vmax.f32 %v76, 0.0
  %v93 = vmax.f32 %v77, 0.0
  %v94 = vmax.f32 %v78, 0.0
  %v95 = vmax.f32 %v79, 0.0
  %v96 = vmax.f32 %v80, 0.0
  %v97 = vmax.f32 %v81, 0.0
  %v98 = vmax.f32 %v82, 0.0
  %v99 = vmax.f32 %v83, 0.0
  %v100 = vmax.f32 %v84, 0.0
  %v101 = vmax.f32 %v85, 0.0
  %v102 = vmax.f32 %v86, 0.0
  %v103 = vmax.f32 %v87, 0.0
  %v104 = vmax.f32 %v88, 0.0
  %v105 = vmax.f32 %v89, 0.0
  %v106 = vmax.f32 %v90, 0.0
  %v107 = vmax.f32 %v91, 0.0
  %v108 = vpack.c.bf16 %v93, %v92
  %v109 = vpack.c.bf16 %v95, %v94
  %v110 = vpack.c.bf16 %v97, %v96
  %v111 = vpack.c.bf16 %v99, %v98
  %v112 = vpack.c.bf16 %v101, %v100
  %v113 = vpack.c.bf16 %v103, %v102
  %v114 = vpack.c.bf16 %v105, %v104
  %v115 = vpack.c.bf16 %v107, %v106
  %v124 = vunpack.c.l.b16 %v108
  %v125 = vunpack.c.h.b16 %v108
  %v126 = vunpack.c.l.b16 %v109
  %v127 = vunpack.c.h.b16 %v109
  %v128 = vunpack.c.l.b16 %v110
  %v129 = vunpack.c.h.b16 %v110
  %v130 = vunpack.c.l.b16 %v111
  %v131 = vunpack.c.h.b16 %v111
  %v132 = vunpack.c.l.b16 %v112
  %v133 = vunpack.c.h.b16 %v112
  %v134 = vunpack.c.l.b16 %v113
  %v135 = vunpack.c.h.b16 %v113
  %v136 = vunpack.c.l.b16 %v114
  %v137 = vunpack.c.h.b16 %v114
  %v138 = vunpack.c.l.b16 %v115
  %v139 = vunpack.c.h.b16 %v115
  %v140 = vpack.c.b16 %v124, %v124
  %v141 = vpack.c.b16 %v125, %v125
  %v142 = vpack.c.b16 %v126, %v126
  %v143 = vpack.c.b16 %v127, %v127
  %v144 = vpack.c.b16 %v128, %v128
  %v145 = vpack.c.b16 %v129, %v129
  %v146 = vpack.c.b16 %v130, %v130
  %v147 = vpack.c.b16 %v131, %v131
  %v148 = vpack.c.b16 %v132, %v132
  %v149 = vpack.c.b16 %v133, %v133
  %v150 = vpack.c.b16 %v134, %v134
  %v151 = vpack.c.b16 %v135, %v135
  %v152 = vpack.c.b16 %v136, %v136
  %v153 = vpack.c.b16 %v137, %v137
  %v154 = vpack.c.b16 %v138, %v138
  %v155 = vpack.c.b16 %v139, %v139
  %172 = vst [vmem:[%s3] sm:$0xf] %v140
  %173 = vst [vmem:[%s3 + $0x4] sm:$0xf] %v141
  %174 = vst [vmem:[%s3 + $0x8] sm:$0xf] %v142
  %175 = vst [vmem:[%s3 + $0xc] sm:$0xf] %v143
  %176 = vst [vmem:[%s3 + $0x10] sm:$0xf] %v144
  %177 = vst [vmem:[%s3 + $0x14] sm:$0xf] %v145
  %178 = vst [vmem:[%s3 + $0x18] sm:$0xf] %v146
  %179 = vst [vmem:[%s3 + $0x1c] sm:$0xf] %v147
  %180 = vst [vmem:[%s3 + $0x20] sm:$0xf] %v148
  %181 = vst [vmem:[%s3 + $0x24] sm:$0xf] %v149
  %182 = vst [vmem:[%s3 + $0x28] sm:$0xf] %v150
  %183 = vst [vmem:[%s3 + $0x2c] sm:$0xf] %v151
  %184 = vst [vmem:[%s3 + $0x30] sm:$0xf] %v152
  %185 = vst [vmem:[%s3 + $0x34] sm:$0xf] %v153
  %186 = vst [vmem:[%s3 + $0x38] sm:$0xf] %v154
  %187 = vst [vmem:[%s3 + $0x3c] sm:$0xf] %v155
  // Predicated region
  $region14: #{bottleneck_forward.7} parent=0 // pred_check
    _
  $region15: #{bottleneck_forward.7} parent=0 // pred_check_branch
    %189 = sbr.rel (0) target = $region17
  $region16: #{bottleneck_forward.7} parent=0 // pred_region
    _
  $region17: #{bottleneck_forward.7} parent=0 // pred_fallthru
    _
  // Predicated region
  $region18: #{bottleneck_forward.7} parent=0 // pred_check
    _
  $region19: #{bottleneck_forward.7} parent=0 // pred_check_branch
    %191 = sbr.rel (0) target = $region21
  $region20: #{bottleneck_forward.7} parent=0 // pred_region
    _
  $region21: #{bottleneck_forward.7} parent=0 // pred_fallthru
    _

// kernel: bottleneck_forward.6
$region0: #{bottleneck_forward.6}
  #allocation0 [shape = 'u32[]', space=smem, size = 0x4, offset = 0x4, fixed_abs, tag = 'smem constant byte address 0x4 - core index']
  #allocation1 [shape = 'u32[144,128]{1,0:T(1,128)}', space=vmem, size = 0x12000, scoped, tag = 'internal scratch']
  %s0 = inlined_call_operand.vmem [shape: bf16[128,128], index: 0, kind: input, shape index: {}]
  %s1 = inlined_call_operand.vmem [shape: bf16[128,128], index: 1, kind: input, shape index: {}]
  %s2 = inlined_call_operand.vmem [shape: bf16[128,128], index: 2, kind: output, shape index: {0}]
  %s3 = inlined_call_operand.vmem [shape: f32[2,128], index: 3, kind: output, shape index: {1}]
  %4 = xla_tuple %s2, %s3
  %s5 = sld [smem:[#allocation0]]
  $region30: #{bottleneck_forward.6} parent=0
    _
  %s7 = ssub.s32 1, %s5
  %s8 = scalar_select 0, %s7, %s5
  // Predicated region
  $region2: #{bottleneck_forward.6} parent=0 // pred_check
    _
  $region3: #{bottleneck_forward.6} parent=0 // pred_check_branch
    %10 = sbr.rel (0) target = $region5
  $region4: #{bottleneck_forward.6} parent=0 // pred_region
    _
  $region5: #{bottleneck_forward.6} parent=0 // pred_fallthru
    _
  // Predicated region
  $region6: #{bottleneck_forward.6} parent=0 // pred_check
    _
  $region7: #{bottleneck_forward.6} parent=0 // pred_check_branch
    %12 = sbr.rel (0) target = $region9
  $region8: #{bottleneck_forward.6} parent=0 // pred_region
    _
  $region9: #{bottleneck_forward.6} parent=0 // pred_fallthru
    _
  %p14 = scmp.eq.s32.totalorder 0, 0
  // Predicated region
  $region10: #{bottleneck_forward.6} parent=0 // pred_check
    %p15 = pneg %p14
  $region11: #{bottleneck_forward.6} parent=0 // pred_check_branch
    %17 = sbr.rel (%p15) target = $region13
  $region12: #{bottleneck_forward.6} parent=0 // pred_region
    %18 = vst [vmem:[%s3] sm:$0x3] 0.0
  $region13: #{bottleneck_forward.6} parent=0 // pred_fallthru
    _
  %v19 = vld [vmem:[%s0] sm:$0xf]
  %v20 = vld [vmem:[%s0 + $0x4] sm:$0xf]
  %v21 = vld [vmem:[%s0 + $0x8] sm:$0xf]
  %v22 = vld [vmem:[%s0 + $0xc] sm:$0xf]
  %v23 = vld [vmem:[%s0 + $0x10] sm:$0xf]
  %v24 = vld [vmem:[%s0 + $0x14] sm:$0xf]
  %v25 = vld [vmem:[%s0 + $0x18] sm:$0xf]
  %v26 = vld [vmem:[%s0 + $0x1c] sm:$0xf]
  %v27 = vld [vmem:[%s0 + $0x20] sm:$0xf]
  %v28 = vld [vmem:[%s0 + $0x24] sm:$0xf]
  %v29 = vld [vmem:[%s0 + $0x28] sm:$0xf]
  %v30 = vld [vmem:[%s0 + $0x2c] sm:$0xf]
  %v31 = vld [vmem:[%s0 + $0x30] sm:$0xf]
  %v32 = vld [vmem:[%s0 + $0x34] sm:$0xf]
  %v33 = vld [vmem:[%s0 + $0x38] sm:$0xf]
  %v34 = vld [vmem:[%s0 + $0x3c] sm:$0xf]
  %v35 = vld [vmem:[%s1] sm:$0xf]
  %v36 = vld [vmem:[%s1 + $0x4] sm:$0xf]
  %v37 = vld [vmem:[%s1 + $0x8] sm:$0xf]
  %v38 = vld [vmem:[%s1 + $0xc] sm:$0xf]
  %v39 = vld [vmem:[%s1 + $0x10] sm:$0xf]
  %v40 = vld [vmem:[%s1 + $0x14] sm:$0xf]
  %v41 = vld [vmem:[%s1 + $0x18] sm:$0xf]
  %v42 = vld [vmem:[%s1 + $0x1c] sm:$0xf]
  %v43 = vld [vmem:[%s1 + $0x20] sm:$0xf]
  %v44 = vld [vmem:[%s1 + $0x24] sm:$0xf]
  %v45 = vld [vmem:[%s1 + $0x28] sm:$0xf]
  %v46 = vld [vmem:[%s1 + $0x2c] sm:$0xf]
  %v47 = vld [vmem:[%s1 + $0x30] sm:$0xf]
  %v48 = vld [vmem:[%s1 + $0x34] sm:$0xf]
  %v49 = vld [vmem:[%s1 + $0x38] sm:$0xf]
  %v50 = vld [vmem:[%s1 + $0x3c] sm:$0xf]
  %v67 = vunpack.c.l.b16 %v19
  %v68 = vunpack.c.l.b16 %v20
  %v69 = vunpack.c.l.b16 %v21
  %v70 = vunpack.c.l.b16 %v22
  %v71 = vunpack.c.l.b16 %v23
  %v72 = vunpack.c.l.b16 %v24
  %v73 = vunpack.c.l.b16 %v25
  %v74 = vunpack.c.l.b16 %v26
  %v75 = vunpack.c.l.b16 %v27
  %v76 = vunpack.c.l.b16 %v28
  %v77 = vunpack.c.l.b16 %v29
  %v78 = vunpack.c.l.b16 %v30
  %v79 = vunpack.c.l.b16 %v31
  %v80 = vunpack.c.l.b16 %v32
  %v81 = vunpack.c.l.b16 %v33
  %v82 = vunpack.c.l.b16 %v34
  %v83 = vpack.c.b16 %v68, %v67
  %v84 = vpack.c.b16 %v70, %v69
  %v85 = vpack.c.b16 %v72, %v71
  %v86 = vpack.c.b16 %v74, %v73
  %v87 = vpack.c.b16 %v76, %v75
  %v88 = vpack.c.b16 %v78, %v77
  %v89 = vpack.c.b16 %v80, %v79
  %v90 = vpack.c.b16 %v82, %v81
  %v115 = vunpack.c.l.b16 %v35
  %v116 = vunpack.c.l.b16 %v36
  %v117 = vunpack.c.l.b16 %v37
  %v118 = vunpack.c.l.b16 %v38
  %v119 = vunpack.c.l.b16 %v39
  %v120 = vunpack.c.l.b16 %v40
  %v121 = vunpack.c.l.b16 %v41
  %v122 = vunpack.c.l.b16 %v42
  %v123 = vunpack.c.l.b16 %v43
  %v124 = vunpack.c.l.b16 %v44
  %v125 = vunpack.c.l.b16 %v45
  %v126 = vunpack.c.l.b16 %v46
  %v127 = vunpack.c.l.b16 %v47
  %v128 = vunpack.c.l.b16 %v48
  %v129 = vunpack.c.l.b16 %v49
  %v130 = vunpack.c.l.b16 %v50
  %v131 = vpack.c.b16 %v116, %v115
  %v132 = vpack.c.b16 %v118, %v117
  %v133 = vpack.c.b16 %v120, %v119
  %v134 = vpack.c.b16 %v122, %v121
  %v135 = vpack.c.b16 %v124, %v123
  %v136 = vpack.c.b16 %v126, %v125
  %v137 = vpack.c.b16 %v128, %v127
  %v138 = vpack.c.b16 %v130, %v129
  %147 = vmatprep.subr.bf16.mxu0 0
  %148 = vmatpush1.bf16.msra.mxu0 %v138
  %149 = vmatprep.subr.bf16.mxu0 0
  %150 = vmatpush1.bf16.msra.mxu0 %v137
  %151 = vmatprep.subr.bf16.mxu0 0
  %152 = vmatpush1.bf16.msra.mxu0 %v136
  %153 = vmatprep.subr.bf16.mxu0 0
  %154 = vmatpush1.bf16.msra.mxu0 %v135
  %155 = vmatprep.subr.bf16.mxu0 0
  %156 = vmatpush1.bf16.msra.mxu0 %v134
  %157 = vmatprep.subr.bf16.mxu0 0
  %158 = vmatpush1.bf16.msra.mxu0 %v133
  %159 = vmatprep.subr.bf16.mxu0 0
  %160 = vmatpush1.bf16.msra.mxu0 %v132
  %161 = vmatprep.subr.bf16.mxu0 0
  %162 = vmatpush1.bf16.msra.mxu0 %v131
  %163 = vmatprep.subr.bf16.mxu0 0
  %164 = vmatpush2.bf16.msra.mxu0 0
  %165 = vmatprep.subr.bf16.mxu0 0
  %166 = vmatpush2.bf16.msra.mxu0 0
  %167 = vmatprep.subr.bf16.mxu0 0
  %168 = vmatpush2.bf16.msra.mxu0 0
  %169 = vmatprep.subr.bf16.mxu0 0
  %170 = vmatpush2.bf16.msra.mxu0 0
  %171 = vmatprep.subr.bf16.mxu0 0
  %172 = vmatpush2.bf16.msra.mxu0 0
  %173 = vmatprep.subr.bf16.mxu0 0
  %174 = vmatpush2.bf16.msra.mxu0 0
  %175 = vmatprep.subr.bf16.mxu0 0
  %176 = vmatpush2.bf16.msra.mxu0 0
  %177 = vmatprep.subr.bf16.mxu0 0
  %178 = vmatpush2.bf16.msra.mxu0 0
  %179 = vmatprep.mubr.bf16.mxu0 0
  %180 = vmatmul.mubr.bf16.gmra.mxu0 %v83
  %v181 = vpop.f32.mrf.mxu0
  %v182 = vadd.f32 0.0, %v181
  %v183 = vpop.f32.mrf.mxu0
  %v184 = vpop.f32.mrf.mxu0
  %v185 = vadd.f32 0.0, %v184
  %v186 = vpop.f32.mrf.mxu0
  %187 = vmatprep.mubr.bf16.mxu0 0
  %188 = vmatmul.mubr.bf16.gmra.mxu0 %v84
  %v189 = vpop.f32.mrf.mxu0
  %v190 = vadd.f32 0.0, %v189
  %v191 = vpop.f32.mrf.mxu0
  %v192 = vpop.f32.mrf.mxu0
  %v193 = vadd.f32 0.0, %v192
  %v194 = vpop.f32.mrf.mxu0
  %195 = vmatprep.mubr.bf16.mxu0 0
  %196 = vmatmul.mubr.bf16.gmra.mxu0 %v85
  %v197 = vpop.f32.mrf.mxu0
  %v198 = vadd.f32 0.0, %v197
  %v199 = vpop.f32.mrf.mxu0
  %v200 = vpop.f32.mrf.mxu0
  %v201 = vadd.f32 0.0, %v200
  %v202 = vpop.f32.mrf.mxu0
  %203 = vmatprep.mubr.bf16.mxu0 0
  %204 = vmatmul.mubr.bf16.gmra.mxu0 %v86
  %v205 = vpop.f32.mrf.mxu0
  %v206 = vadd.f32 0.0, %v205
  %v207 = vpop.f32.mrf.mxu0
  %v208 = vpop.f32.mrf.mxu0
  %v209 = vadd.f32 0.0, %v208
  %v210 = vpop.f32.mrf.mxu0
  %211 = vmatprep.mubr.bf16.mxu0 0
  %212 = vmatmul.mubr.bf16.gmra.mxu0 %v87
  %v213 = vpop.f32.mrf.mxu0
  %v214 = vadd.f32 0.0, %v213
  %v215 = vpop.f32.mrf.mxu0
  %v216 = vpop.f32.mrf.mxu0
  %v217 = vadd.f32 0.0, %v216
  %v218 = vpop.f32.mrf.mxu0
  %219 = vmatprep.mubr.bf16.mxu0 0
  %220 = vmatmul.mubr.bf16.gmra.mxu0 %v88
  %v221 = vpop.f32.mrf.mxu0
  %v222 = vadd.f32 0.0, %v221
  %v223 = vpop.f32.mrf.mxu0
  %v224 = vpop.f32.mrf.mxu0
  %v225 = vadd.f32 0.0, %v224
  %v226 = vpop.f32.mrf.mxu0
  %227 = vmatprep.mubr.bf16.mxu0 0
  %228 = vmatmul.mubr.bf16.gmra.mxu0 %v89
  %v229 = vpop.f32.mrf.mxu0
  %v230 = vadd.f32 0.0, %v229
  %v231 = vpop.f32.mrf.mxu0
  %v232 = vpop.f32.mrf.mxu0
  %v233 = vadd.f32 0.0, %v232
  %v234 = vpop.f32.mrf.mxu0
  %235 = vmatprep.mubr.bf16.mxu0 0
  %236 = vmatmul.mubr.bf16.gmra.mxu0 %v90
  %v237 = vpop.f32.mrf.mxu0
  %v238 = vadd.f32 0.0, %v237
  %v239 = vpop.f32.mrf.mxu0
  %v240 = vpop.f32.mrf.mxu0
  %v241 = vadd.f32 0.0, %v240
  %v242 = vpop.f32.mrf.mxu0
  %243 = vdwg.mxu0
  %v244 = vpack.c.bf16 %v185, %v182
  %v245 = vpack.c.bf16 %v193, %v190
  %v246 = vpack.c.bf16 %v201, %v198
  %v247 = vpack.c.bf16 %v209, %v206
  %v248 = vpack.c.bf16 %v217, %v214
  %v249 = vpack.c.bf16 %v225, %v222
  %v250 = vpack.c.bf16 %v233, %v230
  %v251 = vpack.c.bf16 %v241, %v238
  %v260 = vunpack.c.l.b16 %v244
  %v261 = vunpack.c.h.b16 %v244
  %v262 = vunpack.c.l.b16 %v245
  %v263 = vunpack.c.h.b16 %v245
  %v264 = vunpack.c.l.b16 %v246
  %v265 = vunpack.c.h.b16 %v246
  %v266 = vunpack.c.l.b16 %v247
  %v267 = vunpack.c.h.b16 %v247
  %v268 = vunpack.c.l.b16 %v248
  %v269 = vunpack.c.h.b16 %v248
  %v270 = vunpack.c.l.b16 %v249
  %v271 = vunpack.c.h.b16 %v249
  %v272 = vunpack.c.l.b16 %v250
  %v273 = vunpack.c.h.b16 %v250
  %v274 = vunpack.c.l.b16 %v251
  %v275 = vunpack.c.h.b16 %v251
  %v276 = vpack.c.b16 %v260, %v260
  %v277 = vpack.c.b16 %v261, %v261
  %v278 = vpack.c.b16 %v262, %v262
  %v279 = vpack.c.b16 %v263, %v263
  %v280 = vpack.c.b16 %v264, %v264
  %v281 = vpack.c.b16 %v265, %v265
  %v282 = vpack.c.b16 %v266, %v266
  %v283 = vpack.c.b16 %v267, %v267
  %v284 = vpack.c.b16 %v268, %v268
  %v285 = vpack.c.b16 %v269, %v269
  %v286 = vpack.c.b16 %v270, %v270
  %v287 = vpack.c.b16 %v271, %v271
  %v288 = vpack.c.b16 %v272, %v272
  %v289 = vpack.c.b16 %v273, %v273
  %v290 = vpack.c.b16 %v274, %v274
  %v291 = vpack.c.b16 %v275, %v275
  %308 = vst [vmem:[%s2] sm:$0xf] %v276
  %309 = vst [vmem:[%s2 + $0x4] sm:$0xf] %v277
  %310 = vst [vmem:[%s2 + $0x8] sm:$0xf] %v278
  %311 = vst [vmem:[%s2 + $0xc] sm:$0xf] %v279
  %312 = vst [vmem:[%s2 + $0x10] sm:$0xf] %v280
  %313 = vst [vmem:[%s2 + $0x14] sm:$0xf] %v281
  %314 = vst [vmem:[%s2 + $0x18] sm:$0xf] %v282
  %315 = vst [vmem:[%s2 + $0x1c] sm:$0xf] %v283
  %316 = vst [vmem:[%s2 + $0x20] sm:$0xf] %v284
  %317 = vst [vmem:[%s2 + $0x24] sm:$0xf] %v285
  %318 = vst [vmem:[%s2 + $0x28] sm:$0xf] %v286
  %319 = vst [vmem:[%s2 + $0x2c] sm:$0xf] %v287
  %320 = vst [vmem:[%s2 + $0x30] sm:$0xf] %v288
  %321 = vst [vmem:[%s2 + $0x34] sm:$0xf] %v289
  %322 = vst [vmem:[%s2 + $0x38] sm:$0xf] %v290
  %323 = vst [vmem:[%s2 + $0x3c] sm:$0xf] %v291
  %v324 = vld [vmem:[%s3] sm:$0x1]
  %v325 = vadd.f32 %v182, %v185
  %v326 = vadd.f32 %v325, %v190
  %v327 = vadd.f32 %v326, %v193
  %v328 = vadd.f32 %v327, %v198
  %v329 = vadd.f32 %v328, %v201
  %v330 = vadd.f32 %v329, %v206
  %v331 = vadd.f32 %v330, %v209
  %v332 = vadd.f32 %v331, %v214
  %v333 = vadd.f32 %v332, %v217
  %v334 = vadd.f32 %v333, %v222
  %v335 = vadd.f32 %v334, %v225
  %v336 = vadd.f32 %v335, %v230
  %v337 = vadd.f32 %v336, %v233
  %v338 = vadd.f32 %v337, %v238
  %v339 = vadd.f32 %v338, %v241
  %v340 = vrot.slane %v339, 4
  %v341 = vadd.f32 %v339, %v340
  %v342 = vrot.slane %v341, 2
  %v343 = vadd.f32 %v341, %v342
  %v344 = vrot.slane %v343, 1
  %v345 = vadd.f32 %v343, %v344
  %v346 = vadd.f32 %v324, %v345
  %347 = vst [vmem:[%s3] sm:$0x1] %v346
  %v348 = vld [vmem:[%s3 + $0x1] sm:$0x1]
  %v349 = vmul.f32 %v182, %v182
  %v350 = vmul.f32 %v185, %v185
  %v351 = vmul.f32 %v190, %v190
  %v352 = vmul.f32 %v193, %v193
  %v353 = vmul.f32 %v198, %v198
  %v354 = vmul.f32 %v201, %v201
  %v355 = vmul.f32 %v206, %v206
  %v356 = vmul.f32 %v209, %v209
  %v357 = vmul.f32 %v214, %v214
  %v358 = vmul.f32 %v217, %v217
  %v359 = vmul.f32 %v222, %v222
  %v360 = vmul.f32 %v225, %v225
  %v361 = vmul.f32 %v230, %v230
  %v362 = vmul.f32 %v233, %v233
  %v363 = vmul.f32 %v238, %v238
  %v364 = vmul.f32 %v241, %v241
  %v365 = vadd.f32 %v349, %v350
  %v366 = vadd.f32 %v365, %v351
  %v367 = vadd.f32 %v366, %v352
  %v368 = vadd.f32 %v367, %v353
  %v369 = vadd.f32 %v368, %v354
  %v370 = vadd.f32 %v369, %v355
  %v371 = vadd.f32 %v370, %v356
  %v372 = vadd.f32 %v371, %v357
  %v373 = vadd.f32 %v372, %v358
  %v374 = vadd.f32 %v373, %v359
  %v375 = vadd.f32 %v374, %v360
  %v376 = vadd.f32 %v375, %v361
  %v377 = vadd.f32 %v376, %v362
  %v378 = vadd.f32 %v377, %v363
  %v379 = vadd.f32 %v378, %v364
  %v380 = vrot.slane %v379, 4
  %v381 = vadd.f32 %v379, %v380
  %v382 = vrot.slane %v381, 2
  %v383 = vadd.f32 %v381, %v382
  %v384 = vrot.slane %v383, 1
  %v385 = vadd.f32 %v383, %v384
  %v386 = vadd.f32 %v348, %v385
  %387 = vst [vmem:[%s3 + $0x1] sm:$0x1] %v386
  // Predicated region
  $region14: #{bottleneck_forward.6} parent=0 // pred_check
    _
  $region15: #{bottleneck_forward.6} parent=0 // pred_check_branch
    %389 = sbr.rel (0) target = $region17
  $region16: #{bottleneck_forward.6} parent=0 // pred_region
    _
  $region17: #{bottleneck_forward.6} parent=0 // pred_fallthru
    _
  // Predicated region
  $region18: #{bottleneck_forward.6} parent=0 // pred_check
    _
  $region19: #{bottleneck_forward.6} parent=0 // pred_check_branch
    %391 = sbr.rel (0) target = $region21
  $region20: #{bottleneck_forward.6} parent=0 // pred_region
    _
  $region21: #{bottleneck_forward.6} parent=0 // pred_fallthru
    _
  // Predicated region
  $region22: #{bottleneck_forward.6} parent=0 // pred_check
    _
  $region23: #{bottleneck_forward.6} parent=0 // pred_check_branch
    %393 = sbr.rel (0) target = $region25
  $region24: #{bottleneck_forward.6} parent=0 // pred_region
    _
  $region25: #{bottleneck_forward.6} parent=0 // pred_fallthru
    _
  // Predicated region
  $region26: #{bottleneck_forward.6} parent=0 // pred_check
    _
  $region27: #{bottleneck_forward.6} parent=0 // pred_check_branch
    %395 = sbr.rel (0) target = $region29
  $region28: #{bottleneck_forward.6} parent=0 // pred_region
    _
  $region29: #{bottleneck_forward.6} parent=0 // pred_fallthru
    _

// kernel: bottleneck_forward.10
$region0: #{bottleneck_forward.10}
  #allocation0 [shape = 'u32[]', space=smem, size = 0x4, offset = 0x4, fixed_abs, tag = 'smem constant byte address 0x4 - core index']
  #allocation1 [shape = 'u32[144,128]{1,0:T(1,128)}', space=vmem, size = 0x12000, scoped, tag = 'internal scratch']
  %s0 = inlined_call_operand.vmem [shape: bf16[32,128], index: 0, kind: input, shape index: {}]
  %s1 = inlined_call_operand.vmem [shape: bf16[128,128], index: 1, kind: input, shape index: {}]
  %s2 = inlined_call_operand.vmem [shape: bf16[32,128], index: 2, kind: output, shape index: {0}]
  %s3 = inlined_call_operand.vmem [shape: f32[2,128], index: 3, kind: output, shape index: {1}]
  %4 = xla_tuple %s2, %s3
  %s5 = sld [smem:[#allocation0]]
  $region30: #{bottleneck_forward.10} parent=0
    _
  %s7 = ssub.s32 1, %s5
  %s8 = scalar_select 0, %s7, %s5
  // Predicated region
  $region2: #{bottleneck_forward.10} parent=0 // pred_check
    _
  $region3: #{bottleneck_forward.10} parent=0 // pred_check_branch
    %10 = sbr.rel (0) target = $region5
  $region4: #{bottleneck_forward.10} parent=0 // pred_region
    _
  $region5: #{bottleneck_forward.10} parent=0 // pred_fallthru
    _
  // Predicated region
  $region6: #{bottleneck_forward.10} parent=0 // pred_check
    _
  $region7: #{bottleneck_forward.10} parent=0 // pred_check_branch
    %12 = sbr.rel (0) target = $region9
  $region8: #{bottleneck_forward.10} parent=0 // pred_region
    _
  $region9: #{bottleneck_forward.10} parent=0 // pred_fallthru
    _
  %p14 = scmp.eq.s32.totalorder 0, 0
  // Predicated region
  $region10: #{bottleneck_forward.10} parent=0 // pred_check
    %p15 = pneg %p14
  $region11: #{bottleneck_forward.10} parent=0 // pred_check_branch
    %17 = sbr.rel (%p15) target = $region13
  $region12: #{bottleneck_forward.10} parent=0 // pred_region
    %18 = vst [vmem:[%s3] sm:$0x3] 0.0
  $region13: #{bottleneck_forward.10} parent=0 // pred_fallthru
    _
  %v19 = vld [vmem:[%s0] sm:$0xf]
  %v20 = vld [vmem:[%s0 + $0x4] sm:$0xf]
  %v21 = vld [vmem:[%s0 + $0x8] sm:$0xf]
  %v22 = vld [vmem:[%s0 + $0xc] sm:$0xf]
  %v23 = vld [vmem:[%s1] sm:$0xf]
  %v24 = vld [vmem:[%s1 + $0x4] sm:$0xf]
  %v25 = vld [vmem:[%s1 + $0x8] sm:$0xf]
  %v26 = vld [vmem:[%s1 + $0xc] sm:$0xf]
  %v27 = vld [vmem:[%s1 + $0x10] sm:$0xf]
  %v28 = vld [vmem:[%s1 + $0x14] sm:$0xf]
  %v29 = vld [vmem:[%s1 + $0x18] sm:$0xf]
  %v30 = vld [vmem:[%s1 + $0x1c] sm:$0xf]
  %v31 = vld [vmem:[%s1 + $0x20] sm:$0xf]
  %v32 = vld [vmem:[%s1 + $0x24] sm:$0xf]
  %v33 = vld [vmem:[%s1 + $0x28] sm:$0xf]
  %v34 = vld [vmem:[%s1 + $0x2c] sm:$0xf]
  %v35 = vld [vmem:[%s1 + $0x30] sm:$0xf]
  %v36 = vld [vmem:[%s1 + $0x34] sm:$0xf]
  %v37 = vld [vmem:[%s1 + $0x38] sm:$0xf]
  %v38 = vld [vmem:[%s1 + $0x3c] sm:$0xf]
  %v43 = vunpack.c.l.b16 %v19
  %v44 = vunpack.c.l.b16 %v20
  %v45 = vunpack.c.l.b16 %v21
  %v46 = vunpack.c.l.b16 %v22
  %v47 = vpack.c.b16 %v44, %v43
  %v48 = vpack.c.b16 %v46, %v45
  %v67 = vunpack.c.l.b16 %v23
  %v68 = vunpack.c.l.b16 %v24
  %v69 = vunpack.c.l.b16 %v25
  %v70 = vunpack.c.l.b16 %v26
  %v71 = vunpack.c.l.b16 %v27
  %v72 = vunpack.c.l.b16 %v28
  %v73 = vunpack.c.l.b16 %v29
  %v74 = vunpack.c.l.b16 %v30
  %v75 = vunpack.c.l.b16 %v31
  %v76 = vunpack.c.l.b16 %v32
  %v77 = vunpack.c.l.b16 %v33
  %v78 = vunpack.c.l.b16 %v34
  %v79 = vunpack.c.l.b16 %v35
  %v80 = vunpack.c.l.b16 %v36
  %v81 = vunpack.c.l.b16 %v37
  %v82 = vunpack.c.l.b16 %v38
  %v83 = vpack.c.b16 %v68, %v67
  %v84 = vpack.c.b16 %v70, %v69
  %v85 = vpack.c.b16 %v72, %v71
  %v86 = vpack.c.b16 %v74, %v73
  %v87 = vpack.c.b16 %v76, %v75
  %v88 = vpack.c.b16 %v78, %v77
  %v89 = vpack.c.b16 %v80, %v79
  %v90 = vpack.c.b16 %v82, %v81
  %99 = vmatprep.subr.bf16.mxu0 0
  %100 = vmatpush1.bf16.msra.mxu0 %v90
  %101 = vmatprep.subr.bf16.mxu0 0
  %102 = vmatpush1.bf16.msra.mxu0 %v89
  %103 = vmatprep.subr.bf16.mxu0 0
  %104 = vmatpush1.bf16.msra.mxu0 %v88
  %105 = vmatprep.subr.bf16.mxu0 0
  %106 = vmatpush1.bf16.msra.mxu0 %v87
  %107 = vmatprep.subr.bf16.mxu0 0
  %108 = vmatpush1.bf16.msra.mxu0 %v86
  %109 = vmatprep.subr.bf16.mxu0 0
  %110 = vmatpush1.bf16.msra.mxu0 %v85
  %111 = vmatprep.subr.bf16.mxu0 0
  %112 = vmatpush1.bf16.msra.mxu0 %v84
  %113 = vmatprep.subr.bf16.mxu0 0
  %114 = vmatpush1.bf16.msra.mxu0 %v83
  %115 = vmatprep.subr.bf16.mxu0 0
  %116 = vmatpush2.bf16.msra.mxu0 0
  %117 = vmatprep.subr.bf16.mxu0 0
  %118 = vmatpush2.bf16.msra.mxu0 0
  %119 = vmatprep.subr.bf16.mxu0 0
  %120 = vmatpush2.bf16.msra.mxu0 0
  %121 = vmatprep.subr.bf16.mxu0 0
  %122 = vmatpush2.bf16.msra.mxu0 0
  %123 = vmatprep.subr.bf16.mxu0 0
  %124 = vmatpush2.bf16.msra.mxu0 0
  %125 = vmatprep.subr.bf16.mxu0 0
  %126 = vmatpush2.bf16.msra.mxu0 0
  %127 = vmatprep.subr.bf16.mxu0 0
  %128 = vmatpush2.bf16.msra.mxu0 0
  %129 = vmatprep.subr.bf16.mxu0 0
  %130 = vmatpush2.bf16.msra.mxu0 0
  %131 = vmatprep.mubr.bf16.mxu0 0
  %132 = vmatmul.mubr.bf16.gmra.mxu0 %v47
  %v133 = vpop.f32.mrf.mxu0
  %v134 = vadd.f32 0.0, %v133
  %v135 = vpop.f32.mrf.mxu0
  %v136 = vpop.f32.mrf.mxu0
  %v137 = vadd.f32 0.0, %v136
  %v138 = vpop.f32.mrf.mxu0
  %139 = vmatprep.mubr.bf16.mxu0 0
  %140 = vmatmul.mubr.bf16.gmra.mxu0 %v48
  %v141 = vpop.f32.mrf.mxu0
  %v142 = vadd.f32 0.0, %v141
  %v143 = vpop.f32.mrf.mxu0
  %v144 = vpop.f32.mrf.mxu0
  %v145 = vadd.f32 0.0, %v144
  %v146 = vpop.f32.mrf.mxu0
  %147 = vdwg.mxu0
  %v148 = vpack.c.bf16 %v137, %v134
  %v149 = vpack.c.bf16 %v145, %v142
  %v152 = vunpack.c.l.b16 %v148
  %v153 = vunpack.c.h.b16 %v148
  %v154 = vunpack.c.l.b16 %v149
  %v155 = vunpack.c.h.b16 %v149
  %v156 = vpack.c.b16 %v152, %v152
  %v157 = vpack.c.b16 %v153, %v153
  %v158 = vpack.c.b16 %v154, %v154
  %v159 = vpack.c.b16 %v155, %v155
  %164 = vst [vmem:[%s2] sm:$0xf] %v156
  %165 = vst [vmem:[%s2 + $0x4] sm:$0xf] %v157
  %166 = vst [vmem:[%s2 + $0x8] sm:$0xf] %v158
  %167 = vst [vmem:[%s2 + $0xc] sm:$0xf] %v159
  %v168 = vld [vmem:[%s3] sm:$0x1]
  %v169 = vadd.f32 %v134, %v137
  %v170 = vadd.f32 %v169, %v142
  %v171 = vadd.f32 %v170, %v145
  %v172 = vrot.slane %v171, 4
  %v173 = vadd.f32 %v171, %v172
  %v174 = vrot.slane %v173, 2
  %v175 = vadd.f32 %v173, %v174
  %v176 = vrot.slane %v175, 1
  %v177 = vadd.f32 %v175, %v176
  %v178 = vadd.f32 %v168, %v177
  %179 = vst [vmem:[%s3] sm:$0x1] %v178
  %v180 = vld [vmem:[%s3 + $0x1] sm:$0x1]
  %v181 = vmul.f32 %v134, %v134
  %v182 = vmul.f32 %v137, %v137
  %v183 = vmul.f32 %v142, %v142
  %v184 = vmul.f32 %v145, %v145
  %v185 = vadd.f32 %v181, %v182
  %v186 = vadd.f32 %v185, %v183
  %v187 = vadd.f32 %v186, %v184
  %v188 = vrot.slane %v187, 4
  %v189 = vadd.f32 %v187, %v188
  %v190 = vrot.slane %v189, 2
  %v191 = vadd.f32 %v189, %v190
  %v192 = vrot.slane %v191, 1
  %v193 = vadd.f32 %v191, %v192
  %v194 = vadd.f32 %v180, %v193
  %195 = vst [vmem:[%s3 + $0x1] sm:$0x1] %v194
  // Predicated region
  $region14: #{bottleneck_forward.10} parent=0 // pred_check
    _
  $region15: #{bottleneck_forward.10} parent=0 // pred_check_branch
    %197 = sbr.rel (0) target = $region17
  $region16: #{bottleneck_forward.10} parent=0 // pred_region
    _
  $region17: #{bottleneck_forward.10} parent=0 // pred_fallthru
    _
  // Predicated region
  $region18: #{bottleneck_forward.10} parent=0 // pred_check
    _
  $region19: #{bottleneck_forward.10} parent=0 // pred_check_branch
    %199 = sbr.rel (0) target = $region21
  $region20: #{bottleneck_forward.10} parent=0 // pred_region
    _
  $region21: #{bottleneck_forward.10} parent=0 // pred_fallthru
    _
  // Predicated region
  $region22: #{bottleneck_forward.10} parent=0 // pred_check
    _
  $region23: #{bottleneck_forward.10} parent=0 // pred_check_branch
    %201 = sbr.rel (0) target = $region25
  $region24: #{bottleneck_forward.10} parent=0 // pred_region
    _
  $region25: #{bottleneck_forward.10} parent=0 // pred_fallthru
    _
  // Predicated region
  $region26: #{bottleneck_forward.10} parent=0 // pred_check
    _
  $region27: #{bottleneck_forward.10} parent=0 // pred_check_branch
    %203 = sbr.rel (0) target = $region29
  $region28: #{bottleneck_forward.10} parent=0 // pred_region
    _
  $region29: #{bottleneck_forward.10} parent=0 // pred_fallthru
    _

// kernel: bottleneck_forward.9
$region0: #{bottleneck_forward.9}
  #allocation0 [shape = 'u32[]', space=smem, size = 0x4, offset = 0x4, fixed_abs, tag = 'smem constant byte address 0x4 - core index']
  #allocation1 [shape = 'u32[144,128]{1,0:T(1,128)}', space=vmem, size = 0x12000, scoped, tag = 'internal scratch']
  %s0 = inlined_call_operand.vmem [shape: bf16[32,128], index: 0, kind: input, shape index: {}]
  %s1 = inlined_call_operand.vmem [shape: bf16[128,128], index: 1, kind: input, shape index: {}]
  %s2 = inlined_call_operand.vmem [shape: f32[1,128], index: 2, kind: input, shape index: {}]
  %s3 = inlined_call_operand.vmem [shape: f32[1,128], index: 3, kind: input, shape index: {}]
  %s4 = inlined_call_operand.vmem [shape: bf16[32,128], index: 4, kind: output, shape index: {0}]
  %s5 = inlined_call_operand.vmem [shape: f32[2,128], index: 5, kind: output, shape index: {1}]
  %6 = xla_tuple %s4, %s5
  %s7 = sld [smem:[#allocation0]]
  $region38: #{bottleneck_forward.9} parent=0
    _
  %s9 = ssub.s32 1, %s7
  %s10 = scalar_select 0, %s9, %s7
  // Predicated region
  $region2: #{bottleneck_forward.9} parent=0 // pred_check
    _
  $region3: #{bottleneck_forward.9} parent=0 // pred_check_branch
    %12 = sbr.rel (0) target = $region5
  $region4: #{bottleneck_forward.9} parent=0 // pred_region
    _
  $region5: #{bottleneck_forward.9} parent=0 // pred_fallthru
    _
  // Predicated region
  $region6: #{bottleneck_forward.9} parent=0 // pred_check
    _
  $region7: #{bottleneck_forward.9} parent=0 // pred_check_branch
    %14 = sbr.rel (0) target = $region9
  $region8: #{bottleneck_forward.9} parent=0 // pred_region
    _
  $region9: #{bottleneck_forward.9} parent=0 // pred_fallthru
    _
  // Predicated region
  $region10: #{bottleneck_forward.9} parent=0 // pred_check
    _
  $region11: #{bottleneck_forward.9} parent=0 // pred_check_branch
    %16 = sbr.rel (0) target = $region13
  $region12: #{bottleneck_forward.9} parent=0 // pred_region
    _
  $region13: #{bottleneck_forward.9} parent=0 // pred_fallthru
    _
  // Predicated region
  $region14: #{bottleneck_forward.9} parent=0 // pred_check
    _
  $region15: #{bottleneck_forward.9} parent=0 // pred_check_branch
    %18 = sbr.rel (0) target = $region17
  $region16: #{bottleneck_forward.9} parent=0 // pred_region
    _
  $region17: #{bottleneck_forward.9} parent=0 // pred_fallthru
    _
  %p20 = scmp.eq.s32.totalorder 0, 0
  // Predicated region
  $region18: #{bottleneck_forward.9} parent=0 // pred_check
    %p21 = pneg %p20
  $region19: #{bottleneck_forward.9} parent=0 // pred_check_branch
    %23 = sbr.rel (%p21) target = $region21
  $region20: #{bottleneck_forward.9} parent=0 // pred_region
    %24 = vst [vmem:[%s5] sm:$0x3] 0.0
  $region21: #{bottleneck_forward.9} parent=0 // pred_fallthru
    _
  %v25 = vld [vmem:[%s0] sm:$0xf]
  %v26 = vld [vmem:[%s0 + $0x4] sm:$0xf]
  %v27 = vld [vmem:[%s0 + $0x8] sm:$0xf]
  %v28 = vld [vmem:[%s0 + $0xc] sm:$0xf]
  %v29 = vunpack.c.l.bf16 %v25
  %v30 = vunpack.c.l.bf16 %v26
  %v31 = vunpack.c.l.bf16 %v27
  %v32 = vunpack.c.l.bf16 %v28
  %v33 = vld [vmem:[%s2] sm:$0x1]
  %v35 = vlaneseq
  %v36 = vshrl.u32 %v35, 7
  %v37 = vsub.s32 0, %v36
  %v38 = vrot.slane %v33, %v37
  %v40 = vmul.f32 %v29, %v38
  %v41 = vmul.f32 %v30, %v38
  %v42 = vmul.f32 %v31, %v38
  %v43 = vmul.f32 %v32, %v38
  %v44 = vld [vmem:[%s3] sm:$0x1]
  %v46 = vlaneseq
  %v47 = vshrl.u32 %v46, 7
  %v48 = vsub.s32 0, %v47
  %v49 = vrot.slane %v44, %v48
  %v51 = vadd.f32 %v40, %v49
  %v52 = vadd.f32 %v41, %v49
  %v53 = vadd.f32 %v42, %v49
  %v54 = vadd.f32 %v43, %v49
  %v55 = vmax.f32 %v51, 0.0
  %v56 = vmax.f32 %v52, 0.0
  %v57 = vmax.f32 %v53, 0.0
  %v58 = vmax.f32 %v54, 0.0
  %v59 = vpack.c.bf16 %v56, %v55
  %v60 = vpack.c.bf16 %v58, %v57
  %v61 = vld [vmem:[%s1] sm:$0xf]
  %v62 = vld [vmem:[%s1 + $0x4] sm:$0xf]
  %v63 = vld [vmem:[%s1 + $0x8] sm:$0xf]
  %v64 = vld [vmem:[%s1 + $0xc] sm:$0xf]
  %v65 = vld [vmem:[%s1 + $0x10] sm:$0xf]
  %v66 = vld [vmem:[%s1 + $0x14] sm:$0xf]
  %v67 = vld [vmem:[%s1 + $0x18] sm:$0xf]
  %v68 = vld [vmem:[%s1 + $0x1c] sm:$0xf]
  %v69 = vld [vmem:[%s1 + $0x20] sm:$0xf]
  %v70 = vld [vmem:[%s1 + $0x24] sm:$0xf]
  %v71 = vld [vmem:[%s1 + $0x28] sm:$0xf]
  %v72 = vld [vmem:[%s1 + $0x2c] sm:$0xf]
  %v73 = vld [vmem:[%s1 + $0x30] sm:$0xf]
  %v74 = vld [vmem:[%s1 + $0x34] sm:$0xf]
  %v75 = vld [vmem:[%s1 + $0x38] sm:$0xf]
  %v76 = vld [vmem:[%s1 + $0x3c] sm:$0xf]
  %v93 = vunpack.c.l.b16 %v61
  %v94 = vunpack.c.l.b16 %v62
  %v95 = vunpack.c.l.b16 %v63
  %v96 = vunpack.c.l.b16 %v64
  %v97 = vunpack.c.l.b16 %v65
  %v98 = vunpack.c.l.b16 %v66
  %v99 = vunpack.c.l.b16 %v67
  %v100 = vunpack.c.l.b16 %v68
  %v101 = vunpack.c.l.b16 %v69
  %v102 = vunpack.c.l.b16 %v70
  %v103 = vunpack.c.l.b16 %v71
  %v104 = vunpack.c.l.b16 %v72
  %v105 = vunpack.c.l.b16 %v73
  %v106 = vunpack.c.l.b16 %v74
  %v107 = vunpack.c.l.b16 %v75
  %v108 = vunpack.c.l.b16 %v76
  %v109 = vpack.c.b16 %v94, %v93
  %v110 = vpack.c.b16 %v96, %v95
  %v111 = vpack.c.b16 %v98, %v97
  %v112 = vpack.c.b16 %v100, %v99
  %v113 = vpack.c.b16 %v102, %v101
  %v114 = vpack.c.b16 %v104, %v103
  %v115 = vpack.c.b16 %v106, %v105
  %v116 = vpack.c.b16 %v108, %v107
  %125 = vmatprep.subr.bf16.mxu0 0
  %126 = vmatpush1.bf16.msra.mxu0 %v116
  %127 = vmatprep.subr.bf16.mxu0 0
  %128 = vmatpush1.bf16.msra.mxu0 %v115
  %129 = vmatprep.subr.bf16.mxu0 0
  %130 = vmatpush1.bf16.msra.mxu0 %v114
  %131 = vmatprep.subr.bf16.mxu0 0
  %132 = vmatpush1.bf16.msra.mxu0 %v113
  %133 = vmatprep.subr.bf16.mxu0 0
  %134 = vmatpush1.bf16.msra.mxu0 %v112
  %135 = vmatprep.subr.bf16.mxu0 0
  %136 = vmatpush1.bf16.msra.mxu0 %v111
  %137 = vmatprep.subr.bf16.mxu0 0
  %138 = vmatpush1.bf16.msra.mxu0 %v110
  %139 = vmatprep.subr.bf16.mxu0 0
  %140 = vmatpush1.bf16.msra.mxu0 %v109
  %141 = vmatprep.subr.bf16.mxu0 0
  %142 = vmatpush2.bf16.msra.mxu0 0
  %143 = vmatprep.subr.bf16.mxu0 0
  %144 = vmatpush2.bf16.msra.mxu0 0
  %145 = vmatprep.subr.bf16.mxu0 0
  %146 = vmatpush2.bf16.msra.mxu0 0
  %147 = vmatprep.subr.bf16.mxu0 0
  %148 = vmatpush2.bf16.msra.mxu0 0
  %149 = vmatprep.subr.bf16.mxu0 0
  %150 = vmatpush2.bf16.msra.mxu0 0
  %151 = vmatprep.subr.bf16.mxu0 0
  %152 = vmatpush2.bf16.msra.mxu0 0
  %153 = vmatprep.subr.bf16.mxu0 0
  %154 = vmatpush2.bf16.msra.mxu0 0
  %155 = vmatprep.subr.bf16.mxu0 0
  %156 = vmatpush2.bf16.msra.mxu0 0
  %157 = vmatprep.mubr.bf16.mxu0 0
  %158 = vmatmul.mubr.bf16.gmra.mxu0 %v59
  %v159 = vpop.f32.mrf.mxu0
  %v160 = vadd.f32 0.0, %v159
  %v161 = vpop.f32.mrf.mxu0
  %v162 = vpop.f32.mrf.mxu0
  %v163 = vadd.f32 0.0, %v162
  %v164 = vpop.f32.mrf.mxu0
  %165 = vmatprep.mubr.bf16.mxu0 0
  %166 = vmatmul.mubr.bf16.gmra.mxu0 %v60
  %v167 = vpop.f32.mrf.mxu0
  %v168 = vadd.f32 0.0, %v167
  %v169 = vpop.f32.mrf.mxu0
  %v170 = vpop.f32.mrf.mxu0
  %v171 = vadd.f32 0.0, %v170
  %v172 = vpop.f32.mrf.mxu0
  %173 = vdwg.mxu0
  %v174 = vpack.c.bf16 %v163, %v160
  %v175 = vpack.c.bf16 %v171, %v168
  %v178 = vunpack.c.l.b16 %v174
  %v179 = vunpack.c.h.b16 %v174
  %v180 = vunpack.c.l.b16 %v175
  %v181 = vunpack.c.h.b16 %v175
  %v182 = vpack.c.b16 %v178, %v178
  %v183 = vpack.c.b16 %v179, %v179
  %v184 = vpack.c.b16 %v180, %v180
  %v185 = vpack.c.b16 %v181, %v181
  %190 = vst [vmem:[%s4] sm:$0xf] %v182
  %191 = vst [vmem:[%s4 + $0x4] sm:$0xf] %v183
  %192 = vst [vmem:[%s4 + $0x8] sm:$0xf] %v184
  %193 = vst [vmem:[%s4 + $0xc] sm:$0xf] %v185
  %v194 = vld [vmem:[%s5] sm:$0x1]
  %v195 = vadd.f32 %v160, %v163
  %v196 = vadd.f32 %v195, %v168
  %v197 = vadd.f32 %v196, %v171
  %v198 = vrot.slane %v197, 4
  %v199 = vadd.f32 %v197, %v198
  %v200 = vrot.slane %v199, 2
  %v201 = vadd.f32 %v199, %v200
  %v202 = vrot.slane %v201, 1
  %v203 = vadd.f32 %v201, %v202
  %v204 = vadd.f32 %v194, %v203
  %205 = vst [vmem:[%s5] sm:$0x1] %v204
  %v206 = vld [vmem:[%s5 + $0x1] sm:$0x1]
  %v207 = vmul.f32 %v160, %v160
  %v208 = vmul.f32 %v163, %v163
  %v209 = vmul.f32 %v168, %v168
  %v210 = vmul.f32 %v171, %v171
  %v211 = vadd.f32 %v207, %v208
  %v212 = vadd.f32 %v211, %v209
  %v213 = vadd.f32 %v212, %v210
  %v214 = vrot.slane %v213, 4
  %v215 = vadd.f32 %v213, %v214
  %v216 = vrot.slane %v215, 2
  %v217 = vadd.f32 %v215, %v216
  %v218 = vrot.slane %v217, 1
  %v219 = vadd.f32 %v217, %v218
  %v220 = vadd.f32 %v206, %v219
  %221 = vst [vmem:[%s5 + $0x1] sm:$0x1] %v220
  // Predicated region
  $region22: #{bottleneck_forward.9} parent=0 // pred_check
    _
  $region23: #{bottleneck_forward.9} parent=0 // pred_check_branch
    %223 = sbr.rel (0) target = $region25
  $region24: #{bottleneck_forward.9} parent=0 // pred_region
    _
  $region25: #{bottleneck_forward.9} parent=0 // pred_fallthru
    _
  // Predicated region
  $region26: #{bottleneck_forward.9} parent=0 // pred_check
    _
  $region27: #{bottleneck_forward.9} parent=0 // pred_check_branch
    %225 = sbr.rel (0) target = $region29
  $region28: #{bottleneck_forward.9} parent=0 // pred_region
    _
  $region29: #{bottleneck_forward.9} parent=0 // pred_fallthru
    _
  // Predicated region
  $region30: #{bottleneck_forward.9} parent=0 // pred_check
    _
  $region31: #{bottleneck_forward.9} parent=0 // pred_check_branch
    %227 = sbr.rel (0) target = $region33
  $region32: #{bottleneck_forward.9} parent=0 // pred_region
    _
  $region33: #{bottleneck_forward.9} parent=0 // pred_fallthru
    _
  // Predicated region
  $region34: #{bottleneck_forward.9} parent=0 // pred_check
    _
  $region35: #{bottleneck_forward.9} parent=0 // pred_check_branch
    %229 = sbr.rel (0) target = $region37
  $region36: #{bottleneck_forward.9} parent=0 // pred_region
    _
  $region37: #{bottleneck_forward.9} parent=0 // pred_fallthru
    _

// kernel: bottleneck_forward.11
$region0: #{bottleneck_forward.11}
  #allocation0 [shape = 'u32[]', space=smem, size = 0x4, offset = 0x4, fixed_abs, tag = 'smem constant byte address 0x4 - core index']
  #allocation1 [shape = 'u32[144,128]{1,0:T(1,128)}', space=vmem, size = 0x12000, scoped, tag = 'internal scratch']
  %s0 = inlined_call_operand.vmem [shape: bf16[32,128], index: 0, kind: input, shape index: {}]
  %s1 = inlined_call_operand.vmem [shape: f32[1,128], index: 1, kind: input, shape index: {}]
  %s2 = inlined_call_operand.vmem [shape: f32[1,128], index: 2, kind: input, shape index: {}]
  %s3 = inlined_call_operand.vmem [shape: bf16[32,128], index: 3, kind: input, shape index: {}]
  %s4 = inlined_call_operand.vmem [shape: f32[1,128], index: 4, kind: input, shape index: {}]
  %s5 = inlined_call_operand.vmem [shape: f32[1,128], index: 5, kind: input, shape index: {}]
  %s6 = inlined_call_operand.vmem [shape: bf16[32,128], index: 6, kind: output, shape index: {}]
  %s7 = sld [smem:[#allocation0]]
  $region34: #{bottleneck_forward.11} parent=0
    _
  %s9 = ssub.s32 1, %s7
  %s10 = scalar_select 0, %s9, %s7
  // Predicated region
  $region2: #{bottleneck_forward.11} parent=0 // pred_check
    _
  $region3: #{bottleneck_forward.11} parent=0 // pred_check_branch
    %12 = sbr.rel (0) target = $region5
  $region4: #{bottleneck_forward.11} parent=0 // pred_region
    _
  $region5: #{bottleneck_forward.11} parent=0 // pred_fallthru
    _
  // Predicated region
  $region6: #{bottleneck_forward.11} parent=0 // pred_check
    _
  $region7: #{bottleneck_forward.11} parent=0 // pred_check_branch
    %14 = sbr.rel (0) target = $region9
  $region8: #{bottleneck_forward.11} parent=0 // pred_region
    _
  $region9: #{bottleneck_forward.11} parent=0 // pred_fallthru
    _
  // Predicated region
  $region10: #{bottleneck_forward.11} parent=0 // pred_check
    _
  $region11: #{bottleneck_forward.11} parent=0 // pred_check_branch
    %16 = sbr.rel (0) target = $region13
  $region12: #{bottleneck_forward.11} parent=0 // pred_region
    _
  $region13: #{bottleneck_forward.11} parent=0 // pred_fallthru
    _
  // Predicated region
  $region14: #{bottleneck_forward.11} parent=0 // pred_check
    _
  $region15: #{bottleneck_forward.11} parent=0 // pred_check_branch
    %18 = sbr.rel (0) target = $region17
  $region16: #{bottleneck_forward.11} parent=0 // pred_region
    _
  $region17: #{bottleneck_forward.11} parent=0 // pred_fallthru
    _
  // Predicated region
  $region18: #{bottleneck_forward.11} parent=0 // pred_check
    _
  $region19: #{bottleneck_forward.11} parent=0 // pred_check_branch
    %20 = sbr.rel (0) target = $region21
  $region20: #{bottleneck_forward.11} parent=0 // pred_region
    _
  $region21: #{bottleneck_forward.11} parent=0 // pred_fallthru
    _
  // Predicated region
  $region22: #{bottleneck_forward.11} parent=0 // pred_check
    _
  $region23: #{bottleneck_forward.11} parent=0 // pred_check_branch
    %22 = sbr.rel (0) target = $region25
  $region24: #{bottleneck_forward.11} parent=0 // pred_region
    _
  $region25: #{bottleneck_forward.11} parent=0 // pred_fallthru
    _
  %v23 = vld [vmem:[%s0] sm:$0xf]
  %v24 = vld [vmem:[%s0 + $0x4] sm:$0xf]
  %v25 = vld [vmem:[%s0 + $0x8] sm:$0xf]
  %v26 = vld [vmem:[%s0 + $0xc] sm:$0xf]
  %v27 = vunpack.c.l.bf16 %v23
  %v28 = vunpack.c.l.bf16 %v24
  %v29 = vunpack.c.l.bf16 %v25
  %v30 = vunpack.c.l.bf16 %v26
  %v31 = vld [vmem:[%s1] sm:$0x1]
  %v33 = vlaneseq
  %v34 = vshrl.u32 %v33, 7
  %v35 = vsub.s32 0, %v34
  %v36 = vrot.slane %v31, %v35
  %v38 = vmul.f32 %v27, %v36
  %v39 = vmul.f32 %v28, %v36
  %v40 = vmul.f32 %v29, %v36
  %v41 = vmul.f32 %v30, %v36
  %v42 = vld [vmem:[%s2] sm:$0x1]
  %v44 = vlaneseq
  %v45 = vshrl.u32 %v44, 7
  %v46 = vsub.s32 0, %v45
  %v47 = vrot.slane %v42, %v46
  %v49 = vadd.f32 %v38, %v47
  %v50 = vadd.f32 %v39, %v47
  %v51 = vadd.f32 %v40, %v47
  %v52 = vadd.f32 %v41, %v47
  %v53 = vld [vmem:[%s3] sm:$0xf]
  %v54 = vld [vmem:[%s3 + $0x4] sm:$0xf]
  %v55 = vld [vmem:[%s3 + $0x8] sm:$0xf]
  %v56 = vld [vmem:[%s3 + $0xc] sm:$0xf]
  %v57 = vunpack.c.l.bf16 %v53
  %v58 = vunpack.c.l.bf16 %v54
  %v59 = vunpack.c.l.bf16 %v55
  %v60 = vunpack.c.l.bf16 %v56
  %v61 = vld [vmem:[%s4] sm:$0x1]
  %v63 = vlaneseq
  %v64 = vshrl.u32 %v63, 7
  %v65 = vsub.s32 0, %v64
  %v66 = vrot.slane %v61, %v65
  %v68 = vmul.f32 %v57, %v66
  %v69 = vmul.f32 %v58, %v66
  %v70 = vmul.f32 %v59, %v66
  %v71 = vmul.f32 %v60, %v66
  %v72 = vld [vmem:[%s5] sm:$0x1]
  %v74 = vlaneseq
  %v75 = vshrl.u32 %v74, 7
  %v76 = vsub.s32 0, %v75
  %v77 = vrot.slane %v72, %v76
  %v79 = vadd.f32 %v68, %v77
  %v80 = vadd.f32 %v69, %v77
  %v81 = vadd.f32 %v70, %v77
  %v82 = vadd.f32 %v71, %v77
  %v83 = vadd.f32 %v49, %v79
  %v84 = vadd.f32 %v50, %v80
  %v85 = vadd.f32 %v51, %v81
  %v86 = vadd.f32 %v52, %v82
  %v87 = vmax.f32 %v83, 0.0
  %v88 = vmax.f32 %v84, 0.0
  %v89 = vmax.f32 %v85, 0.0
  %v90 = vmax.f32 %v86, 0.0
  %v91 = vpack.c.bf16 %v88, %v87
  %v92 = vpack.c.bf16 %v90, %v89
  %v95 = vunpack.c.l.b16 %v91
  %v96 = vunpack.c.h.b16 %v91
  %v97 = vunpack.c.l.b16 %v92
  %v98 = vunpack.c.h.b16 %v92
  %v99 = vpack.c.b16 %v95, %v95
  %v100 = vpack.c.b16 %v96, %v96
  %v101 = vpack.c.b16 %v97, %v97
  %v102 = vpack.c.b16 %v98, %v98
  %107 = vst [vmem:[%s6] sm:$0xf] %v99
  %108 = vst [vmem:[%s6 + $0x4] sm:$0xf] %v100
  %109 = vst [vmem:[%s6 + $0x8] sm:$0xf] %v101
  %110 = vst [vmem:[%s6 + $0xc] sm:$0xf] %v102
  // Predicated region
  $region26: #{bottleneck_forward.11} parent=0 // pred_check
    _
  $region27: #{bottleneck_forward.11} parent=0 // pred_check_branch
    %112 = sbr.rel (0) target = $region29
  $region28: #{bottleneck_forward.11} parent=0 // pred_region
    _
  $region29: #{bottleneck_forward.11} parent=0 // pred_fallthru
    _
  // Predicated region
  $region30: #{bottleneck_forward.11} parent=0 // pred_check
    _
  $region31: #{bottleneck_forward.11} parent=0 // pred_check_branch
    %114 = sbr.rel (0) target = $region33
  $region32: #{bottleneck_forward.11} parent=0 // pred_region
    _
  $region33: #{bottleneck_forward.11} parent=0 // pred_fallthru
    _

// kernel: bottleneck_forward.8
$region0: #{bottleneck_forward.8}
  #allocation0 [shape = 'u32[]', space=smem, size = 0x4, offset = 0x4, fixed_abs, tag = 'smem constant byte address 0x4 - core index']
  #allocation1 [shape = 'u32[144,128]{1,0:T(1,128)}', space=vmem, size = 0x12000, scoped, tag = 'internal scratch']
  %s0 = inlined_call_operand.vmem [shape: bf16[2,32,512], index: 0, kind: input, shape index: {}]
  %s1 = inlined_call_operand.vmem [shape: bf16[1280,128], index: 1, kind: input, shape index: {}]
  %s2 = inlined_call_operand.vmem [shape: bf16[2,20,128], index: 2, kind: output, shape index: {0}]
  %s3 = inlined_call_operand.vmem [shape: f32[2,128], index: 3, kind: output, shape index: {1}]
  %4 = xla_tuple %s2, %s3
  %s5 = sld [smem:[#allocation0]]
  $region53: #{bottleneck_forward.8} parent=0
    _
  %s7 = ssub.s32 1, %s5
  %s8 = scalar_select 0, %s7, %s5
  loop: start=0, step=1, limit=4
  $region2: #{bottleneck_forward.8} parent=0 // loop_pre_header
    _
  $region3: #{bottleneck_forward.8} parent=0 // loop_header
    %s10 = sphi 0, %s14
    %p11 = scmp.ge.s32.totalorder %s10, 4
    %s20 = sphi 0, %s22
    %s23 = sphi 0, %s20
    %s24 = sphi 0, %s23
    %s40 = sphi 0, %s24
    %s44 = sphi 0, %s44
    %s46 = sphi 0, %s44
    %s47 = sphi 0, %s46
    %s61 = sphi 0, %s47
    %s67 = sphi 0, %s69
    %s70 = sphi 0, %s67
    %s71 = sphi 0, %s70
    %s87 = sphi 0, %s71
    %s91 = sphi 0, %s91
    %s93 = sphi 0, %s91
    %s94 = sphi 0, %s93
    %s108 = sphi 0, %s94
  $region4: #{bottleneck_forward.8} parent=0 // loop_header_branch
    %13 = sbr.rel (%p11) target = $region8
  $region5: #{bottleneck_forward.8} parent=0 // loop_body
    %s15 = ssub.s32 %s10, 1
    %s16 = ssub.s32 %s10, 2
    %s17 = sadd.s32 %s10, 1
    %s18 = ssub.s32 %s10, %s17
    %p19 = scmp.eq.s32.totalorder %s18, 0
    %s21 = sadd.s32 %s20, 1
    %s22 = scalar_select %p19, %s20, %s21
    %p25 = pneg %p19
    %p26 = scmp.eq.s32.totalorder %s10, 1
    %p27 = por %p25, %p26
    %p28 = scmp.ne.s32.totalorder %s20, %s23
    %p29 = scmp.eq.s32.totalorder %s10, 0
    %p30 = por %p28, %p29
    %p31 = scmp.ne.s32.totalorder %s20, %s23
    %p32 = scmp.eq.s32.totalorder %s15, 1
    %p33 = por %p31, %p32
    %p34 = scmp.ne.s32.totalorder %s23, %s24
    %p35 = scmp.eq.s32.totalorder %s15, 0
    %p36 = por %p34, %p35
    %p37 = scmp.ne.s32.totalorder %s23, %s24
    %p38 = scmp.eq.s32.totalorder %s16, 1
    %p39 = por %p37, %p38
    %p41 = scmp.ne.s32.totalorder %s24, %s40
    %p42 = scmp.eq.s32.totalorder %s16, 0
    %p43 = por %p41, %p42
    %s45 = sadd.s32 %s44, 1
    %p48 = scmp.eq.s32.totalorder %s10, 1
    %p49 = scmp.ne.s32.totalorder %s44, %s46
    %p50 = scmp.eq.s32.totalorder %s10, 0
    %p51 = por %p49, %p50
    %p52 = scmp.ne.s32.totalorder %s44, %s46
    %p53 = scmp.eq.s32.totalorder %s15, 1
    %p54 = por %p52, %p53
    %p55 = scmp.ne.s32.totalorder %s46, %s47
    %p56 = scmp.eq.s32.totalorder %s15, 0
    %p57 = por %p55, %p56
    %p58 = scmp.ne.s32.totalorder %s46, %s47
    %p59 = scmp.eq.s32.totalorder %s16, 1
    %p60 = por %p58, %p59
    %p62 = scmp.ne.s32.totalorder %s47, %s61
    %p63 = scmp.eq.s32.totalorder %s16, 0
    %p64 = por %p62, %p63
    %s65 = ssub.s32 %s10, %s17
    %p66 = scmp.eq.s32.totalorder %s65, 0
    %s68 = sadd.s32 %s67, 1
    %s69 = scalar_select %p66, %s67, %s68
    %p72 = pneg %p66
    %p73 = scmp.eq.s32.totalorder %s10, 1
    %p74 = por %p72, %p73
    %p75 = scmp.ne.s32.totalorder %s67, %s70
    %p76 = scmp.eq.s32.totalorder %s10, 0
    %p77 = por %p75, %p76
    %p78 = scmp.ne.s32.totalorder %s67, %s70
    %p79 = scmp.eq.s32.totalorder %s15, 1
    %p80 = por %p78, %p79
    %p81 = scmp.ne.s32.totalorder %s70, %s71
    %p82 = scmp.eq.s32.totalorder %s15, 0
    %p83 = por %p81, %p82
    %p84 = scmp.ne.s32.totalorder %s70, %s71
    %p85 = scmp.eq.s32.totalorder %s16, 1
    %p86 = por %p84, %p85
    %p88 = scmp.ne.s32.totalorder %s71, %s87
    %p89 = scmp.eq.s32.totalorder %s16, 0
    %p90 = por %p88, %p89
    %s92 = sadd.s32 %s91, 1
    %p95 = scmp.eq.s32.totalorder %s10, 1
    %p96 = scmp.ne.s32.totalorder %s91, %s93
    %p97 = scmp.eq.s32.totalorder %s10, 0
    %p98 = por %p96, %p97
    %p99 = scmp.ne.s32.totalorder %s91, %s93
    %p100 = scmp.eq.s32.totalorder %s15, 1
    %p101 = por %p99, %p100
    %p102 = scmp.ne.s32.totalorder %s93, %s94
    %p103 = scmp.eq.s32.totalorder %s15, 0
    %p104 = por %p102, %p103
    %p105 = scmp.ne.s32.totalorder %s93, %s94
    %p106 = scmp.eq.s32.totalorder %s16, 1
    %p107 = por %p105, %p106
    %p109 = scmp.ne.s32.totalorder %s94, %s108
    %p110 = scmp.eq.s32.totalorder %s16, 0
    %p111 = por %p109, %p110
    %p112 = scmp.le.s32.totalorder 1, %s10
    %p113 = scmp.lt.s32.totalorder %s10, 3
    %p114 = pnand %p112, %p113
    %p115 = pneg %p114
    // Predicated region
    $region9: #{bottleneck_forward.8} parent=5 // pred_check
      _
    $region10: #{bottleneck_forward.8} parent=5 // pred_check_branch
      %117 = sbr.rel (%p114) target = $region12
    $region11: #{bottleneck_forward.8} parent=5 // pred_region
      %s118 = ssub.s32 %s10, 1
      // Predicated region
      $region13: #{bottleneck_forward.8} parent=11 // pred_check
        %p119 = pneg %p57
      $region14: #{bottleneck_forward.8} parent=11 // pred_check_branch
        %121 = sbr.rel (%p119) target = $region16
      $region15: #{bottleneck_forward.8} parent=11 // pred_region
        _
      $region16: #{bottleneck_forward.8} parent=11 // pred_fallthru
        _
    $region12: #{bottleneck_forward.8} parent=5 // pred_fallthru
      _
    %p122 = scmp.lt.s32.totalorder %s10, 2
    // Predicated region
    $region17: #{bottleneck_forward.8} parent=5 // pred_check
      %p123 = pneg %p122
    $region18: #{bottleneck_forward.8} parent=5 // pred_check_branch
      %125 = sbr.rel (%p123) target = $region20
    $region19: #{bottleneck_forward.8} parent=5 // pred_region
      // Predicated region
      $region21: #{bottleneck_forward.8} parent=19 // pred_check
        %p126 = pneg %p30
      $region22: #{bottleneck_forward.8} parent=19 // pred_check_branch
        %128 = sbr.rel (%p126) target = $region24
      $region23: #{bottleneck_forward.8} parent=19 // pred_region
        %p129 = scmp.lt.s32.totalorder %s10, 1
        %s130 = scalar_select %p129, %s10, 1
        %s131 = smul.addr %s130, 16
        %s132 = smul.addr %s131, 4
        %s133 = scalar_lea.vmem %s0, %s132
      $region24: #{bottleneck_forward.8} parent=19 // pred_fallthru
        _
    $region20: #{bottleneck_forward.8} parent=5 // pred_fallthru
      _
    %p134 = scmp.le.s32.totalorder 1, %s10
    %p135 = scmp.lt.s32.totalorder %s10, 3
    %p136 = pnand %p134, %p135
    %p137 = pneg %p136
    // Predicated region
    $region25: #{bottleneck_forward.8} parent=5 // pred_check
      _
    $region26: #{bottleneck_forward.8} parent=5 // pred_check_branch
      %139 = sbr.rel (%p136) target = $region28
    $region27: #{bottleneck_forward.8} parent=5 // pred_region
      %s140 = ssub.s32 %s10, 1
      %p141 = scmp.lt.s32.totalorder %s15, 1
      %s142 = scalar_select %p141, %s15, 1
      %s143 = smul.addr %s142, 16
      %s144 = smul.addr %s143, 4
      %s145 = scalar_lea.vmem %s0, %s144
      %p146 = pneg %p36
      %p147 = pneg %p33
      %p148 = pneg %p57
      %p149 = pneg %p54
      %p150 = pneg %p83
      %p151 = pneg %p80
      %p152 = scmp.lt.s32.totalorder %s15, 1
      %s153 = scalar_select %p152, %s15, 1
      %s154 = smul.addr %s153, 3
      %s155 = smul.addr %s154, 4
      %s156 = scalar_lea.vmem %s2, %s155
      %p157 = pneg %p104
      %p158 = pneg %p101
      %p159 = scmp.lt.s32.totalorder %s15, 1
      %s160 = scalar_select %p159, %s15, 1
      %s161 = smul.addr %s160, 16
      %s162 = smul.addr %s161, 4
      %s163 = scalar_lea.vmem %s0, %s162
      %p164 = scmp.lt.s32.totalorder %s15, 1
      %s165 = scalar_select %p164, %s15, 1
      %s166 = smul.addr %s165, 3
      %s167 = smul.addr %s166, 4
      %s168 = scalar_lea.vmem %s2, %s167
      %p170 = scmp.eq.s32.totalorder %s15, 0
      // Predicated region
      $region29: #{bottleneck_forward.8} parent=27 // pred_check
        %p171 = pneg %p170
      $region30: #{bottleneck_forward.8} parent=27 // pred_check_branch
        %173 = sbr.rel (%p171) target = $region32
      $region31: #{bottleneck_forward.8} parent=27 // pred_region
        %174 = vst [vmem:[%s3] sm:$0x3] 0.0
      $region32: #{bottleneck_forward.8} parent=27 // pred_fallthru
        _
      %v175 = vld [vmem:[%s163] sm:$0xff]
      %v176 = vld [vmem:[%s163 + $0x8] sm:$0xff]
      %v177 = vld [vmem:[%s163 + $0x10] sm:$0xff]
      %v178 = vld [vmem:[%s163 + $0x18] sm:$0xff]
      %v179 = vld [vmem:[%s163 + $0x20] sm:$0x33]
      %v180 = vld [vmem:[%s163 + $0x28] sm:$0x33]
      %v181 = vld [vmem:[%s1] sm:$0xf]
      %v182 = vld [vmem:[%s1 + $0x4] sm:$0xf]
      %v183 = vld [vmem:[%s1 + $0x8] sm:$0xf]
      %v184 = vld [vmem:[%s1 + $0xc] sm:$0xf]
      %v185 = vld [vmem:[%s1 + $0x10] sm:$0xf]
      %v186 = vld [vmem:[%s1 + $0x14] sm:$0xf]
      %v187 = vld [vmem:[%s1 + $0x18] sm:$0xf]
      %v188 = vld [vmem:[%s1 + $0x1c] sm:$0xf]
      %v189 = vld [vmem:[%s1 + $0x20] sm:$0xf]
      %v190 = vld [vmem:[%s1 + $0x24] sm:$0xf]
      %v191 = vld [vmem:[%s1 + $0x28] sm:$0xf]
      %v192 = vld [vmem:[%s1 + $0x2c] sm:$0xf]
      %v193 = vld [vmem:[%s1 + $0x30] sm:$0xf]
      %v194 = vld [vmem:[%s1 + $0x34] sm:$0xf]
      %v195 = vld [vmem:[%s1 + $0x38] sm:$0xf]
      %v196 = vld [vmem:[%s1 + $0x3c] sm:$0xf]
      %v197 = vld [vmem:[%s1 + $0x40] sm:$0xf]
      %v198 = vld [vmem:[%s1 + $0x44] sm:$0xf]
      %v199 = vld [vmem:[%s1 + $0x48] sm:$0xf]
      %v200 = vld [vmem:[%s1 + $0x4c] sm:$0xf]
      %v201 = vld [vmem:[%s1 + $0x50] sm:$0xf]
      %v202 = vld [vmem:[%s1 + $0x54] sm:$0xf]
      %v203 = vld [vmem:[%s1 + $0x58] sm:$0xf]
      %v204 = vld [vmem:[%s1 + $0x5c] sm:$0xf]
      %v205 = vld [vmem:[%s1 + $0x60] sm:$0xf]
      %v206 = vld [vmem:[%s1 + $0x64] sm:$0xf]
      %v207 = vld [vmem:[%s1 + $0x68] sm:$0xf]
      %v208 = vld [vmem:[%s1 + $0x6c] sm:$0xf]
      %v209 = vld [vmem:[%s1 + $0x70] sm:$0xf]
      %v210 = vld [vmem:[%s1 + $0x74] sm:$0xf]
      %v211 = vld [vmem:[%s1 + $0x78] sm:$0xf]
      %v212 = vld [vmem:[%s1 + $0x7c] sm:$0xf]
      %v213 = vld [vmem:[%s1 + $0x80] sm:$0xf]
      %v214 = vld [vmem:[%s1 + $0x84] sm:$0xf]
      %v215 = vld [vmem:[%s1 + $0x88] sm:$0xf]
      %v216 = vld [vmem:[%s1 + $0x8c] sm:$0xf]
      %v217 = vld [vmem:[%s1 + $0x90] sm:$0xf]
      %v218 = vld [vmem:[%s1 + $0x94] sm:$0xf]
      %v219 = vld [vmem:[%s1 + $0x98] sm:$0xf]
      %v220 = vld [vmem:[%s1 + $0x9c] sm:$0xf]
      %v221 = vld [vmem:[%s1 + $0xa0] sm:$0xf]
      %v222 = vld [vmem:[%s1 + $0xa4] sm:$0xf]
      %v223 = vld [vmem:[%s1 + $0xa8] sm:$0xf]
      %v224 = vld [vmem:[%s1 + $0xac] sm:$0xf]
      %v225 = vld [vmem:[%s1 + $0xb0] sm:$0xf]
      %v226 = vld [vmem:[%s1 + $0xb4] sm:$0xf]
      %v227 = vld [vmem:[%s1 + $0xb8] sm:$0xf]
      %v228 = vld [vmem:[%s1 + $0xbc] sm:$0xf]
      %v229 = vld [vmem:[%s1 + $0xc0] sm:$0xf]
      %v230 = vld [vmem:[%s1 + $0xc4] sm:$0xf]
      %v231 = vld [vmem:[%s1 + $0xc8] sm:$0xf]
      %v232 = vld [vmem:[%s1 + $0xcc] sm:$0xf]
      %v233 = vld [vmem:[%s1 + $0xd0] sm:$0xf]
      %v234 = vld [vmem:[%s1 + $0xd4] sm:$0xf]
      %v235 = vld [vmem:[%s1 + $0xd8] sm:$0xf]
      %v236 = vld [vmem:[%s1 + $0xdc] sm:$0xf]
      %v237 = vld [vmem:[%s1 + $0xe0] sm:$0xf]
      %v238 = vld [vmem:[%s1 + $0xe4] sm:$0xf]
      %v239 = vld [vmem:[%s1 + $0xe8] sm:$0xf]
      %v240 = vld [vmem:[%s1 + $0xec] sm:$0xf]
      %v241 = vld [vmem:[%s1 + $0xf0] sm:$0xf]
      %v242 = vld [vmem:[%s1 + $0xf4] sm:$0xf]
      %v243 = vld [vmem:[%s1 + $0xf8] sm:$0xf]
      %v244 = vld [vmem:[%s1 + $0xfc] sm:$0xf]
      %v245 = vld [vmem:[%s163 + $0x8] sm:$0xf]
      %v246 = vld [vmem:[%s163 + $0x18] sm:$0xf]
      %v247 = vld [vmem:[%s163 + $0x20] sm:$0x77]
      %v248 = vld [vmem:[%s163 + $0x28] sm:$0x7]
      %v249 = vld [vmem:[%s1 + $0x100] sm:$0xf]
      %v250 = vld [vmem:[%s1 + $0x104] sm:$0xf]
      %v251 = vld [vmem:[%s1 + $0x108] sm:$0xf]
      %v252 = vld [vmem:[%s1 + $0x10c] sm:$0xf]
      %v253 = vld [vmem:[%s1 + $0x110] sm:$0xf]
      %v254 = vld [vmem:[%s1 + $0x114] sm:$0xf]
      %v255 = vld [vmem:[%s1 + $0x118] sm:$0xf]
      %v256 = vld [vmem:[%s1 + $0x11c] sm:$0xf]
      %v257 = vld [vmem:[%s1 + $0x120] sm:$0xf]
      %v258 = vld [vmem:[%s1 + $0x124] sm:$0xf]
      %v259 = vld [vmem:[%s1 + $0x128] sm:$0xf]
      %v260 = vld [vmem:[%s1 + $0x12c] sm:$0xf]
      %v261 = vld [vmem:[%s1 + $0x130] sm:$0xf]
      %v262 = vld [vmem:[%s1 + $0x134] sm:$0xf]
      %v263 = vld [vmem:[%s1 + $0x138] sm:$0xf]
      %v264 = vld [vmem:[%s1 + $0x13c] sm:$0xf]
      %v265 = vld [vmem:[%s1 + $0x140] sm:$0xf]
      %v266 = vld [vmem:[%s1 + $0x144] sm:$0xf]
      %v267 = vld [vmem:[%s1 + $0x148] sm:$0xf]
      %v268 = vld [vmem:[%s1 + $0x14c] sm:$0xf]
      %v269 = vld [vmem:[%s1 + $0x150] sm:$0xf]
      %v270 = vld [vmem:[%s1 + $0x154] sm:$0xf]
      %v271 = vld [vmem:[%s1 + $0x158] sm:$0xf]
      %v272 = vld [vmem:[%s1 + $0x15c] sm:$0xf]
      %v273 = vld [vmem:[%s1 + $0x160] sm:$0xf]
      %v274 = vld [vmem:[%s1 + $0x164] sm:$0xf]
      %v275 = vld [vmem:[%s1 + $0x168] sm:$0xf]
      %v276 = vld [vmem:[%s1 + $0x16c] sm:$0xf]
      %v277 = vld [vmem:[%s1 + $0x170] sm:$0xf]
      %v278 = vld [vmem:[%s1 + $0x174] sm:$0xf]
      %v279 = vld [vmem:[%s1 + $0x178] sm:$0xf]
      %v280 = vld [vmem:[%s1 + $0x17c] sm:$0xf]
      %v281 = vld [vmem:[%s1 + $0x180] sm:$0xf]
      %v282 = vld [vmem:[%s1 + $0x184] sm:$0xf]
      %v283 = vld [vmem:[%s1 + $0x188] sm:$0xf]
      %v284 = vld [vmem:[%s1 + $0x18c] sm:$0xf]
      %v285 = vld [vmem:[%s1 + $0x190] sm:$0xf]
      %v286 = vld [vmem:[%s1 + $0x194] sm:$0xf]
      %v287 = vld [vmem:[%s1 + $0x198] sm:$0xf]
      %v288 = vld [vmem:[%s1 + $0x19c] sm:$0xf]
      %v289 = vld [vmem:[%s1 + $0x1a0] sm:$0xf]
      %v290 = vld [vmem:[%s1 + $0x1a4] sm:$0xf]
      %v291 = vld [vmem:[%s1 + $0x1a8] sm:$0xf]
      %v292 = vld [vmem:[%s1 + $0x1ac] sm:$0xf]
      %v293 = vld [vmem:[%s1 + $0x1b0] sm:$0xf]
      %v294 = vld [vmem:[%s1 + $0x1b4] sm:$0xf]
      %v295 = vld [vmem:[%s1 + $0x1b8] sm:$0xf]
      %v296 = vld [vmem:[%s1 + $0x1bc] sm:$0xf]
      %v303 = vunpack.c.l.b16 %v175
      %v304 = vunpack.c.h.b16 %v175
      %v305 = vunpack.c.l.b16 %v245
      %v306 = vunpack.c.l.b16 %v177
      %v307 = vunpack.c.h.b16 %v177
      %v308 = vunpack.c.l.b16 %v246
      %v309 = vunpack.c.l.b16 %v247
      %v310 = vunpack.c.h.b16 %v247
      %v311 = vunpack.c.l.b16 %v248
      %v312 = vpack.c.b16 %v306, %v303
      %v313 = vpack.c.b16 %v307, %v304
      %v314 = vpack.c.b16 %v308, %v305
      %v315 = vpack.c.b16 %v309, %v309
      %v316 = vpack.c.b16 %v310, %v310
      %v317 = vpack.c.b16 %v311, %v311
      %vm318 = vsmask.f32 7424
      %v320 = vshrl.u32 %v312, 16
      %v322 = vshll.u32 %v312, 16
      %v324 = vrot.slane %v322, 1
      %v325 = vor.u32 %v320, %v324
      %v327 = vshll.u32 %v315, 16
      %v329 = vrot.slane %v327, 1
      %v330 = vsel %vm318, %v325, %v329
      %v332 = vshrl.u32 %v313, 16
      %v334 = vshll.u32 %v313, 16
      %v336 = vrot.slane %v334, 1
      %v337 = vor.u32 %v332, %v336
      %v339 = vshll.u32 %v316, 16
      %v341 = vrot.slane %v339, 1
      %v342 = vsel %vm318, %v337, %v341
      %v344 = vshrl.u32 %v314, 16
      %v346 = vshll.u32 %v314, 16
      %v348 = vrot.slane %v346, 1
      %v349 = vor.u32 %v344, %v348
      %v351 = vshll.u32 %v317, 16
      %v353 = vrot.slane %v351, 1
      %v354 = vsel %vm318, %v349, %v353
      %v355 = vshrl.u32 %v315, 16
      %v357 = vor.u32 %v355, %v329
      %v358 = vshrl.u32 %v316, 16
      %v360 = vor.u32 %v358, %v341
      %v361 = vshrl.u32 %v317, 16
      %v363 = vor.u32 %v361, %v353
      %v418 = vunpack.c.l.b16 %v249
      %v419 = vunpack.c.l.b16 %v250
      %v420 = vunpack.c.l.b16 %v251
      %v421 = vunpack.c.l.b16 %v252
      %v422 = vunpack.c.l.b16 %v253
      %v423 = vunpack.c.l.b16 %v254
      %v424 = vunpack.c.l.b16 %v255
      %v425 = vunpack.c.l.b16 %v256
      %v426 = vunpack.c.l.b16 %v257
      %v427 = vunpack.c.l.b16 %v258
      %v428 = vunpack.c.l.b16 %v259
      %v429 = vunpack.c.l.b16 %v260
      %v430 = vunpack.c.l.b16 %v261
      %v431 = vunpack.c.l.b16 %v262
      %v432 = vunpack.c.l.b16 %v263
      %v433 = vunpack.c.l.b16 %v264
      %v434 = vunpack.c.l.b16 %v265
      %v435 = vunpack.c.l.b16 %v266
      %v436 = vunpack.c.l.b16 %v267
      %v437 = vunpack.c.l.b16 %v268
      %v438 = vunpack.c.l.b16 %v269
      %v439 = vunpack.c.l.b16 %v270
      %v440 = vunpack.c.l.b16 %v271
      %v441 = vunpack.c.l.b16 %v272
      %v442 = vunpack.c.l.b16 %v273
      %v443 = vunpack.c.l.b16 %v274
      %v444 = vunpack.c.l.b16 %v275
      %v445 = vunpack.c.l.b16 %v276
      %v446 = vunpack.c.l.b16 %v277
      %v447 = vunpack.c.l.b16 %v278
      %v448 = vunpack.c.l.b16 %v279
      %v449 = vunpack.c.l.b16 %v280
      %v450 = vunpack.c.l.b16 %v281
      %v451 = vunpack.c.l.b16 %v282
      %v452 = vunpack.c.l.b16 %v283
      %v453 = vunpack.c.l.b16 %v284
      %v454 = vunpack.c.l.b16 %v285
      %v455 = vunpack.c.l.b16 %v286
      %v456 = vunpack.c.l.b16 %v287
      %v457 = vunpack.c.l.b16 %v288
      %v458 = vunpack.c.l.b16 %v289
      %v459 = vunpack.c.l.b16 %v290
      %v460 = vunpack.c.l.b16 %v291
      %v461 = vunpack.c.l.b16 %v292
      %v462 = vunpack.c.l.b16 %v293
      %v463 = vunpack.c.l.b16 %v294
      %v464 = vunpack.c.l.b16 %v295
      %v465 = vunpack.c.l.b16 %v296
      %v466 = vpack.c.b16 %v419, %v418
      %v467 = vpack.c.b16 %v421, %v420
      %v468 = vpack.c.b16 %v423, %v422
      %v469 = vpack.c.b16 %v425, %v424
      %v470 = vpack.c.b16 %v427, %v426
      %v471 = vpack.c.b16 %v429, %v428
      %v472 = vpack.c.b16 %v431, %v430
      %v473 = vpack.c.b16 %v433, %v432
      %v474 = vpack.c.b16 %v435, %v434
      %v475 = vpack.c.b16 %v437, %v436
      %v476 = vpack.c.b16 %v439, %v438
      %v477 = vpack.c.b16 %v441, %v440
      %v478 = vpack.c.b16 %v443, %v442
      %v479 = vpack.c.b16 %v445, %v444
      %v480 = vpack.c.b16 %v447, %v446
      %v481 = vpack.c.b16 %v449, %v448
      %v482 = vpack.c.b16 %v451, %v450
      %v483 = vpack.c.b16 %v453, %v452
      %v484 = vpack.c.b16 %v455, %v454
      %v485 = vpack.c.b16 %v457, %v456
      %v486 = vpack.c.b16 %v459, %v458
      %v487 = vpack.c.b16 %v461, %v460
      %v488 = vpack.c.b16 %v463, %v462
      %v489 = vpack.c.b16 %v465, %v464
      %514 = vmatprep.subr.bf16.mxu0 0
      %515 = vmatpush1.bf16.msra.mxu0 %v473
      %516 = vmatprep.subr.bf16.mxu0 0
      %517 = vmatpush1.bf16.msra.mxu0 %v472
      %518 = vmatprep.subr.bf16.mxu0 0
      %519 = vmatpush1.bf16.msra.mxu0 %v471
      %520 = vmatprep.subr.bf16.mxu0 0
      %521 = vmatpush1.bf16.msra.mxu0 %v470
      %522 = vmatprep.subr.bf16.mxu0 0
      %523 = vmatpush1.bf16.msra.mxu0 %v469
      %524 = vmatprep.subr.bf16.mxu0 0
      %525 = vmatpush1.bf16.msra.mxu0 %v468
      %526 = vmatprep.subr.bf16.mxu0 0
      %527 = vmatpush1.bf16.msra.mxu0 %v467
      %528 = vmatprep.subr.bf16.mxu0 0
      %529 = vmatpush1.bf16.msra.mxu0 %v466
      %530 = vmatprep.subr.bf16.mxu0 0
      %531 = vmatpush2.bf16.msra.mxu0 %v481
      %532 = vmatprep.subr.bf16.mxu0 0
      %533 = vmatpush2.bf16.msra.mxu0 %v480
      %534 = vmatprep.subr.bf16.mxu0 0
      %535 = vmatpush2.bf16.msra.mxu0 %v479
      %536 = vmatprep.subr.bf16.mxu0 0
      %537 = vmatpush2.bf16.msra.mxu0 %v478
      %538 = vmatprep.subr.bf16.mxu0 0
      %539 = vmatpush2.bf16.msra.mxu0 %v477
      %540 = vmatprep.subr.bf16.mxu0 0
      %541 = vmatpush2.bf16.msra.mxu0 %v476
      %542 = vmatprep.subr.bf16.mxu0 0
      %543 = vmatpush2.bf16.msra.mxu0 %v475
      %544 = vmatprep.subr.bf16.mxu0 0
      %545 = vmatpush2.bf16.msra.mxu0 %v474
      %546 = vmatprep.mubr.bf16.mxu0 %v342
      %547 = vmatmul.mubr.bf16.gmra.mxu0 %v330
      %v548 = vpop.f32.mrf.mxu0
      %v549 = vadd.f32 0.0, %v548
      %v550 = vpop.f32.mrf.mxu0
      %v551 = vpop.f32.mrf.mxu0
      %v552 = vadd.f32 0.0, %v551
      %v553 = vpop.f32.mrf.mxu0
      %554 = vmatprep.mubr.bf16.mxu0 %v360
      %555 = vmatmul.mubr.bf16.gmra.mxu0 %v357
      %v556 = vpop.f32.mrf.mxu0
      %v557 = vadd.f32 0.0, %v556
      %v558 = vpop.f32.mrf.mxu0
      %v559 = vpop.f32.mrf.mxu0
      %v560 = vpop.f32.mrf.mxu0
      %561 = vdwg.mxu0
      %562 = vmatprep.subr.bf16.mxu0 0
      %563 = vmatpush1.bf16.msra.mxu0 %v489
      %564 = vmatprep.subr.bf16.mxu0 0
      %565 = vmatpush1.bf16.msra.mxu0 %v488
      %566 = vmatprep.subr.bf16.mxu0 0
      %567 = vmatpush1.bf16.msra.mxu0 %v487
      %568 = vmatprep.subr.bf16.mxu0 0
      %569 = vmatpush1.bf16.msra.mxu0 %v486
      %570 = vmatprep.subr.bf16.mxu0 0
      %571 = vmatpush1.bf16.msra.mxu0 %v485
      %572 = vmatprep.subr.bf16.mxu0 0
      %573 = vmatpush1.bf16.msra.mxu0 %v484
      %574 = vmatprep.subr.bf16.mxu0 0
      %575 = vmatpush1.bf16.msra.mxu0 %v483
      %576 = vmatprep.subr.bf16.mxu0 0
      %577 = vmatpush1.bf16.msra.mxu0 %v482
      %578 = vmatprep.subr.bf16.mxu0 0
      %579 = vmatpush2.bf16.msra.mxu0 0
      %580 = vmatprep.subr.bf16.mxu0 0
      %581 = vmatpush2.bf16.msra.mxu0 0
      %582 = vmatprep.subr.bf16.mxu0 0
      %583 = vmatpush2.bf16.msra.mxu0 0
      %584 = vmatprep.subr.bf16.mxu0 0
      %585 = vmatpush2.bf16.msra.mxu0 0
      %586 = vmatprep.subr.bf16.mxu0 0
      %587 = vmatpush2.bf16.msra.mxu0 0
      %588 = vmatprep.subr.bf16.mxu0 0
      %589 = vmatpush2.bf16.msra.mxu0 0
      %590 = vmatprep.subr.bf16.mxu0 0
      %591 = vmatpush2.bf16.msra.mxu0 0
      %592 = vmatprep.subr.bf16.mxu0 0
      %593 = vmatpush2.bf16.msra.mxu0 0
      %594 = vmatprep.mubr.bf16.mxu0 0
      %595 = vmatmul.mubr.bf16.gmra.mxu0 %v354
      %v596 = vpop.f32.mrf.mxu0
      %v597 = vadd.f32 %v549, %v596
      %v598 = vpop.f32.mrf.mxu0
      %v599 = vpop.f32.mrf.mxu0
      %v600 = vadd.f32 %v552, %v599
      %v601 = vpop.f32.mrf.mxu0
      %602 = vmatprep.mubr.bf16.mxu0 0
      %603 = vmatmul.mubr.bf16.gmra.mxu0 %v363
      %v604 = vpop.f32.mrf.mxu0
      %v605 = vadd.f32 %v557, %v604
      %v606 = vpop.f32.mrf.mxu0
      %v607 = vpop.f32.mrf.mxu0
      %v608 = vpop.f32.mrf.mxu0
      %609 = vdwg.mxu0
      %v614 = vunpack.c.l.b16 %v176
      %v615 = vunpack.c.h.b16 %v176
      %v616 = vunpack.c.l.b16 %v178
      %v617 = vunpack.c.h.b16 %v178
      %v618 = vunpack.c.l.b16 %v179
      %v619 = vunpack.c.h.b16 %v179
      %v620 = vunpack.c.l.b16 %v180
      %v621 = vunpack.c.h.b16 %v180
      %v622 = vpack.c.b16 %v616, %v614
      %v623 = vpack.c.b16 %v617, %v615
      %v624 = vpack.c.b16 %v618, %v618
      %v625 = vpack.c.b16 %v619, %v619
      %v626 = vpack.c.b16 %v620, %v620
      %v627 = vpack.c.b16 %v621, %v621
      %v700 = vunpack.c.l.b16 %v181
      %v701 = vunpack.c.l.b16 %v182
      %v702 = vunpack.c.l.b16 %v183
      %v703 = vunpack.c.l.b16 %v184
      %v704 = vunpack.c.l.b16 %v185
      %v705 = vunpack.c.l.b16 %v186
      %v706 = vunpack.c.l.b16 %v187
      %v707 = vunpack.c.l.b16 %v188
      %v708 = vunpack.c.l.b16 %v189
      %v709 = vunpack.c.l.b16 %v190
      %v710 = vunpack.c.l.b16 %v191
      %v711 = vunpack.c.l.b16 %v192
      %v712 = vunpack.c.l.b16 %v193
      %v713 = vunpack.c.l.b16 %v194
      %v714 = vunpack.c.l.b16 %v195
      %v715 = vunpack.c.l.b16 %v196
      %v716 = vunpack.c.l.b16 %v197
      %v717 = vunpack.c.l.b16 %v198
      %v718 = vunpack.c.l.b16 %v199
      %v719 = vunpack.c.l.b16 %v200
      %v720 = vunpack.c.l.b16 %v201
      %v721 = vunpack.c.l.b16 %v202
      %v722 = vunpack.c.l.b16 %v203
      %v723 = vunpack.c.l.b16 %v204
      %v724 = vunpack.c.l.b16 %v205
      %v725 = vunpack.c.l.b16 %v206
      %v726 = vunpack.c.l.b16 %v207
      %v727 = vunpack.c.l.b16 %v208
      %v728 = vunpack.c.l.b16 %v209
      %v729 = vunpack.c.l.b16 %v210
      %v730 = vunpack.c.l.b16 %v211
      %v731 = vunpack.c.l.b16 %v212
      %v732 = vunpack.c.l.b16 %v213
      %v733 = vunpack.c.l.b16 %v214
      %v734 = vunpack.c.l.b16 %v215
      %v735 = vunpack.c.l.b16 %v216
      %v736 = vunpack.c.l.b16 %v217
      %v737 = vunpack.c.l.b16 %v218
      %v738 = vunpack.c.l.b16 %v219
      %v739 = vunpack.c.l.b16 %v220
      %v740 = vunpack.c.l.b16 %v221
      %v741 = vunpack.c.l.b16 %v222
      %v742 = vunpack.c.l.b16 %v223
      %v743 = vunpack.c.l.b16 %v224
      %v744 = vunpack.c.l.b16 %v225
      %v745 = vunpack.c.l.b16 %v226
      %v746 = vunpack.c.l.b16 %v227
      %v747 = vunpack.c.l.b16 %v228
      %v748 = vunpack.c.l.b16 %v229
      %v749 = vunpack.c.l.b16 %v230
      %v750 = vunpack.c.l.b16 %v231
      %v751 = vunpack.c.l.b16 %v232
      %v752 = vunpack.c.l.b16 %v233
      %v753 = vunpack.c.l.b16 %v234
      %v754 = vunpack.c.l.b16 %v235
      %v755 = vunpack.c.l.b16 %v236
      %v756 = vunpack.c.l.b16 %v237
      %v757 = vunpack.c.l.b16 %v238
      %v758 = vunpack.c.l.b16 %v239
      %v759 = vunpack.c.l.b16 %v240
      %v760 = vunpack.c.l.b16 %v241
      %v761 = vunpack.c.l.b16 %v242
      %v762 = vunpack.c.l.b16 %v243
      %v763 = vunpack.c.l.b16 %v244
      %v764 = vpack.c.b16 %v701, %v700
      %v765 = vpack.c.b16 %v703, %v702
      %v766 = vpack.c.b16 %v705, %v704
      %v767 = vpack.c.b16 %v707, %v706
      %v768 = vpack.c.b16 %v709, %v708
      %v769 = vpack.c.b16 %v711, %v710
      %v770 = vpack.c.b16 %v713, %v712
      %v771 = vpack.c.b16 %v715, %v714
      %v772 = vpack.c.b16 %v717, %v716
      %v773 = vpack.c.b16 %v719, %v718
      %v774 = vpack.c.b16 %v721, %v720
      %v775 = vpack.c.b16 %v723, %v722
      %v776 = vpack.c.b16 %v725, %v724
      %v777 = vpack.c.b16 %v727, %v726
      %v778 = vpack.c.b16 %v729, %v728
      %v779 = vpack.c.b16 %v731, %v730
      %v780 = vpack.c.b16 %v733, %v732
      %v781 = vpack.c.b16 %v735, %v734
      %v782 = vpack.c.b16 %v737, %v736
      %v783 = vpack.c.b16 %v739, %v738
      %v784 = vpack.c.b16 %v741, %v740
      %v785 = vpack.c.b16 %v743, %v742
      %v786 = vpack.c.b16 %v745, %v744
      %v787 = vpack.c.b16 %v747, %v746
      %v788 = vpack.c.b16 %v749, %v748
      %v789 = vpack.c.b16 %v751, %v750
      %v790 = vpack.c.b16 %v753, %v752
      %v791 = vpack.c.b16 %v755, %v754
      %v792 = vpack.c.b16 %v757, %v756
      %v793 = vpack.c.b16 %v759, %v758
      %v794 = vpack.c.b16 %v761, %v760
      %v795 = vpack.c.b16 %v763, %v762
      %828 = vmatprep.subr.bf16.mxu0 0
      %829 = vmatpush1.bf16.msra.mxu0 %v771
      %830 = vmatprep.subr.bf16.mxu0 0
      %831 = vmatpush1.bf16.msra.mxu0 %v770
      %832 = vmatprep.subr.bf16.mxu0 0
      %833 = vmatpush1.bf16.msra.mxu0 %v769
      %834 = vmatprep.subr.bf16.mxu0 0
      %835 = vmatpush1.bf16.msra.mxu0 %v768
      %836 = vmatprep.subr.bf16.mxu0 0
      %837 = vmatpush1.bf16.msra.mxu0 %v767
      %838 = vmatprep.subr.bf16.mxu0 0
      %839 = vmatpush1.bf16.msra.mxu0 %v766
      %840 = vmatprep.subr.bf16.mxu0 0
      %841 = vmatpush1.bf16.msra.mxu0 %v765
      %842 = vmatprep.subr.bf16.mxu0 0
      %843 = vmatpush1.bf16.msra.mxu0 %v764
      %844 = vmatprep.subr.bf16.mxu0 0
      %845 = vmatpush2.bf16.msra.mxu0 %v779
      %846 = vmatprep.subr.bf16.mxu0 0
      %847 = vmatpush2.bf16.msra.mxu0 %v778
      %848 = vmatprep.subr.bf16.mxu0 0
      %849 = vmatpush2.bf16.msra.mxu0 %v777
      %850 = vmatprep.subr.bf16.mxu0 0
      %851 = vmatpush2.bf16.msra.mxu0 %v776
      %852 = vmatprep.subr.bf16.mxu0 0
      %853 = vmatpush2.bf16.msra.mxu0 %v775
      %854 = vmatprep.subr.bf16.mxu0 0
      %855 = vmatpush2.bf16.msra.mxu0 %v774
      %856 = vmatprep.subr.bf16.mxu0 0
      %857 = vmatpush2.bf16.msra.mxu0 %v773
      %858 = vmatprep.subr.bf16.mxu0 0
      %859 = vmatpush2.bf16.msra.mxu0 %v772
      %860 = vmatprep.mubr.bf16.mxu0 %v313
      %861 = vmatmul.mubr.bf16.gmra.mxu0 %v312
      %v862 = vpop.f32.mrf.mxu0
      %v863 = vadd.f32 %v597, %v862
      %v864 = vpop.f32.mrf.mxu0
      %v865 = vpop.f32.mrf.mxu0
      %v866 = vadd.f32 %v600, %v865
      %v867 = vpop.f32.mrf.mxu0
      %868 = vmatprep.mubr.bf16.mxu0 %v625
      %869 = vmatmul.mubr.bf16.gmra.mxu0 %v624
      %v870 = vpop.f32.mrf.mxu0
      %v871 = vadd.f32 %v605, %v870
      %v872 = vpop.f32.mrf.mxu0
      %v873 = vpop.f32.mrf.mxu0
      %v874 = vpop.f32.mrf.mxu0
      %875 = vdwg.mxu0
      %876 = vmatprep.subr.bf16.mxu0 0
      %877 = vmatpush1.bf16.msra.mxu0 %v787
      %878 = vmatprep.subr.bf16.mxu0 0
      %879 = vmatpush1.bf16.msra.mxu0 %v786
      %880 = vmatprep.subr.bf16.mxu0 0
      %881 = vmatpush1.bf16.msra.mxu0 %v785
      %882 = vmatprep.subr.bf16.mxu0 0
      %883 = vmatpush1.bf16.msra.mxu0 %v784
      %884 = vmatprep.subr.bf16.mxu0 0
      %885 = vmatpush1.bf16.msra.mxu0 %v783
      %886 = vmatprep.subr.bf16.mxu0 0
      %887 = vmatpush1.bf16.msra.mxu0 %v782
      %888 = vmatprep.subr.bf16.mxu0 0
      %889 = vmatpush1.bf16.msra.mxu0 %v781
      %890 = vmatprep.subr.bf16.mxu0 0
      %891 = vmatpush1.bf16.msra.mxu0 %v780
      %892 = vmatprep.subr.bf16.mxu0 0
      %893 = vmatpush2.bf16.msra.mxu0 %v795
      %894 = vmatprep.subr.bf16.mxu0 0
      %895 = vmatpush2.bf16.msra.mxu0 %v794
      %896 = vmatprep.subr.bf16.mxu0 0
      %897 = vmatpush2.bf16.msra.mxu0 %v793
      %898 = vmatprep.subr.bf16.mxu0 0
      %899 = vmatpush2.bf16.msra.mxu0 %v792
      %900 = vmatprep.subr.bf16.mxu0 0
      %901 = vmatpush2.bf16.msra.mxu0 %v791
      %902 = vmatprep.subr.bf16.mxu0 0
      %903 = vmatpush2.bf16.msra.mxu0 %v790
      %904 = vmatprep.subr.bf16.mxu0 0
      %905 = vmatpush2.bf16.msra.mxu0 %v789
      %906 = vmatprep.subr.bf16.mxu0 0
      %907 = vmatpush2.bf16.msra.mxu0 %v788
      %908 = vmatprep.mubr.bf16.mxu0 %v623
      %909 = vmatmul.mubr.bf16.gmra.mxu0 %v622
      %v910 = vpop.f32.mrf.mxu0
      %v911 = vadd.f32 %v863, %v910
      %v912 = vpop.f32.mrf.mxu0
      %v913 = vpop.f32.mrf.mxu0
      %v914 = vadd.f32 %v866, %v913
      %v915 = vpop.f32.mrf.mxu0
      %916 = vmatprep.mubr.bf16.mxu0 %v627
      %917 = vmatmul.mubr.bf16.gmra.mxu0 %v626
      %v918 = vpop.f32.mrf.mxu0
      %v919 = vadd.f32 %v871, %v918
      %v920 = vpop.f32.mrf.mxu0
      %v921 = vpop.f32.mrf.mxu0
      %v922 = vpop.f32.mrf.mxu0
      %923 = vdwg.mxu0
      %v924 = vld [vmem:[%s163] sm:$0xcc]
      %v925 = vld [vmem:[%s163 + $0x10] sm:$0xff]
      %v926 = vld [vmem:[%s163 + $0x20] sm:$0xff]
      %v927 = vld [vmem:[%s163 + $0x30] sm:$0x11]
      %v928 = vld [vmem:[%s1 + $0x1c0] sm:$0xf]
      %v929 = vld [vmem:[%s1 + $0x1c4] sm:$0xf]
      %v930 = vld [vmem:[%s1 + $0x1c8] sm:$0xf]
      %v931 = vld [vmem:[%s1 + $0x1cc] sm:$0xf]
      %v932 = vld [vmem:[%s1 + $0x1d0] sm:$0xf]
      %v933 = vld [vmem:[%s1 + $0x1d4] sm:$0xf]
      %v934 = vld [vmem:[%s1 + $0x1d8] sm:$0xf]
      %v935 = vld [vmem:[%s1 + $0x1dc] sm:$0xf]
      %v936 = vld [vmem:[%s1 + $0x1e0] sm:$0xf]
      %v937 = vld [vmem:[%s1 + $0x1e4] sm:$0xf]
      %v938 = vld [vmem:[%s1 + $0x1e8] sm:$0xf]
      %v939 = vld [vmem:[%s1 + $0x1ec] sm:$0xf]
      %v940 = vld [vmem:[%s1 + $0x1f0] sm:$0xf]
      %v941 = vld [vmem:[%s1 + $0x1f4] sm:$0xf]
      %v942 = vld [vmem:[%s1 + $0x1f8] sm:$0xf]
      %v943 = vld [vmem:[%s1 + $0x1fc] sm:$0xf]
      %v944 = vld [vmem:[%s1 + $0x200] sm:$0xf]
      %v945 = vld [vmem:[%s1 + $0x204] sm:$0xf]
      %v946 = vld [vmem:[%s1 + $0x208] sm:$0xf]
      %v947 = vld [vmem:[%s1 + $0x20c] sm:$0xf]
      %v948 = vld [vmem:[%s1 + $0x210] sm:$0xf]
      %v949 = vld [vmem:[%s1 + $0x214] sm:$0xf]
      %v950 = vld [vmem:[%s1 + $0x218] sm:$0xf]
      %v951 = vld [vmem:[%s1 + $0x21c] sm:$0xf]
      %v952 = vld [vmem:[%s1 + $0x220] sm:$0xf]
      %v953 = vld [vmem:[%s1 + $0x224] sm:$0xf]
      %v954 = vld [vmem:[%s1 + $0x228] sm:$0xf]
      %v955 = vld [vmem:[%s1 + $0x22c] sm:$0xf]
      %v956 = vld [vmem:[%s1 + $0x230] sm:$0xf]
      %v957 = vld [vmem:[%s1 + $0x234] sm:$0xf]
      %v958 = vld [vmem:[%s1 + $0x238] sm:$0xf]
      %v959 = vld [vmem:[%s1 + $0x23c] sm:$0xf]
      %v964 = vunpack.c.l.b16 %v924
      %v965 = vunpack.c.h.b16 %v924
      %v966 = vunpack.c.l.b16 %v925
      %v967 = vunpack.c.h.b16 %v925
      %v968 = vunpack.c.l.b16 %v926
      %v969 = vunpack.c.h.b16 %v926
      %v970 = vunpack.c.l.b16 %v927
      %v971 = vunpack.c.h.b16 %v927
      %v972 = vpack.c.b16 %v966, %v964
      %v973 = vpack.c.b16 %v967, %v965
      %v974 = vpack.c.b16 %v970, %v968
      %v975 = vpack.c.b16 %v971, %v969
      %vm976 = vsmask.f32 5376
      %v978 = vshrl.u32 %v972, 16
      %v980 = vrot.slane %v978, 2
      %v981 = vshll.u32 %v972, 16
      %v983 = vrot.slane %v981, 3
      %v984 = vor.u32 %v980, %v983
      %v986 = vshrl.u32 %v974, 16
      %v988 = vrot.slane %v986, 2
      %v989 = vshll.u32 %v974, 16
      %v991 = vrot.slane %v989, 3
      %v992 = vor.u32 %v988, %v991
      %v993 = vsel %vm976, %v984, %v992
      %v995 = vshrl.u32 %v973, 16
      %v997 = vrot.slane %v995, 2
      %v998 = vshll.u32 %v973, 16
      %v1000 = vrot.slane %v998, 3
      %v1001 = vor.u32 %v997, %v1000
      %v1003 = vshrl.u32 %v975, 16
      %v1005 = vrot.slane %v1003, 2
      %v1006 = vshll.u32 %v975, 16
      %v1008 = vrot.slane %v1006, 3
      %v1009 = vor.u32 %v1005, %v1008
      %v1010 = vsel %vm976, %v1001, %v1009
      %v1047 = vunpack.c.l.b16 %v928
      %v1048 = vunpack.c.l.b16 %v929
      %v1049 = vunpack.c.l.b16 %v930
      %v1050 = vunpack.c.l.b16 %v931
      %v1051 = vunpack.c.l.b16 %v932
      %v1052 = vunpack.c.l.b16 %v933
      %v1053 = vunpack.c.l.b16 %v934
      %v1054 = vunpack.c.l.b16 %v935
      %v1055 = vunpack.c.l.b16 %v936
      %v1056 = vunpack.c.l.b16 %v937
      %v1057 = vunpack.c.l.b16 %v938
      %v1058 = vunpack.c.l.b16 %v939
      %v1059 = vunpack.c.l.b16 %v940
      %v1060 = vunpack.c.l.b16 %v941
      %v1061 = vunpack.c.l.b16 %v942
      %v1062 = vunpack.c.l.b16 %v943
      %v1063 = vunpack.c.l.b16 %v944
      %v1064 = vunpack.c.l.b16 %v945
      %v1065 = vunpack.c.l.b16 %v946
      %v1066 = vunpack.c.l.b16 %v947
      %v1067 = vunpack.c.l.b16 %v948
      %v1068 = vunpack.c.l.b16 %v949
      %v1069 = vunpack.c.l.b16 %v950
      %v1070 = vunpack.c.l.b16 %v951
      %v1071 = vunpack.c.l.b16 %v952
      %v1072 = vunpack.c.l.b16 %v953
      %v1073 = vunpack.c.l.b16 %v954
      %v1074 = vunpack.c.l.b16 %v955
      %v1075 = vunpack.c.l.b16 %v956
      %v1076 = vunpack.c.l.b16 %v957
      %v1077 = vunpack.c.l.b16 %v958
      %v1078 = vunpack.c.l.b16 %v959
      %v1079 = vpack.c.b16 %v1048, %v1047
      %v1080 = vpack.c.b16 %v1050, %v1049
      %v1081 = vpack.c.b16 %v1052, %v1051
      %v1082 = vpack.c.b16 %v1054, %v1053
      %v1083 = vpack.c.b16 %v1056, %v1055
      %v1084 = vpack.c.b16 %v1058, %v1057
      %v1085 = vpack.c.b16 %v1060, %v1059
      %v1086 = vpack.c.b16 %v1062, %v1061
      %v1087 = vpack.c.b16 %v1064, %v1063
      %v1088 = vpack.c.b16 %v1066, %v1065
      %v1089 = vpack.c.b16 %v1068, %v1067
      %v1090 = vpack.c.b16 %v1070, %v1069
      %v1091 = vpack.c.b16 %v1072, %v1071
      %v1092 = vpack.c.b16 %v1074, %v1073
      %v1093 = vpack.c.b16 %v1076, %v1075
      %v1094 = vpack.c.b16 %v1078, %v1077
      %1111 = vmatprep.subr.bf16.mxu0 0
      %1112 = vmatpush1.bf16.msra.mxu0 %v1086
      %1113 = vmatprep.subr.bf16.mxu0 0
      %1114 = vmatpush1.bf16.msra.mxu0 %v1085
      %1115 = vmatprep.subr.bf16.mxu0 0
      %1116 = vmatpush1.bf16.msra.mxu0 %v1084
      %1117 = vmatprep.subr.bf16.mxu0 0
      %1118 = vmatpush1.bf16.msra.mxu0 %v1083
      %1119 = vmatprep.subr.bf16.mxu0 0
      %1120 = vmatpush1.bf16.msra.mxu0 %v1082
      %1121 = vmatprep.subr.bf16.mxu0 0
      %1122 = vmatpush1.bf16.msra.mxu0 %v1081
      %1123 = vmatprep.subr.bf16.mxu0 0
      %1124 = vmatpush1.bf16.msra.mxu0 %v1080
      %1125 = vmatprep.subr.bf16.mxu0 0
      %1126 = vmatpush1.bf16.msra.mxu0 %v1079
      %1127 = vmatprep.subr.bf16.mxu0 0
      %1128 = vmatpush2.bf16.msra.mxu0 %v1094
      %1129 = vmatprep.subr.bf16.mxu0 0
      %1130 = vmatpush2.bf16.msra.mxu0 %v1093
      %1131 = vmatprep.subr.bf16.mxu0 0
      %1132 = vmatpush2.bf16.msra.mxu0 %v1092
      %1133 = vmatprep.subr.bf16.mxu0 0
      %1134 = vmatpush2.bf16.msra.mxu0 %v1091
      %1135 = vmatprep.subr.bf16.mxu0 0
      %1136 = vmatpush2.bf16.msra.mxu0 %v1090
      %1137 = vmatprep.subr.bf16.mxu0 0
      %1138 = vmatpush2.bf16.msra.mxu0 %v1089
      %1139 = vmatprep.subr.bf16.mxu0 0
      %1140 = vmatpush2.bf16.msra.mxu0 %v1088
      %1141 = vmatprep.subr.bf16.mxu0 0
      %1142 = vmatpush2.bf16.msra.mxu0 %v1087
      %1143 = vmatprep.mubr.bf16.mxu0 %v1010
      %1144 = vmatmul.mubr.bf16.gmra.mxu0 %v993
      %v1145 = vpop.f32.mrf.mxu0
      %v1146 = vadd.f32 0.0, %v1145
      %v1147 = vpop.f32.mrf.mxu0
      %v1148 = vpop.f32.mrf.mxu0
      %v1149 = vadd.f32 0.0, %v1148
      %v1150 = vpop.f32.mrf.mxu0
      %1151 = vmatprep.mubr.bf16.mxu0 %v1009
      %1152 = vmatmul.mubr.bf16.gmra.mxu0 %v992
      %v1153 = vpop.f32.mrf.mxu0
      %v1154 = vadd.f32 0.0, %v1153
      %v1155 = vpop.f32.mrf.mxu0
      %v1156 = vpop.f32.mrf.mxu0
      %v1157 = vpop.f32.mrf.mxu0
      %1158 = vdwg.mxu0
      %v1159 = vadd.f32 %v911, %v1146
      %v1160 = vadd.f32 %v914, %v1149
      %v1161 = vadd.f32 %v919, %v1154
      %v1162 = vld [vmem:[%s163] sm:$0x8]
      %v1163 = vld [vmem:[%s163 + $0x10] sm:$0xf]
      %v1164 = vld [vmem:[%s163 + $0x20] sm:$0xf]
      %v1165 = vld [vmem:[%s163 + $0x30] sm:$0x1]
      %v1166 = vld [vmem:[%s1 + $0x240] sm:$0xf]
      %v1167 = vld [vmem:[%s1 + $0x244] sm:$0xf]
      %v1168 = vld [vmem:[%s1 + $0x248] sm:$0xf]
      %v1169 = vld [vmem:[%s1 + $0x24c] sm:$0xf]
      %v1170 = vld [vmem:[%s1 + $0x250] sm:$0xf]
      %v1171 = vld [vmem:[%s1 + $0x254] sm:$0xf]
      %v1172 = vld [vmem:[%s1 + $0x258] sm:$0xf]
      %v1173 = vld [vmem:[%s1 + $0x25c] sm:$0xf]
      %v1174 = vld [vmem:[%s1 + $0x260] sm:$0xf]
      %v1175 = vld [vmem:[%s1 + $0x264] sm:$0xf]
      %v1176 = vld [vmem:[%s1 + $0x268] sm:$0xf]
      %v1177 = vld [vmem:[%s1 + $0x26c] sm:$0xf]
      %v1178 = vld [vmem:[%s1 + $0x270] sm:$0xf]
      %v1179 = vld [vmem:[%s1 + $0x274] sm:$0xf]
      %v1180 = vld [vmem:[%s1 + $0x278] sm:$0xf]
      %v1181 = vld [vmem:[%s1 + $0x27c] sm:$0xf]
      %v1186 = vunpack.c.l.b16 %v1162
      %v1187 = vunpack.c.l.b16 %v1163
      %v1188 = vunpack.c.l.b16 %v1164
      %v1189 = vunpack.c.l.b16 %v1165
      %v1190 = vpack.c.b16 %v1187, %v1186
      %v1191 = vpack.c.b16 %v1189, %v1188
      %vm1192 = vcmask 1044480
      %v1193 = vrot.slane %v1190, 3
      %v1194 = vrot.slane %v1191, 3
      %v1195 = vsel %vm1192, %v1193, %v1194
      %v1214 = vunpack.c.l.b16 %v1166
      %v1215 = vunpack.c.l.b16 %v1167
      %v1216 = vunpack.c.l.b16 %v1168
      %v1217 = vunpack.c.l.b16 %v1169
      %v1218 = vunpack.c.l.b16 %v1170
      %v1219 = vunpack.c.l.b16 %v1171
      %v1220 = vunpack.c.l.b16 %v1172
      %v1221 = vunpack.c.l.b16 %v1173
      %v1222 = vunpack.c.l.b16 %v1174
      %v1223 = vunpack.c.l.b16 %v1175
      %v1224 = vunpack.c.l.b16 %v1176
      %v1225 = vunpack.c.l.b16 %v1177
      %v1226 = vunpack.c.l.b16 %v1178
      %v1227 = vunpack.c.l.b16 %v1179
      %v1228 = vunpack.c.l.b16 %v1180
      %v1229 = vunpack.c.l.b16 %v1181
      %v1230 = vpack.c.b16 %v1215, %v1214
      %v1231 = vpack.c.b16 %v1217, %v1216
      %v1232 = vpack.c.b16 %v1219, %v1218
      %v1233 = vpack.c.b16 %v1221, %v1220
      %v1234 = vpack.c.b16 %v1223, %v1222
      %v1235 = vpack.c.b16 %v1225, %v1224
      %v1236 = vpack.c.b16 %v1227, %v1226
      %v1237 = vpack.c.b16 %v1229, %v1228
      %1246 = vmatprep.subr.bf16.mxu0 0
      %1247 = vmatpush1.bf16.msra.mxu0 %v1237
      %1248 = vmatprep.subr.bf16.mxu0 0
      %1249 = vmatpush1.bf16.msra.mxu0 %v1236
      %1250 = vmatprep.subr.bf16.mxu0 0
      %1251 = vmatpush1.bf16.msra.mxu0 %v1235
      %1252 = vmatprep.subr.bf16.mxu0 0
      %1253 = vmatpush1.bf16.msra.mxu0 %v1234
      %1254 = vmatprep.subr.bf16.mxu0 0
      %1255 = vmatpush1.bf16.msra.mxu0 %v1233
      %1256 = vmatprep.subr.bf16.mxu0 0
      %1257 = vmatpush1.bf16.msra.mxu0 %v1232
      %1258 = vmatprep.subr.bf16.mxu0 0
      %1259 = vmatpush1.bf16.msra.mxu0 %v1231
      %1260 = vmatprep.subr.bf16.mxu0 0
      %1261 = vmatpush1.bf16.msra.mxu0 %v1230
      %1262 = vmatprep.subr.bf16.mxu0 0
      %1263 = vmatpush2.bf16.msra.mxu0 0
      %1264 = vmatprep.subr.bf16.mxu0 0
      %1265 = vmatpush2.bf16.msra.mxu0 0
      %1266 = vmatprep.subr.bf16.mxu0 0
      %1267 = vmatpush2.bf16.msra.mxu0 0
      %1268 = vmatprep.subr.bf16.mxu0 0
      %1269 = vmatpush2.bf16.msra.mxu0 0
      %1270 = vmatprep.subr.bf16.mxu0 0
      %1271 = vmatpush2.bf16.msra.mxu0 0
      %1272 = vmatprep.subr.bf16.mxu0 0
      %1273 = vmatpush2.bf16.msra.mxu0 0
      %1274 = vmatprep.subr.bf16.mxu0 0
      %1275 = vmatpush2.bf16.msra.mxu0 0
      %1276 = vmatprep.subr.bf16.mxu0 0
      %1277 = vmatpush2.bf16.msra.mxu0 0
      %1278 = vmatprep.mubr.bf16.mxu0 0
      %1279 = vmatmul.mubr.bf16.gmra.mxu0 %v1195
      %v1280 = vpop.f32.mrf.mxu0
      %v1281 = vadd.f32 0.0, %v1280
      %v1282 = vpop.f32.mrf.mxu0
      %v1283 = vpop.f32.mrf.mxu0
      %v1284 = vadd.f32 0.0, %v1283
      %v1285 = vpop.f32.mrf.mxu0
      %1286 = vmatprep.mubr.bf16.mxu0 0
      %1287 = vmatmul.mubr.bf16.gmra.mxu0 %v1194
      %v1288 = vpop.f32.mrf.mxu0
      %v1289 = vadd.f32 0.0, %v1288
      %v1290 = vpop.f32.mrf.mxu0
      %v1291 = vpop.f32.mrf.mxu0
      %v1292 = vpop.f32.mrf.mxu0
      %1293 = vdwg.mxu0
      %v1294 = vadd.f32 %v1159, %v1281
      %v1295 = vadd.f32 %v1160, %v1284
      %v1296 = vadd.f32 %v1161, %v1289
      %v1297 = vpack.c.bf16 %v1295, %v1294
      %v1298 = vpack.c.bf16 %v1296, %v1296
      %v1301 = vunpack.c.l.b16 %v1297
      %v1302 = vunpack.c.h.b16 %v1297
      %v1303 = vunpack.c.l.b16 %v1298
      %v1304 = vpack.c.b16 %v1301, %v1301
      %v1305 = vpack.c.b16 %v1302, %v1302
      %v1306 = vpack.c.b16 %v1303, %v1303
      %1310 = vst [vmem:[%s168] sm:$0xf] %v1304
      %1311 = vst [vmem:[%s168 + $0x4] sm:$0xf] %v1305
      %1312 = vst [vmem:[%s168 + $0x8] sm:$0x3] %v1306
      %v1313 = vlaneseq
      %v1314 = vshrl.u32 %v1313, 7
      %v1315 = vadd.s32 %v1314, 8
      %v1316 = vadd.s32 %v1314, 16
      %vm1317 = vcmp.lt.s32.totalorder %v1314, 0
      %v1318 = vsub.s32 0, %v1314
      %v1319 = vsel %vm1317, %v1318, %v1314
      %v1320 = vmul.u32.u64.compose %v1319, 3435973837
      %v1321 = vextract.low.u32 %v1320
      %v1322 = vextract.high.u32 %v1320
      %v1323 = vshrl.u32 %v1322, 2
      %v1324 = vmul.u32 %v1323, 5
      %v1325 = vsub.s32 %v1319, %v1324
      %v1326 = vsub.s32 0, %v1325
      %v1327 = vsel %vm1317, %v1326, %v1325
      %vm1328 = vcmp.lt.s32.totalorder %v1315, 0
      %v1329 = vsub.s32 0, %v1315
      %v1330 = vsel %vm1328, %v1329, %v1315
      %v1331 = vmul.u32.u64.compose %v1330, 3435973837
      %v1332 = vextract.low.u32 %v1331
      %v1333 = vextract.high.u32 %v1331
      %v1334 = vshrl.u32 %v1333, 2
      %v1335 = vmul.u32 %v1334, 5
      %v1336 = vsub.s32 %v1330, %v1335
      %v1337 = vsub.s32 0, %v1336
      %v1338 = vsel %vm1328, %v1337, %v1336
      %vm1339 = vcmp.lt.s32.totalorder %v1316, 0
      %v1340 = vsub.s32 0, %v1316
      %v1341 = vsel %vm1339, %v1340, %v1316
      %v1342 = vmul.u32.u64.compose %v1341, 3435973837
      %v1343 = vextract.low.u32 %v1342
      %v1344 = vextract.high.u32 %v1342
      %v1345 = vshrl.u32 %v1344, 2
      %v1346 = vmul.u32 %v1345, 5
      %v1347 = vsub.s32 %v1341, %v1346
      %v1348 = vsub.s32 0, %v1347
      %v1349 = vsel %vm1339, %v1348, %v1347
      %vm1350 = vcmp.ne.s32.totalorder %v1327, 0
      %vm1351 = vcmp.ne.s32.totalorder %v1338, 0
      %vm1352 = vcmp.ne.s32.totalorder %v1349, 0
      %vm1353 = vcmp.lt.s32.totalorder %v1327, 0
      %vm1354 = vcmp.lt.s32.totalorder %v1338, 0
      %vm1355 = vcmp.lt.s32.totalorder %v1349, 0
      %vm1356 = vmand %vm1353, %vm1350
      %vm1357 = vmand %vm1354, %vm1351
      %vm1358 = vmand %vm1355, %vm1352
      %v1359 = vadd.s32 %v1327, 5
      %v1360 = vadd.s32 %v1338, 5
      %v1361 = vadd.s32 %v1349, 5
      %v1362 = vsel %vm1356, %v1359, %v1327
      %v1363 = vsel %vm1357, %v1360, %v1338
      %v1364 = vsel %vm1358, %v1361, %v1349
      %vm1365 = vcmp.lt.s32.totalorder %v1362, 4
      %vm1366 = vcmp.lt.s32.totalorder %v1363, 4
      %vm1367 = vcmp.lt.s32.totalorder %v1364, 4
      %v1368 = vsel %vm1365, 1, 0
      %v1369 = vsel %vm1366, 1, 0
      %v1370 = vsel %vm1367, 1, 0
      %vm1371 = vcmp.eq.s32.totalorder %v1368, 1
      %vm1372 = vcmp.eq.s32.totalorder %v1369, 1
      %vm1373 = vcmp.eq.s32.totalorder %v1370, 1
      %v1374 = vsel %vm1371, %v1294, 0.0
      %v1375 = vsel %vm1372, %v1295, 0.0
      %v1376 = vsel %vm1373, %v1296, 0.0
      %v1377 = vld [vmem:[%s3] sm:$0x1]
      %v1378 = vadd.f32 %v1374, %v1375
      %vm1379 = vcmask 1043456
      %v1380 = vsel %vm1379, %v1376, 0.0
      %v1381 = vadd.f32 %v1378, %v1380
      %v1382 = vrot.slane %v1381, 4
      %v1383 = vadd.f32 %v1381, %v1382
      %v1384 = vrot.slane %v1383, 2
      %v1385 = vadd.f32 %v1383, %v1384
      %v1386 = vrot.slane %v1385, 1
      %v1387 = vadd.f32 %v1385, %v1386
      %v1388 = vadd.f32 %v1377, %v1387
      %1389 = vst [vmem:[%s3] sm:$0x1] %v1388
      %v1390 = vld [vmem:[%s3 + $0x1] sm:$0x1]
      %v1391 = vmul.f32 %v1374, %v1374
      %v1392 = vmul.f32 %v1375, %v1375
      %v1393 = vmul.f32 %v1376, %v1376
      %v1394 = vadd.f32 %v1391, %v1392
      %v1395 = vsel %vm1379, %v1393, 0.0
      %v1396 = vadd.f32 %v1394, %v1395
      %v1397 = vrot.slane %v1396, 4
      %v1398 = vadd.f32 %v1396, %v1397
      %v1399 = vrot.slane %v1398, 2
      %v1400 = vadd.f32 %v1398, %v1399
      %v1401 = vrot.slane %v1400, 1
      %v1402 = vadd.f32 %v1400, %v1401
      %v1403 = vadd.f32 %v1390, %v1402
      %1404 = vst [vmem:[%s3 + $0x1] sm:$0x1] %v1403
      %p1405 = scmp.lt.s32.totalorder %s15, 1
      %s1406 = scalar_select %p1405, %s15, 1
      %s1407 = smul.addr %s1406, 3
      %s1408 = smul.addr %s1407, 4
      %s1409 = scalar_lea.vmem %s2, %s1408
      // Predicated region
      $region33: #{bottleneck_forward.8} parent=27 // pred_check
        %p1410 = pneg %p80
      $region34: #{bottleneck_forward.8} parent=27 // pred_check_branch
        %1412 = sbr.rel (%p1410) target = $region36
      $region35: #{bottleneck_forward.8} parent=27 // pred_region
        _
      $region36: #{bottleneck_forward.8} parent=27 // pred_fallthru
        _
      // Predicated region
      $region37: #{bottleneck_forward.8} parent=27 // pred_check
        %p1413 = pneg %p101
      $region38: #{bottleneck_forward.8} parent=27 // pred_check_branch
        %1415 = sbr.rel (%p1413) target = $region40
      $region39: #{bottleneck_forward.8} parent=27 // pred_region
        _
      $region40: #{bottleneck_forward.8} parent=27 // pred_fallthru
        _
      // Predicated region
      $region41: #{bottleneck_forward.8} parent=27 // pred_check
        %p1416 = pneg %p101
      $region42: #{bottleneck_forward.8} parent=27 // pred_check_branch
        %1418 = sbr.rel (%p1416) target = $region44
      $region43: #{bottleneck_forward.8} parent=27 // pred_region
        _
      $region44: #{bottleneck_forward.8} parent=27 // pred_fallthru
        _
    $region28: #{bottleneck_forward.8} parent=5 // pred_fallthru
      _
    %p1419 = scmp.le.s32.totalorder 2, %s10
    // Predicated region
    $region45: #{bottleneck_forward.8} parent=5 // pred_check
      %p1420 = pneg %p1419
    $region46: #{bottleneck_forward.8} parent=5 // pred_check_branch
      %1422 = sbr.rel (%p1420) target = $region48
    $region47: #{bottleneck_forward.8} parent=5 // pred_region
      %s1423 = ssub.s32 %s10, 2
      // Predicated region
      $region49: #{bottleneck_forward.8} parent=47 // pred_check
        %p1424 = pneg %p86
      $region50: #{bottleneck_forward.8} parent=47 // pred_check_branch
        %1426 = sbr.rel (%p1424) target = $region52
      $region51: #{bottleneck_forward.8} parent=47 // pred_region
        %p1427 = scmp.lt.s32.totalorder %s16, 1
        %s1428 = scalar_select %p1427, %s16, 1
        %s1429 = smul.addr %s1428, 3
        %s1430 = smul.addr %s1429, 4
        %s1431 = scalar_lea.vmem %s2, %s1430
      $region52: #{bottleneck_forward.8} parent=47 // pred_fallthru
        _
    $region48: #{bottleneck_forward.8} parent=5 // pred_fallthru
      _
  $region6: #{bottleneck_forward.8} parent=0 // loop_footer
    %s14 = sadd.s32 1, %s10
  $region7: #{bottleneck_forward.8} parent=0 // loop_footer_branch
    %9 = sbr.rel target = $region3
  $region8: #{bottleneck_forward.8} parent=0 // loop_exit
    _

</llo_original>
